<compile_context>
chip_gen: v5e
topology: v5e:2x2
jax: 0.10.0
libtpu: 0.0.40
codegen_flags: <defaults>
</compile_context>

<pallas_src>
import jax
import jax.numpy as jnp
from jax.experimental import pallas as pl
from jax.experimental.pallas import tpu as pltpu

# ---- scaled-down hyperparameters (original values in comments) ----
B = 2
HIDDEN = 32          # original 640 (transformer hidden == pointnet channel width)
SEQ = 40             # original 1000 (token / point count of the embeddings)
STRUCT_LEN = 48      # raw structure length before slicing to HIDDEN
NPOINT1, NSAMPLE1, RADIUS1 = 16, 8, 0.2     # original 512, 32, 0.2
NPOINT2, NSAMPLE2, RADIUS2 = 8, 8, 0.4      # original 128, 64, 0.4
FC1, FC2 = 24, 16                            # original 512, 256
NUM_LABELS = 5
MLP = (HIDDEN, 2 * HIDDEN, HIDDEN)           # original [640, 1280, 640]
IN_CH = HIDDEN + 3                           # original 643
BN_EPS = 1e-5

# MXU operand precision: bf16 operands, f32 accumulation (elementwise tails stay f32).
MXU_DTYPE = jnp.bfloat16


def _largest_divisor_leq(n, cap):
    d = min(n, cap)
    while n % d:
        d -= 1
    return d


# ----------------------------- Pallas kernels ------------------------------

def sa_mlp_max_pallas(x, weights, *, g_tile_cap=64):
    """Fused PointNet SA hot path: three (1x1 conv + folded BN + ReLU) layers as channel
    matmuls, then max-pool over the K (nsample) axis.

    x: [G, K, Cin] grouped point features (bf16).  Returns [G, Cout] f32.

    Grid over G-tiles: the x/output row tile advances with the grid step while all weight and
    bias BlockSpecs use a constant index_map, so the weights are staged into VMEM exactly once
    and stay resident.  The G axis is "parallel" (megacore split on v7x).
    """
    (w1, b1), (w2, b2), (w3, b3) = weights          # w* bf16, b* f32
    G, K, Cin = x.shape
    C1, C2, C3 = w1.shape[1], w2.shape[1], w3.shape[1]
    g_tile = _largest_divisor_leq(G, g_tile_cap)
    # Flatten (G, K) outside the kernel (contiguous -> free) so the kernel does pure 2-D matmuls.
    x2 = x.reshape(G * K, Cin)

    # TODO(synk): at the original sizes (Cin=643, mlp=640/1280/640, npoint=512) pick g_tile per
    # generation (~32 for v7x's 64 MiB VMEM, 64-128 on v5e/v6e), raise vmem_limit_bytes
    # accordingly, zero-pad Cin to a multiple of 128, and use pipeline_mode=pl.Buffered(3) on
    # the x spec for v5e if the input DMA is exposed.
    def kernel(x_ref, w1_ref, b1_ref, w2_ref, b2_ref, w3_ref, b3_ref, o_ref):
        h = jnp.maximum(
            jnp.dot(x_ref[...], w1_ref[...], preferred_element_type=jnp.float32)
            + b1_ref[...], 0.0).astype(MXU_DTYPE)
        h = jnp.maximum(
            jnp.dot(h, w2_ref[...], preferred_element_type=jnp.float32)
            + b2_ref[...], 0.0).astype(MXU_DTYPE)
        h = jnp.maximum(
            jnp.dot(h, w3_ref[...], preferred_element_type=jnp.float32)
            + b3_ref[...], 0.0)
        # K is a multiple of 8, so this reshape is a free view (sublane-grid aligned) and the
        # cross-sublane max is XLU work hidden under the MXU.
        o_ref[...] = jnp.max(h.reshape(g_tile, K, C3), axis=1).astype(o_ref.dtype)

    return pl.pallas_call(
        kernel,
        out_shape=jax.ShapeDtypeStruct((G, C3), jnp.float32),
        grid_spec=pltpu.PrefetchScalarGridSpec(
            num_scalar_prefetch=0,
            grid=(G // g_tile,),
            in_specs=[
                pl.BlockSpec((g_tile * K, Cin), lambda i: (i, 0)),
                pl.BlockSpec((Cin, C1), lambda i: (0, 0)),
                pl.BlockSpec((1, C1), lambda i: (0, 0)),
                pl.BlockSpec((C1, C2), lambda i: (0, 0)),
                pl.BlockSpec((1, C2), lambda i: (0, 0)),
                pl.BlockSpec((C2, C3), lambda i: (0, 0)),
                pl.BlockSpec((1, C3), lambda i: (0, 0)),
            ],
            out_specs=pl.BlockSpec((g_tile, C3), lambda i: (i, 0)),
        ),
        compiler_params=pltpu.CompilerParams(dimension_semantics=("parallel",)),
    )(x2, w1, b1.reshape(1, C1), w2, b2.reshape(1, C2), w3, b3.reshape(1, C3))


def fused_concat_linear_pallas(a_cl, hs_cl, cat_params):
    """Channel-last fused  Linear2(concat([points, Linear1(embeddings)], dim=points)).

    The PyTorch block applies both Linears over the POINT axis of channel-first tensors
    [B, C, P]; in channel-last form that is  out[b] = Wtop^T @ a[b] + Wbot^T @ (Wl1^T @ h[b] + b1)
    + b2  with weights pre-transposed/split once at init.  Inputs and output stay channel-last,
    so no XLA transpose is needed on either side of this kernel.

    a_cl: [B, P_in, C] f32, hs_cl: [B, S, C] f32  ->  out [B, P, C] f32.
    Grid over B ("parallel"); weights are VMEM-resident via constant index_maps.
    """
    w1t, b1 = cat_params['w1t'], cat_params['b1']     # [P, S] bf16, [P, 1] f32
    wtt, wbt = cat_params['wtt'], cat_params['wbt']   # [P, P_in], [P, P] bf16
    b2 = cat_params['b2']                             # [P, 1] f32
    Bx, P_in, C = a_cl.shape
    S = hs_cl.shape[1]
    P = w1t.shape[0]

    def kernel(a_ref, h_ref, w1t_ref, b1_ref, wtt_ref, wbt_ref, b2_ref, o_ref):
        a = a_ref[0].astype(MXU_DTYPE)                # [P_in, C]
        h = h_ref[0].astype(MXU_DTYPE)                # [S, C]
        e = (jnp.dot(w1t_ref[...], h, preferred_element_type=jnp.float32)
             + b1_ref[...])                           # [P, C] f32  (== Linear1 output, no act)
        y = (jnp.dot(wtt_ref[...], a, preferred_element_type=jnp.float32)
             + jnp.dot(wbt_ref[...], e.astype(MXU_DTYPE), preferred_element_type=jnp.float32)
             + b2_ref[...])
        o_ref[0] = y.astype(o_ref.dtype)

    return pl.pallas_call(
        kernel,
        out_shape=jax.ShapeDtypeStruct((Bx, P, C), a_cl.dtype),
        grid_spec=pltpu.PrefetchScalarGridSpec(
            num_scalar_prefetch=0,
            grid=(Bx,),
            in_specs=[
                pl.BlockSpec((1, P_in, C), lambda b: (b, 0, 0)),
                pl.BlockSpec((1, S, C), lambda b: (b, 0, 0)),
                pl.BlockSpec((P, S), lambda b: (0, 0)),
                pl.BlockSpec((P, 1), lambda b: (0, 0)),
                pl.BlockSpec((P, P_in), lambda b: (0, 0)),
                pl.BlockSpec((P, P), lambda b: (0, 0)),
                pl.BlockSpec((P, 1), lambda b: (0, 0)),
            ],
            out_specs=pl.BlockSpec((1, P, C), lambda b: (b, 0, 0)),
        ),
        compiler_params=pltpu.CompilerParams(dimension_semantics=("parallel",)),
    )(a_cl, hs_cl, w1t, b1, wtt, wbt, b2)


def sa3_fc_head_pallas(x, sa_w, fc1, fc2, fc3):
    """SA3 (group_all) shared MLP + global max-pool + fc1(+BN+ReLU) + fc2(+BN+ReLU) + fc3,
    fused into ONE kernel.  x: [B, K, Cin] bf16 (concat of coords + point features).
    Returns logits [B, num_labels] f32.  Single grid step: everything is VMEM-trivial and the
    max-pooled [B, HIDDEN] tensor never round-trips to HBM."""
    (w1, b1), (w2, b2), (w3, b3) = sa_w
    (wf1, bf1), (wf2, bf2), (wf3, bf3) = fc1, fc2, fc3
    Bx, K, Cin = x.shape
    C1, C2, C3 = w1.shape[1], w2.shape[1], w3.shape[1]
    NL = wf3.shape[1]
    x2 = x.reshape(Bx * K, Cin)

    def kernel(x_ref, w1_ref, b1_ref, w2_ref, b2_ref, w3_ref, b3_ref,
               wf1_ref, bf1_ref, wf2_ref, bf2_ref, wf3_ref, bf3_ref, o_ref):
        h = jnp.maximum(
            jnp.dot(x_ref[...], w1_ref[...], preferred_element_type=jnp.float32)
            + b1_ref[...], 0.0).astype(MXU_DTYPE)
        h = jnp.maximum(
            jnp.dot(h, w2_ref[...], preferred_element_type=jnp.float32)
            + b2_ref[...], 0.0).astype(MXU_DTYPE)
        h = jnp.maximum(
            jnp.dot(h, w3_ref[...], preferred_element_type=jnp.float32)
            + b3_ref[...], 0.0)
        g = jnp.max(h.reshape(Bx, K, C3), axis=1).astype(MXU_DTYPE)      # [B, HIDDEN]
        f = jnp.maximum(
            jnp.dot(g, wf1_ref[...], preferred_element_type=jnp.float32)
            + bf1_ref[...], 0.0).astype(MXU_DTYPE)
        f = jnp.maximum(
            jnp.dot(f, wf2_ref[...], preferred_element_type=jnp.float32)
            + bf2_ref[...], 0.0).astype(MXU_DTYPE)
        o_ref[...] = (jnp.dot(f, wf3_ref[...], preferred_element_type=jnp.float32)
                      + bf3_ref[...]).astype(o_ref.dtype)

    return pl.pallas_call(
        kernel,
        out_shape=jax.ShapeDtypeStruct((Bx, NL), jnp.float32),
    )(x2, w1, b1.reshape(1, C1), w2, b2.reshape(1, C2), w3, b3.reshape(1, C3),
      wf1, bf1.reshape(1, -1), wf2, bf2.reshape(1, -1), wf3, bf3.reshape(1, -1))


# ----------------------- PointNet++ grouping (JAX glue) ---------------------
# TODO(synk): FPS (sequential argmax loop) and sort-based ball query remain XLA glue; they
# dominate end-to-end latency and would need a dedicated scalar-prefetch gather kernel.

def square_distance(src, dst):
    return jnp.sum((src[:, :, None, :] - dst[:, None, :, :]) ** 2, axis=-1)


def index_points(points, idx):
    return jax.vmap(lambda p, i: p[i])(points, idx)


def farthest_point_sample(xyz, npoint):
    # TODO(synk): the PyTorch reference picks a random initial index via torch.randint;
    # we use index 0 deterministically.
    Bx, N, _ = xyz.shape
    centroids0 = jnp.zeros((Bx, npoint), jnp.int32)
    distance0 = jnp.full((Bx, N), 1e10, jnp.float32)
    farthest0 = jnp.zeros((Bx,), jnp.int32)

    def body(i, state):
        centroids, distance, farthest = state
        centroids = centroids.at[:, i].set(farthest)
        centroid = jax.vmap(lambda p, f: p[f])(xyz, farthest)[:, None, :]
        dist = jnp.sum((xyz - centroid) ** 2, axis=-1)
        distance = jnp.minimum(distance, dist)
        farthest = jnp.argmax(distance, axis=-1).astype(jnp.int32)
        return centroids, distance, farthest

    centroids, _, _ = jax.lax.fori_loop(0, npoint, body, (centroids0, distance0, farthest0))
    return centroids


def query_ball_point(radius, nsample, xyz, new_xyz):
    Bx, N, _ = xyz.shape
    S = new_xyz.shape[1]
    sqrdists = square_distance(new_xyz, xyz)
    group_idx = jnp.broadcast_to(jnp.arange(N, dtype=jnp.int32), (Bx, S, N))
    group_idx = jnp.where(sqrdists > radius ** 2, N, group_idx)
    group_idx = jnp.sort(group_idx, axis=-1)[:, :, :nsample]
    group_first = jnp.broadcast_to(group_idx[:, :, :1], group_idx.shape)
    group_idx = jnp.where(group_idx == N, group_first, group_idx)
    return group_idx


def pointnet_sa(xyz, points, npoint, radius, nsample, weights):
    """Channel-last PointNetSetAbstraction (group_all=False): xyz [B, N, 3], points [B, Np, D]
    or None (Np >= N; indices come from xyz so they stay in range — matches the torch module's
    implicit truncation of the feature stream).  Returns new_xyz [B, S, 3], feat [B, S, Cout]."""
    fps_idx = farthest_point_sample(xyz, npoint)
    new_xyz = index_points(xyz, fps_idx)                     # [B, S, 3]
    idx = query_ball_point(radius, nsample, xyz, new_xyz)    # [B, S, K]
    grouped_xyz = index_points(xyz, idx)                     # [B, S, K, 3]
    grouped_xyz_norm = grouped_xyz - new_xyz[:, :, None, :]
    if points is not None:
        grouped_points = index_points(points, idx)
        new_points = jnp.concatenate([grouped_xyz_norm, grouped_points], axis=-1)
    else:
        new_points = grouped_xyz_norm
    Bx, S, K, Cin = new_points.shape
    # Emit the grouped features in bf16 (halves the dominant kernel-input DMA).
    feat = sa_mlp_max_pallas(new_points.reshape(Bx * S, K, Cin).astype(MXU_DTYPE), weights)
    return new_xyz, feat.reshape(Bx, S, -1)


# ------------------------------ parameters ---------------------------------

def _fold_bn(w, b, gamma, beta, mean, var, eps=BN_EPS):
    scale = gamma / jnp.sqrt(var + eps)
    return w * scale[None, :], (b - mean) * scale + beta


def _init_linear(key, nin, nout, scale=0.05):
    kw, kb = jax.random.split(key)
    w = jax.random.normal(kw, (nin, nout), jnp.float32) * scale
    b = jax.random.normal(kb, (nout,), jnp.float32) * scale
    return w, b


def _init_sa_mlp(key, cin, mlp):
    keys = jax.random.split(key, len(mlp))
    ws, last = [], cin
    for k, cout in zip(keys, mlp):
        w, b = _init_linear(k, last, cout)
        ones, zeros = jnp.ones((cout,)), jnp.zeros((cout,))
        w, b = _fold_bn(w, b, ones, zeros, zeros, ones)      # BN(eval, default init) folded
        ws.append((w.astype(MXU_DTYPE), b))                  # pre-cast weights to bf16, bias f32
        last = cout
    return tuple(ws)


def _init_cat(key1, key2, seq, p):
    """Concat-linear block params, pre-transposed/split for the channel-last kernel."""
    wl1, bl1 = _init_linear(key1, seq, p)          # Linear1: seq -> p (over the point axis)
    wl2, bl2 = _init_linear(key2, 2 * p, p)        # Linear2: 2p -> p
    return dict(
        w1t=jnp.transpose(wl1).astype(MXU_DTYPE),          # [P, S]
        b1=bl1.reshape(p, 1),
        wtt=jnp.transpose(wl2[:p]).astype(MXU_DTYPE),      # [P, P]  (points half)
        wbt=jnp.transpose(wl2[p:]).astype(MXU_DTYPE),      # [P, P]  (embedding half)
        b2=bl2.reshape(p, 1),
    )


def _init_fc(key, nin, nout, fold=True):
    w, b = _init_linear(key, nin, nout)
    if fold:
        w, b = _fold_bn(w, b, jnp.ones((nout,)), jnp.zeros((nout,)),
                        jnp.zeros((nout,)), jnp.ones((nout,)))
    return w.astype(MXU_DTYPE), b


def init_params(key):
    ks = jax.random.split(key, 10)
    p = {}
    p['sa1'] = _init_sa_mlp(ks[0], IN_CH, MLP)
    p['sa2'] = _init_sa_mlp(ks[1], IN_CH, MLP)
    p['sa3'] = _init_sa_mlp(ks[2], IN_CH, MLP)
    p['sa1_cat'] = _init_cat(ks[3], ks[4], SEQ, NPOINT1)
    p['sa2_cat'] = _init_cat(ks[5], ks[6], SEQ, NPOINT2)
    p['fc1'] = _init_fc(ks[7], HIDDEN, FC1, fold=True)       # BatchNorm1d folded (eval)
    p['fc2'] = _init_fc(ks[8], FC1, FC2, fold=True)
    p['fc3'] = _init_fc(ks[9], FC2, NUM_LABELS, fold=False)
    return p


# -------------------------------- forward ----------------------------------

def pointnet_hrga_forward(hidden_states, structures, params):
    # hidden_states[k] is [B, SEQ, HIDDEN]; as channel-last "points" tensors they are already in
    # the layout the SA stages and concat-linear kernels consume, so the torch permutes are never
    # materialized.  The only transpose in the graph is the tiny raw-coordinate one below.
    hs9, hs19, hs29 = hidden_states[9], hidden_states[19], hidden_states[29]
    n_xyz = hs29.shape[-1]                                    # == HIDDEN (torch truncation rule)
    xyz = jnp.transpose(structures[:, :3, :n_xyz], (0, 2, 1))  # [B, N, 3]

    # SA1 + fused (Linear1 -> concat -> Linear2)
    l1_xyz, l1_feat = pointnet_sa(xyz, hs9, NPOINT1, RADIUS1, NSAMPLE1, params['sa1'])
    l1_points = fused_concat_linear_pallas(l1_feat, hs19, params['sa1_cat'])   # [B, NPOINT1, HIDDEN]

    # SA2 + fused (Linear1 -> concat -> Linear2)
    l2_xyz, l2_feat = pointnet_sa(l1_xyz, l1_points, NPOINT2, RADIUS2, NSAMPLE2, params['sa2'])
    l2_points = fused_concat_linear_pallas(l2_feat, hs29, params['sa2_cat'])   # [B, NPOINT2, HIDDEN]

    # SA3 (group_all): grouped features are exactly concat([xyz, points], -1); fused with the
    # fc1/fc2/fc3 classification head (Dropout identity, BatchNorm1d folded, eval mode).
    grouped = jnp.concatenate([l2_xyz, l2_points], axis=-1).astype(MXU_DTYPE)  # [B, NPOINT2, 3+HIDDEN]
    logits = sa3_fc_head_pallas(grouped, params['sa3'],
                                params['fc1'], params['fc2'], params['fc3'])
    return logits


if __name__ == "__main__":
    key = jax.random.PRNGKey(0)
    k_hs, k_struct, k_params = jax.random.split(key, 3)
    # hidden_states: stack of 30 transformer layer outputs, each [B, SEQ, HIDDEN]
    hidden_states = jax.random.normal(k_hs, (30, B, SEQ, HIDDEN), jnp.float32)
    # structures: [B, 3, STRUCT_LEN] raw point coordinates
    structures = jax.random.uniform(k_struct, (B, 3, STRUCT_LEN), jnp.float32)
    params = init_params(k_params)

    fwd = jax.jit(lambda hs, st: pointnet_hrga_forward(hs, st, params))
    logits = fwd(hidden_states, structures)
    jax.block_until_ready(logits)
    assert logits.shape == (B, NUM_LABELS)
    print("KERNEL_OK")
</pallas_src>

<mosaic_0001>
module attributes {stable_mosaic.version = 11 : i64} {
  func.func @kernel(%arg0: i32, %arg1: memref<256x35xbf16, #tpu.memory_space<vmem>>, %arg2: memref<35x32xbf16, #tpu.memory_space<vmem>>, %arg3: memref<1x32xf32, #tpu.memory_space<vmem>>, %arg4: memref<32x64xbf16, #tpu.memory_space<vmem>>, %arg5: memref<1x64xf32, #tpu.memory_space<vmem>>, %arg6: memref<64x32xbf16, #tpu.memory_space<vmem>>, %arg7: memref<1x32xf32, #tpu.memory_space<vmem>>, %arg8: memref<32x32xf32, #tpu.memory_space<vmem>>) attributes {dimension_semantics = [#tpu.dimension_semantics<parallel>], iteration_bounds = array<i64: 1>, scalar_prefetch = 0 : i64, scratch_operands = 0 : i64, tpu.core_type = #tpu.core_type<tc>, window_params = [{transform_indices = @transform_0, window_bounds = array<i64: 256, 35>}, {pipeline_mode = #tpu.pipeline_mode<synchronous>, transform_indices = @transform_1, window_bounds = array<i64: 35, 32>}, {pipeline_mode = #tpu.pipeline_mode<synchronous>, transform_indices = @transform_2, window_bounds = array<i64: 1, 32>}, {pipeline_mode = #tpu.pipeline_mode<synchronous>, transform_indices = @transform_3, window_bounds = array<i64: 32, 64>}, {pipeline_mode = #tpu.pipeline_mode<synchronous>, transform_indices = @transform_4, window_bounds = array<i64: 1, 64>}, {pipeline_mode = #tpu.pipeline_mode<synchronous>, transform_indices = @transform_5, window_bounds = array<i64: 64, 32>}, {pipeline_mode = #tpu.pipeline_mode<synchronous>, transform_indices = @transform_6, window_bounds = array<i64: 1, 32>}, {transform_indices = @transform_7, window_bounds = array<i64: 32, 32>}]} {
    %c0 = arith.constant 0 : index
    %c0_0 = arith.constant 0 : index
    %0 = vector.load %arg1[%c0, %c0_0] : memref<256x35xbf16, #tpu.memory_space<vmem>>, vector<256x35xbf16>
    %c0_1 = arith.constant 0 : index
    %c0_2 = arith.constant 0 : index
    %1 = vector.load %arg2[%c0_1, %c0_2] : memref<35x32xbf16, #tpu.memory_space<vmem>>, vector<35x32xbf16>
    %cst = arith.constant dense<0.000000e+00> : vector<256x32xf32>
    %2 = tpu.matmul %0, %1, %cst {dimension_numbers = #tpu.dot_dimension_numbers<[1], [0], [0], [1], [0, 0, 1, 1], [], []>} : vector<256x35xbf16>, vector<35x32xbf16>, vector<256x32xf32> -> vector<256x32xf32>
    %c0_3 = arith.constant 0 : index
    %c0_4 = arith.constant 0 : index
    %3 = vector.load %arg3[%c0_3, %c0_4] : memref<1x32xf32, #tpu.memory_space<vmem>>, vector<1x32xf32>
    %4 = vector.broadcast %3 : vector<1x32xf32> to vector<256x32xf32>
    %5 = arith.addf %2, %4 : vector<256x32xf32>
    %cst_5 = arith.constant 0.000000e+00 : f32
    %6 = vector.broadcast %cst_5 : f32 to vector<256x32xf32>
    %7 = arith.maximumf %5, %6 : vector<256x32xf32>
    %8 = arith.truncf %7 : vector<256x32xf32> to vector<256x32xbf16>
    %c0_6 = arith.constant 0 : index
    %c0_7 = arith.constant 0 : index
    %9 = vector.load %arg4[%c0_6, %c0_7] : memref<32x64xbf16, #tpu.memory_space<vmem>>, vector<32x64xbf16>
    %cst_8 = arith.constant dense<0.000000e+00> : vector<256x64xf32>
    %10 = tpu.matmul %8, %9, %cst_8 {dimension_numbers = #tpu.dot_dimension_numbers<[1], [0], [0], [1], [0, 0, 1, 1], [], []>} : vector<256x32xbf16>, vector<32x64xbf16>, vector<256x64xf32> -> vector<256x64xf32>
    %c0_9 = arith.constant 0 : index
    %c0_10 = arith.constant 0 : index
    %11 = vector.load %arg5[%c0_9, %c0_10] : memref<1x64xf32, #tpu.memory_space<vmem>>, vector<1x64xf32>
    %12 = vector.broadcast %11 : vector<1x64xf32> to vector<256x64xf32>
    %13 = arith.addf %10, %12 : vector<256x64xf32>
    %cst_11 = arith.constant 0.000000e+00 : f32
    %14 = vector.broadcast %cst_11 : f32 to vector<256x64xf32>
    %15 = arith.maximumf %13, %14 : vector<256x64xf32>
    %16 = arith.truncf %15 : vector<256x64xf32> to vector<256x64xbf16>
    %c0_12 = arith.constant 0 : index
    %c0_13 = arith.constant 0 : index
    %17 = vector.load %arg6[%c0_12, %c0_13] : memref<64x32xbf16, #tpu.memory_space<vmem>>, vector<64x32xbf16>
    %cst_14 = arith.constant dense<0.000000e+00> : vector<256x32xf32>
    %18 = tpu.matmul %16, %17, %cst_14 {dimension_numbers = #tpu.dot_dimension_numbers<[1], [0], [0], [1], [0, 0, 1, 1], [], []>} : vector<256x64xbf16>, vector<64x32xbf16>, vector<256x32xf32> -> vector<256x32xf32>
    %c0_15 = arith.constant 0 : index
    %c0_16 = arith.constant 0 : index
    %19 = vector.load %arg7[%c0_15, %c0_16] : memref<1x32xf32, #tpu.memory_space<vmem>>, vector<1x32xf32>
    %20 = vector.broadcast %19 : vector<1x32xf32> to vector<256x32xf32>
    %21 = arith.addf %18, %20 : vector<256x32xf32>
    %cst_17 = arith.constant 0.000000e+00 : f32
    %22 = vector.broadcast %cst_17 : f32 to vector<256x32xf32>
    %23 = arith.maximumf %21, %22 : vector<256x32xf32>
    %24 = vector.shape_cast %23 : vector<256x32xf32> to vector<32x8x32xf32>
    %cst_18 = arith.constant dense<0xFF800000> : vector<32x32xf32>
    %25 = vector.multi_reduction <maximumf>, %24, %cst_18 [1] : vector<32x8x32xf32> to vector<32x32xf32>
    %c0_19 = arith.constant 0 : index
    %c0_20 = arith.constant 0 : index
    %26 = vector.load %arg8[%c0_19, %c0_20] : memref<32x32xf32, #tpu.memory_space<vmem>>, vector<32x32xf32>
    tpu.vector_store %arg8[%c0_19, %c0_20], %25 {strides = array<i32>} : memref<32x32xf32, #tpu.memory_space<vmem>>, vector<32x32xf32>,
    return
  }
  func.func @transform_0(%arg0: i32) -> (i32, i32) {
    %c0_i32 = arith.constant 0 : i32
    %c0_i32_0 = arith.constant 0 : i32
    return %arg0, %c0_i32 : i32, i32
  }
  func.func @transform_1(%arg0: i32) -> (i32, i32) {
    %c0_i32 = arith.constant 0 : i32
    %c0_i32_0 = arith.constant 0 : i32
    %c0_i32_1 = arith.constant 0 : i32
    return %c0_i32, %c0_i32_0 : i32, i32
  }
  func.func @transform_2(%arg0: i32) -> (i32, i32) {
    %c0_i32 = arith.constant 0 : i32
    %c0_i32_0 = arith.constant 0 : i32
    %c0_i32_1 = arith.constant 0 : i32
    return %c0_i32, %c0_i32_0 : i32, i32
  }
  func.func @transform_3(%arg0: i32) -> (i32, i32) {
    %c0_i32 = arith.constant 0 : i32
    %c0_i32_0 = arith.constant 0 : i32
    %c0_i32_1 = arith.constant 0 : i32
    return %c0_i32, %c0_i32_0 : i32, i32
  }
  func.func @transform_4(%arg0: i32) -> (i32, i32) {
    %c0_i32 = arith.constant 0 : i32
    %c0_i32_0 = arith.constant 0 : i32
    %c0_i32_1 = arith.constant 0 : i32
    return %c0_i32, %c0_i32_0 : i32, i32
  }
  func.func @transform_5(%arg0: i32) -> (i32, i32) {
    %c0_i32 = arith.constant 0 : i32
    %c0_i32_0 = arith.constant 0 : i32
    %c0_i32_1 = arith.constant 0 : i32
    return %c0_i32, %c0_i32_0 : i32, i32
  }
  func.func @transform_6(%arg0: i32) -> (i32, i32) {
    %c0_i32 = arith.constant 0 : i32
    %c0_i32_0 = arith.constant 0 : i32
    %c0_i32_1 = arith.constant 0 : i32
    return %c0_i32, %c0_i32_0 : i32, i32
  }
  func.func @transform_7(%arg0: i32) -> (i32, i32) {
    %c0_i32 = arith.constant 0 : i32
    %c0_i32_0 = arith.constant 0 : i32
    return %arg0, %c0_i32 : i32, i32
  }
}

module attributes {stable_mosaic.version = 11 : i64} {
  func.func @kernel(%arg0: i32, %arg1: memref<1x16x32xf32, #tpu.memory_space<vmem>>, %arg2: memref<1x40x32xf32, #tpu.memory_space<vmem>>, %arg3: memref<16x40xbf16, #tpu.memory_space<vmem>>, %arg4: memref<16x1xf32, #tpu.memory_space<vmem>>, %arg5: memref<16x16xbf16, #tpu.memory_space<vmem>>, %arg6: memref<16x16xbf16, #tpu.memory_space<vmem>>, %arg7: memref<16x1xf32, #tpu.memory_space<vmem>>, %arg8: memref<1x16x32xf32, #tpu.memory_space<vmem>>) attributes {dimension_semantics = [#tpu.dimension_semantics<parallel>], iteration_bounds = array<i64: 2>, scalar_prefetch = 0 : i64, scratch_operands = 0 : i64, tpu.core_type = #tpu.core_type<tc>, window_params = [{transform_indices = @transform_0, window_bounds = array<i64: 1, 16, 32>}, {transform_indices = @transform_1, window_bounds = array<i64: 1, 40, 32>}, {pipeline_mode = #tpu.pipeline_mode<synchronous>, transform_indices = @transform_2, window_bounds = array<i64: 16, 40>}, {pipeline_mode = #tpu.pipeline_mode<synchronous>, transform_indices = @transform_3, window_bounds = array<i64: 16, 1>}, {pipeline_mode = #tpu.pipeline_mode<synchronous>, transform_indices = @transform_4, window_bounds = array<i64: 16, 16>}, {pipeline_mode = #tpu.pipeline_mode<synchronous>, transform_indices = @transform_5, window_bounds = array<i64: 16, 16>}, {pipeline_mode = #tpu.pipeline_mode<synchronous>, transform_indices = @transform_6, window_bounds = array<i64: 16, 1>}, {transform_indices = @transform_7, window_bounds = array<i64: 1, 16, 32>}]} {
    %c0 = arith.constant 0 : index
    %c0_0 = arith.constant 0 : index
    %c0_1 = arith.constant 0 : index
    %0 = vector.load %arg1[%c0, %c0_0, %c0_1] : memref<1x16x32xf32, #tpu.memory_space<vmem>>, vector<1x16x32xf32>
    %1 = vector.shape_cast %0 : vector<1x16x32xf32> to vector<16x32xf32>
    %2 = arith.truncf %1 : vector<16x32xf32> to vector<16x32xbf16>
    %c0_2 = arith.constant 0 : index
    %c0_3 = arith.constant 0 : index
    %c0_4 = arith.constant 0 : index
    %3 = vector.load %arg2[%c0_2, %c0_3, %c0_4] : memref<1x40x32xf32, #tpu.memory_space<vmem>>, vector<1x40x32xf32>
    %4 = vector.shape_cast %3 : vector<1x40x32xf32> to vector<40x32xf32>
    %5 = arith.truncf %4 : vector<40x32xf32> to vector<40x32xbf16>
    %c0_5 = arith.constant 0 : index
    %c0_6 = arith.constant 0 : index
    %6 = vector.load %arg3[%c0_5, %c0_6] : memref<16x40xbf16, #tpu.memory_space<vmem>>, vector<16x40xbf16>
    %cst = arith.constant dense<0.000000e+00> : vector<16x32xf32>
    %7 = tpu.matmul %6, %5, %cst {dimension_numbers = #tpu.dot_dimension_numbers<[1], [0], [0], [1], [0, 0, 1, 1], [], []>} : vector<16x40xbf16>, vector<40x32xbf16>, vector<16x32xf32> -> vector<16x32xf32>
    %c0_7 = arith.constant 0 : index
    %c0_8 = arith.constant 0 : index
    %8 = vector.load %arg4[%c0_7, %c0_8] : memref<16x1xf32, #tpu.memory_space<vmem>>, vector<16x1xf32>
    %9 = vector.broadcast %8 : vector<16x1xf32> to vector<16x32xf32>
    %10 = arith.addf %7, %9 : vector<16x32xf32>
    %c0_9 = arith.constant 0 : index
    %c0_10 = arith.constant 0 : index
    %11 = vector.load %arg5[%c0_9, %c0_10] : memref<16x16xbf16, #tpu.memory_space<vmem>>, vector<16x16xbf16>
    %cst_11 = arith.constant dense<0.000000e+00> : vector<16x32xf32>
    %12 = tpu.matmul %11, %2, %cst_11 {dimension_numbers = #tpu.dot_dimension_numbers<[1], [0], [0], [1], [0, 0, 1, 1], [], []>} : vector<16x16xbf16>, vector<16x32xbf16>, vector<16x32xf32> -> vector<16x32xf32>
    %c0_12 = arith.constant 0 : index
    %c0_13 = arith.constant 0 : index
    %13 = vector.load %arg6[%c0_12, %c0_13] : memref<16x16xbf16, #tpu.memory_space<vmem>>, vector<16x16xbf16>
    %14 = arith.truncf %10 : vector<16x32xf32> to vector<16x32xbf16>
    %cst_14 = arith.constant dense<0.000000e+00> : vector<16x32xf32>
    %15 = tpu.matmul %13, %14, %cst_14 {dimension_numbers = #tpu.dot_dimension_numbers<[1], [0], [0], [1], [0, 0, 1, 1], [], []>} : vector<16x16xbf16>, vector<16x32xbf16>, vector<16x32xf32> -> vector<16x32xf32>
    %16 = arith.addf %12, %15 : vector<16x32xf32>
    %c0_15 = arith.constant 0 : index
    %c0_16 = arith.constant 0 : index
    %17 = vector.load %arg7[%c0_15, %c0_16] : memref<16x1xf32, #tpu.memory_space<vmem>>, vector<16x1xf32>
    %18 = vector.broadcast %17 : vector<16x1xf32> to vector<16x32xf32>
    %19 = arith.addf %16, %18 : vector<16x32xf32>
    %c0_17 = arith.constant 0 : index
    %c0_18 = arith.constant 0 : index
    %c0_19 = arith.constant 0 : index
    %20 = vector.load %arg8[%c0_17, %c0_18, %c0_19] : memref<1x16x32xf32, #tpu.memory_space<vmem>>, vector<1x16x32xf32>
    %21 = vector.shape_cast %20 : vector<1x16x32xf32> to vector<16x32xf32>
    %22 = vector.shape_cast %19 : vector<16x32xf32> to vector<1x16x32xf32>
    tpu.vector_store %arg8[%c0_17, %c0_18, %c0_19], %22 {strides = array<i32>} : memref<1x16x32xf32, #tpu.memory_space<vmem>>, vector<1x16x32xf32>,
    return
  }
  func.func @transform_0(%arg0: i32) -> (i32, i32, i32) {
    %c0_i32 = arith.constant 0 : i32
    %c0_i32_0 = arith.constant 0 : i32
    %c0_i32_1 = arith.constant 0 : i32
    return %arg0, %c0_i32, %c0_i32_0 : i32, i32, i32
  }
  func.func @transform_1(%arg0: i32) -> (i32, i32, i32) {
    %c0_i32 = arith.constant 0 : i32
    %c0_i32_0 = arith.constant 0 : i32
    %c0_i32_1 = arith.constant 0 : i32
    return %arg0, %c0_i32, %c0_i32_0 : i32, i32, i32
  }
  func.func @transform_2(%arg0: i32) -> (i32, i32) {
    %c0_i32 = arith.constant 0 : i32
    %c0_i32_0 = arith.constant 0 : i32
    %c0_i32_1 = arith.constant 0 : i32
    return %c0_i32, %c0_i32_0 : i32, i32
  }
  func.func @transform_3(%arg0: i32) -> (i32, i32) {
    %c0_i32 = arith.constant 0 : i32
    %c0_i32_0 = arith.constant 0 : i32
    %c0_i32_1 = arith.constant 0 : i32
    return %c0_i32, %c0_i32_0 : i32, i32
  }
  func.func @transform_4(%arg0: i32) -> (i32, i32) {
    %c0_i32 = arith.constant 0 : i32
    %c0_i32_0 = arith.constant 0 : i32
    %c0_i32_1 = arith.constant 0 : i32
    return %c0_i32, %c0_i32_0 : i32, i32
  }
  func.func @transform_5(%arg0: i32) -> (i32, i32) {
    %c0_i32 = arith.constant 0 : i32
    %c0_i32_0 = arith.constant 0 : i32
    %c0_i32_1 = arith.constant 0 : i32
    return %c0_i32, %c0_i32_0 : i32, i32
  }
  func.func @transform_6(%arg0: i32) -> (i32, i32) {
    %c0_i32 = arith.constant 0 : i32
    %c0_i32_0 = arith.constant 0 : i32
    %c0_i32_1 = arith.constant 0 : i32
    return %c0_i32, %c0_i32_0 : i32, i32
  }
  func.func @transform_7(%arg0: i32) -> (i32, i32, i32) {
    %c0_i32 = arith.constant 0 : i32
    %c0_i32_0 = arith.constant 0 : i32
    %c0_i32_1 = arith.constant 0 : i32
    return %arg0, %c0_i32, %c0_i32_0 : i32, i32, i32
  }
}

module attributes {stable_mosaic.version = 11 : i64} {
  func.func @kernel(%arg0: i32, %arg1: memref<128x35xbf16, #tpu.memory_space<vmem>>, %arg2: memref<35x32xbf16, #tpu.memory_space<vmem>>, %arg3: memref<1x32xf32, #tpu.memory_space<vmem>>, %arg4: memref<32x64xbf16, #tpu.memory_space<vmem>>, %arg5: memref<1x64xf32, #tpu.memory_space<vmem>>, %arg6: memref<64x32xbf16, #tpu.memory_space<vmem>>, %arg7: memref<1x32xf32, #tpu.memory_space<vmem>>, %arg8: memref<16x32xf32, #tpu.memory_space<vmem>>) attributes {dimension_semantics = [#tpu.dimension_semantics<parallel>], iteration_bounds = array<i64: 1>, scalar_prefetch = 0 : i64, scratch_operands = 0 : i64, tpu.core_type = #tpu.core_type<tc>, window_params = [{transform_indices = @transform_0, window_bounds = array<i64: 128, 35>}, {pipeline_mode = #tpu.pipeline_mode<synchronous>, transform_indices = @transform_1, window_bounds = array<i64: 35, 32>}, {pipeline_mode = #tpu.pipeline_mode<synchronous>, transform_indices = @transform_2, window_bounds = array<i64: 1, 32>}, {pipeline_mode = #tpu.pipeline_mode<synchronous>, transform_indices = @transform_3, window_bounds = array<i64: 32, 64>}, {pipeline_mode = #tpu.pipeline_mode<synchronous>, transform_indices = @transform_4, window_bounds = array<i64: 1, 64>}, {pipeline_mode = #tpu.pipeline_mode<synchronous>, transform_indices = @transform_5, window_bounds = array<i64: 64, 32>}, {pipeline_mode = #tpu.pipeline_mode<synchronous>, transform_indices = @transform_6, window_bounds = array<i64: 1, 32>}, {transform_indices = @transform_7, window_bounds = array<i64: 16, 32>}]} {
    %c0 = arith.constant 0 : index
    %c0_0 = arith.constant 0 : index
    %0 = vector.load %arg1[%c0, %c0_0] : memref<128x35xbf16, #tpu.memory_space<vmem>>, vector<128x35xbf16>
    %c0_1 = arith.constant 0 : index
    %c0_2 = arith.constant 0 : index
    %1 = vector.load %arg2[%c0_1, %c0_2] : memref<35x32xbf16, #tpu.memory_space<vmem>>, vector<35x32xbf16>
    %cst = arith.constant dense<0.000000e+00> : vector<128x32xf32>
    %2 = tpu.matmul %0, %1, %cst {dimension_numbers = #tpu.dot_dimension_numbers<[1], [0], [0], [1], [0, 0, 1, 1], [], []>} : vector<128x35xbf16>, vector<35x32xbf16>, vector<128x32xf32> -> vector<128x32xf32>
    %c0_3 = arith.constant 0 : index
    %c0_4 = arith.constant 0 : index
    %3 = vector.load %arg3[%c0_3, %c0_4] : memref<1x32xf32, #tpu.memory_space<vmem>>, vector<1x32xf32>
    %4 = vector.broadcast %3 : vector<1x32xf32> to vector<128x32xf32>
    %5 = arith.addf %2, %4 : vector<128x32xf32>
    %cst_5 = arith.constant 0.000000e+00 : f32
    %6 = vector.broadcast %cst_5 : f32 to vector<128x32xf32>
    %7 = arith.maximumf %5, %6 : vector<128x32xf32>
    %8 = arith.truncf %7 : vector<128x32xf32> to vector<128x32xbf16>
    %c0_6 = arith.constant 0 : index
    %c0_7 = arith.constant 0 : index
    %9 = vector.load %arg4[%c0_6, %c0_7] : memref<32x64xbf16, #tpu.memory_space<vmem>>, vector<32x64xbf16>
    %cst_8 = arith.constant dense<0.000000e+00> : vector<128x64xf32>
    %10 = tpu.matmul %8, %9, %cst_8 {dimension_numbers = #tpu.dot_dimension_numbers<[1], [0], [0], [1], [0, 0, 1, 1], [], []>} : vector<128x32xbf16>, vector<32x64xbf16>, vector<128x64xf32> -> vector<128x64xf32>
    %c0_9 = arith.constant 0 : index
    %c0_10 = arith.constant 0 : index
    %11 = vector.load %arg5[%c0_9, %c0_10] : memref<1x64xf32, #tpu.memory_space<vmem>>, vector<1x64xf32>
    %12 = vector.broadcast %11 : vector<1x64xf32> to vector<128x64xf32>
    %13 = arith.addf %10, %12 : vector<128x64xf32>
    %cst_11 = arith.constant 0.000000e+00 : f32
    %14 = vector.broadcast %cst_11 : f32 to vector<128x64xf32>
    %15 = arith.maximumf %13, %14 : vector<128x64xf32>
    %16 = arith.truncf %15 : vector<128x64xf32> to vector<128x64xbf16>
    %c0_12 = arith.constant 0 : index
    %c0_13 = arith.constant 0 : index
    %17 = vector.load %arg6[%c0_12, %c0_13] : memref<64x32xbf16, #tpu.memory_space<vmem>>, vector<64x32xbf16>
    %cst_14 = arith.constant dense<0.000000e+00> : vector<128x32xf32>
    %18 = tpu.matmul %16, %17, %cst_14 {dimension_numbers = #tpu.dot_dimension_numbers<[1], [0], [0], [1], [0, 0, 1, 1], [], []>} : vector<128x64xbf16>, vector<64x32xbf16>, vector<128x32xf32> -> vector<128x32xf32>
    %c0_15 = arith.constant 0 : index
    %c0_16 = arith.constant 0 : index
    %19 = vector.load %arg7[%c0_15, %c0_16] : memref<1x32xf32, #tpu.memory_space<vmem>>, vector<1x32xf32>
    %20 = vector.broadcast %19 : vector<1x32xf32> to vector<128x32xf32>
    %21 = arith.addf %18, %20 : vector<128x32xf32>
    %cst_17 = arith.constant 0.000000e+00 : f32
    %22 = vector.broadcast %cst_17 : f32 to vector<128x32xf32>
    %23 = arith.maximumf %21, %22 : vector<128x32xf32>
    %24 = vector.shape_cast %23 : vector<128x32xf32> to vector<16x8x32xf32>
    %cst_18 = arith.constant dense<0xFF800000> : vector<16x32xf32>
    %25 = vector.multi_reduction <maximumf>, %24, %cst_18 [1] : vector<16x8x32xf32> to vector<16x32xf32>
    %c0_19 = arith.constant 0 : index
    %c0_20 = arith.constant 0 : index
    %26 = vector.load %arg8[%c0_19, %c0_20] : memref<16x32xf32, #tpu.memory_space<vmem>>, vector<16x32xf32>
    tpu.vector_store %arg8[%c0_19, %c0_20], %25 {strides = array<i32>} : memref<16x32xf32, #tpu.memory_space<vmem>>, vector<16x32xf32>,
    return
  }
  func.func @transform_0(%arg0: i32) -> (i32, i32) {
    %c0_i32 = arith.constant 0 : i32
    %c0_i32_0 = arith.constant 0 : i32
    return %arg0, %c0_i32 : i32, i32
  }
  func.func @transform_1(%arg0: i32) -> (i32, i32) {
    %c0_i32 = arith.constant 0 : i32
    %c0_i32_0 = arith.constant 0 : i32
    %c0_i32_1 = arith.constant 0 : i32
    return %c0_i32, %c0_i32_0 : i32, i32
  }
  func.func @transform_2(%arg0: i32) -> (i32, i32) {
    %c0_i32 = arith.constant 0 : i32
    %c0_i32_0 = arith.constant 0 : i32
    %c0_i32_1 = arith.constant 0 : i32
    return %c0_i32, %c0_i32_0 : i32, i32
  }
  func.func @transform_3(%arg0: i32) -> (i32, i32) {
    %c0_i32 = arith.constant 0 : i32
    %c0_i32_0 = arith.constant 0 : i32
    %c0_i32_1 = arith.constant 0 : i32
    return %c0_i32, %c0_i32_0 : i32, i32
  }
  func.func @transform_4(%arg0: i32) -> (i32, i32) {
    %c0_i32 = arith.constant 0 : i32
    %c0_i32_0 = arith.constant 0 : i32
    %c0_i32_1 = arith.constant 0 : i32
    return %c0_i32, %c0_i32_0 : i32, i32
  }
  func.func @transform_5(%arg0: i32) -> (i32, i32) {
    %c0_i32 = arith.constant 0 : i32
    %c0_i32_0 = arith.constant 0 : i32
    %c0_i32_1 = arith.constant 0 : i32
    return %c0_i32, %c0_i32_0 : i32, i32
  }
  func.func @transform_6(%arg0: i32) -> (i32, i32) {
    %c0_i32 = arith.constant 0 : i32
    %c0_i32_0 = arith.constant 0 : i32
    %c0_i32_1 = arith.constant 0 : i32
    return %c0_i32, %c0_i32_0 : i32, i32
  }
  func.func @transform_7(%arg0: i32) -> (i32, i32) {
    %c0_i32 = arith.constant 0 : i32
    %c0_i32_0 = arith.constant 0 : i32
    return %arg0, %c0_i32 : i32, i32
  }
}

module attributes {stable_mosaic.version = 11 : i64} {
  func.func @kernel(%arg0: i32, %arg1: memref<1x8x32xf32, #tpu.memory_space<vmem>>, %arg2: memref<1x40x32xf32, #tpu.memory_space<vmem>>, %arg3: memref<8x40xbf16, #tpu.memory_space<vmem>>, %arg4: memref<8x1xf32, #tpu.memory_space<vmem>>, %arg5: memref<8x8xbf16, #tpu.memory_space<vmem>>, %arg6: memref<8x8xbf16, #tpu.memory_space<vmem>>, %arg7: memref<8x1xf32, #tpu.memory_space<vmem>>, %arg8: memref<1x8x32xf32, #tpu.memory_space<vmem>>) attributes {dimension_semantics = [#tpu.dimension_semantics<parallel>], iteration_bounds = array<i64: 2>, scalar_prefetch = 0 : i64, scratch_operands = 0 : i64, tpu.core_type = #tpu.core_type<tc>, window_params = [{transform_indices = @transform_0, window_bounds = array<i64: 1, 8, 32>}, {transform_indices = @transform_1, window_bounds = array<i64: 1, 40, 32>}, {pipeline_mode = #tpu.pipeline_mode<synchronous>, transform_indices = @transform_2, window_bounds = array<i64: 8, 40>}, {pipeline_mode = #tpu.pipeline_mode<synchronous>, transform_indices = @transform_3, window_bounds = array<i64: 8, 1>}, {pipeline_mode = #tpu.pipeline_mode<synchronous>, transform_indices = @transform_4, window_bounds = array<i64: 8, 8>}, {pipeline_mode = #tpu.pipeline_mode<synchronous>, transform_indices = @transform_5, window_bounds = array<i64: 8, 8>}, {pipeline_mode = #tpu.pipeline_mode<synchronous>, transform_indices = @transform_6, window_bounds = array<i64: 8, 1>}, {transform_indices = @transform_7, window_bounds = array<i64: 1, 8, 32>}]} {
    %c0 = arith.constant 0 : index
    %c0_0 = arith.constant 0 : index
    %c0_1 = arith.constant 0 : index
    %0 = vector.load %arg1[%c0, %c0_0, %c0_1] : memref<1x8x32xf32, #tpu.memory_space<vmem>>, vector<1x8x32xf32>
    %1 = vector.shape_cast %0 : vector<1x8x32xf32> to vector<8x32xf32>
    %2 = arith.truncf %1 : vector<8x32xf32> to vector<8x32xbf16>
    %c0_2 = arith.constant 0 : index
    %c0_3 = arith.constant 0 : index
    %c0_4 = arith.constant 0 : index
    %3 = vector.load %arg2[%c0_2, %c0_3, %c0_4] : memref<1x40x32xf32, #tpu.memory_space<vmem>>, vector<1x40x32xf32>
    %4 = vector.shape_cast %3 : vector<1x40x32xf32> to vector<40x32xf32>
    %5 = arith.truncf %4 : vector<40x32xf32> to vector<40x32xbf16>
    %c0_5 = arith.constant 0 : index
    %c0_6 = arith.constant 0 : index
    %6 = vector.load %arg3[%c0_5, %c0_6] : memref<8x40xbf16, #tpu.memory_space<vmem>>, vector<8x40xbf16>
    %cst = arith.constant dense<0.000000e+00> : vector<8x32xf32>
    %7 = tpu.matmul %6, %5, %cst {dimension_numbers = #tpu.dot_dimension_numbers<[1], [0], [0], [1], [0, 0, 1, 1], [], []>} : vector<8x40xbf16>, vector<40x32xbf16>, vector<8x32xf32> -> vector<8x32xf32>
    %c0_7 = arith.constant 0 : index
    %c0_8 = arith.constant 0 : index
    %8 = vector.load %arg4[%c0_7, %c0_8] : memref<8x1xf32, #tpu.memory_space<vmem>>, vector<8x1xf32>
    %9 = vector.broadcast %8 : vector<8x1xf32> to vector<8x32xf32>
    %10 = arith.addf %7, %9 : vector<8x32xf32>
    %c0_9 = arith.constant 0 : index
    %c0_10 = arith.constant 0 : index
    %11 = vector.load %arg5[%c0_9, %c0_10] : memref<8x8xbf16, #tpu.memory_space<vmem>>, vector<8x8xbf16>
    %cst_11 = arith.constant dense<0.000000e+00> : vector<8x32xf32>
    %12 = tpu.matmul %11, %2, %cst_11 {dimension_numbers = #tpu.dot_dimension_numbers<[1], [0], [0], [1], [0, 0, 1, 1], [], []>} : vector<8x8xbf16>, vector<8x32xbf16>, vector<8x32xf32> -> vector<8x32xf32>
    %c0_12 = arith.constant 0 : index
    %c0_13 = arith.constant 0 : index
    %13 = vector.load %arg6[%c0_12, %c0_13] : memref<8x8xbf16, #tpu.memory_space<vmem>>, vector<8x8xbf16>
    %14 = arith.truncf %10 : vector<8x32xf32> to vector<8x32xbf16>
    %cst_14 = arith.constant dense<0.000000e+00> : vector<8x32xf32>
    %15 = tpu.matmul %13, %14, %cst_14 {dimension_numbers = #tpu.dot_dimension_numbers<[1], [0], [0], [1], [0, 0, 1, 1], [], []>} : vector<8x8xbf16>, vector<8x32xbf16>, vector<8x32xf32> -> vector<8x32xf32>
    %16 = arith.addf %12, %15 : vector<8x32xf32>
    %c0_15 = arith.constant 0 : index
    %c0_16 = arith.constant 0 : index
    %17 = vector.load %arg7[%c0_15, %c0_16] : memref<8x1xf32, #tpu.memory_space<vmem>>, vector<8x1xf32>
    %18 = vector.broadcast %17 : vector<8x1xf32> to vector<8x32xf32>
    %19 = arith.addf %16, %18 : vector<8x32xf32>
    %c0_17 = arith.constant 0 : index
    %c0_18 = arith.constant 0 : index
    %c0_19 = arith.constant 0 : index
    %20 = vector.load %arg8[%c0_17, %c0_18, %c0_19] : memref<1x8x32xf32, #tpu.memory_space<vmem>>, vector<1x8x32xf32>
    %21 = vector.shape_cast %20 : vector<1x8x32xf32> to vector<8x32xf32>
    %22 = vector.shape_cast %19 : vector<8x32xf32> to vector<1x8x32xf32>
    tpu.vector_store %arg8[%c0_17, %c0_18, %c0_19], %22 {strides = array<i32>} : memref<1x8x32xf32, #tpu.memory_space<vmem>>, vector<1x8x32xf32>,
    return
  }
  func.func @transform_0(%arg0: i32) -> (i32, i32, i32) {
    %c0_i32 = arith.constant 0 : i32
    %c0_i32_0 = arith.constant 0 : i32
    %c0_i32_1 = arith.constant 0 : i32
    return %arg0, %c0_i32, %c0_i32_0 : i32, i32, i32
  }
  func.func @transform_1(%arg0: i32) -> (i32, i32, i32) {
    %c0_i32 = arith.constant 0 : i32
    %c0_i32_0 = arith.constant 0 : i32
    %c0_i32_1 = arith.constant 0 : i32
    return %arg0, %c0_i32, %c0_i32_0 : i32, i32, i32
  }
  func.func @transform_2(%arg0: i32) -> (i32, i32) {
    %c0_i32 = arith.constant 0 : i32
    %c0_i32_0 = arith.constant 0 : i32
    %c0_i32_1 = arith.constant 0 : i32
    return %c0_i32, %c0_i32_0 : i32, i32
  }
  func.func @transform_3(%arg0: i32) -> (i32, i32) {
    %c0_i32 = arith.constant 0 : i32
    %c0_i32_0 = arith.constant 0 : i32
    %c0_i32_1 = arith.constant 0 : i32
    return %c0_i32, %c0_i32_0 : i32, i32
  }
  func.func @transform_4(%arg0: i32) -> (i32, i32) {
    %c0_i32 = arith.constant 0 : i32
    %c0_i32_0 = arith.constant 0 : i32
    %c0_i32_1 = arith.constant 0 : i32
    return %c0_i32, %c0_i32_0 : i32, i32
  }
  func.func @transform_5(%arg0: i32) -> (i32, i32) {
    %c0_i32 = arith.constant 0 : i32
    %c0_i32_0 = arith.constant 0 : i32
    %c0_i32_1 = arith.constant 0 : i32
    return %c0_i32, %c0_i32_0 : i32, i32
  }
  func.func @transform_6(%arg0: i32) -> (i32, i32) {
    %c0_i32 = arith.constant 0 : i32
    %c0_i32_0 = arith.constant 0 : i32
    %c0_i32_1 = arith.constant 0 : i32
    return %c0_i32, %c0_i32_0 : i32, i32
  }
  func.func @transform_7(%arg0: i32) -> (i32, i32, i32) {
    %c0_i32 = arith.constant 0 : i32
    %c0_i32_0 = arith.constant 0 : i32
    %c0_i32_1 = arith.constant 0 : i32
    return %arg0, %c0_i32, %c0_i32_0 : i32, i32, i32
  }
}

module attributes {stable_mosaic.version = 11 : i64} {
  func.func @kernel(%arg0: memref<16x35xbf16, #tpu.memory_space<vmem>>, %arg1: memref<35x32xbf16, #tpu.memory_space<vmem>>, %arg2: memref<1x32xf32, #tpu.memory_space<vmem>>, %arg3: memref<32x64xbf16, #tpu.memory_space<vmem>>, %arg4: memref<1x64xf32, #tpu.memory_space<vmem>>, %arg5: memref<64x32xbf16, #tpu.memory_space<vmem>>, %arg6: memref<1x32xf32, #tpu.memory_space<vmem>>, %arg7: memref<32x24xbf16, #tpu.memory_space<vmem>>, %arg8: memref<1x24xf32, #tpu.memory_space<vmem>>, %arg9: memref<24x16xbf16, #tpu.memory_space<vmem>>, %arg10: memref<1x16xf32, #tpu.memory_space<vmem>>, %arg11: memref<16x5xbf16, #tpu.memory_space<vmem>>, %arg12: memref<1x5xf32, #tpu.memory_space<vmem>>, %arg13: memref<2x5xf32, #tpu.memory_space<vmem>>) attributes {dimension_semantics = [], scalar_prefetch = 0 : i64, scratch_operands = 0 : i64, tpu.core_type = #tpu.core_type<tc>} {
    %c0 = arith.constant 0 : index
    %c0_0 = arith.constant 0 : index
    %0 = vector.load %arg0[%c0, %c0_0] : memref<16x35xbf16, #tpu.memory_space<vmem>>, vector<16x35xbf16>
    %c0_1 = arith.constant 0 : index
    %c0_2 = arith.constant 0 : index
    %1 = vector.load %arg1[%c0_1, %c0_2] : memref<35x32xbf16, #tpu.memory_space<vmem>>, vector<35x32xbf16>
    %cst = arith.constant dense<0.000000e+00> : vector<16x32xf32>
    %2 = tpu.matmul %0, %1, %cst {dimension_numbers = #tpu.dot_dimension_numbers<[1], [0], [0], [1], [0, 0, 1, 1], [], []>} : vector<16x35xbf16>, vector<35x32xbf16>, vector<16x32xf32> -> vector<16x32xf32>
    %c0_3 = arith.constant 0 : index
    %c0_4 = arith.constant 0 : index
    %3 = vector.load %arg2[%c0_3, %c0_4] : memref<1x32xf32, #tpu.memory_space<vmem>>, vector<1x32xf32>
    %4 = vector.broadcast %3 : vector<1x32xf32> to vector<16x32xf32>
    %5 = arith.addf %2, %4 : vector<16x32xf32>
    %cst_5 = arith.constant 0.000000e+00 : f32
    %6 = vector.broadcast %cst_5 : f32 to vector<16x32xf32>
    %7 = arith.maximumf %5, %6 : vector<16x32xf32>
    %8 = arith.truncf %7 : vector<16x32xf32> to vector<16x32xbf16>
    %c0_6 = arith.constant 0 : index
    %c0_7 = arith.constant 0 : index
    %9 = vector.load %arg3[%c0_6, %c0_7] : memref<32x64xbf16, #tpu.memory_space<vmem>>, vector<32x64xbf16>
    %cst_8 = arith.constant dense<0.000000e+00> : vector<16x64xf32>
    %10 = tpu.matmul %8, %9, %cst_8 {dimension_numbers = #tpu.dot_dimension_numbers<[1], [0], [0], [1], [0, 0, 1, 1], [], []>} : vector<16x32xbf16>, vector<32x64xbf16>, vector<16x64xf32> -> vector<16x64xf32>
    %c0_9 = arith.constant 0 : index
    %c0_10 = arith.constant 0 : index
    %11 = vector.load %arg4[%c0_9, %c0_10] : memref<1x64xf32, #tpu.memory_space<vmem>>, vector<1x64xf32>
    %12 = vector.broadcast %11 : vector<1x64xf32> to vector<16x64xf32>
    %13 = arith.addf %10, %12 : vector<16x64xf32>
    %cst_11 = arith.constant 0.000000e+00 : f32
    %14 = vector.broadcast %cst_11 : f32 to vector<16x64xf32>
    %15 = arith.maximumf %13, %14 : vector<16x64xf32>
    %16 = arith.truncf %15 : vector<16x64xf32> to vector<16x64xbf16>
    %c0_12 = arith.constant 0 : index
    %c0_13 = arith.constant 0 : index
    %17 = vector.load %arg5[%c0_12, %c0_13] : memref<64x32xbf16, #tpu.memory_space<vmem>>, vector<64x32xbf16>
    %cst_14 = arith.constant dense<0.000000e+00> : vector<16x32xf32>
    %18 = tpu.matmul %16, %17, %cst_14 {dimension_numbers = #tpu.dot_dimension_numbers<[1], [0], [0], [1], [0, 0, 1, 1], [], []>} : vector<16x64xbf16>, vector<64x32xbf16>, vector<16x32xf32> -> vector<16x32xf32>
    %c0_15 = arith.constant 0 : index
    %c0_16 = arith.constant 0 : index
    %19 = vector.load %arg6[%c0_15, %c0_16] : memref<1x32xf32, #tpu.memory_space<vmem>>, vector<1x32xf32>
    %20 = vector.broadcast %19 : vector<1x32xf32> to vector<16x32xf32>
    %21 = arith.addf %18, %20 : vector<16x32xf32>
    %cst_17 = arith.constant 0.000000e+00 : f32
    %22 = vector.broadcast %cst_17 : f32 to vector<16x32xf32>
    %23 = arith.maximumf %21, %22 : vector<16x32xf32>
    %24 = vector.shape_cast %23 : vector<16x32xf32> to vector<2x8x32xf32>
    %cst_18 = arith.constant dense<0xFF800000> : vector<2x32xf32>
    %25 = vector.multi_reduction <maximumf>, %24, %cst_18 [1] : vector<2x8x32xf32> to vector<2x32xf32>
    %26 = arith.truncf %25 : vector<2x32xf32> to vector<2x32xbf16>
    %c0_19 = arith.constant 0 : index
    %c0_20 = arith.constant 0 : index
    %27 = vector.load %arg7[%c0_19, %c0_20] : memref<32x24xbf16, #tpu.memory_space<vmem>>, vector<32x24xbf16>
    %cst_21 = arith.constant dense<0.000000e+00> : vector<2x24xf32>
    %28 = tpu.matmul %26, %27, %cst_21 {dimension_numbers = #tpu.dot_dimension_numbers<[1], [0], [0], [1], [0, 0, 1, 1], [], []>} : vector<2x32xbf16>, vector<32x24xbf16>, vector<2x24xf32> -> vector<2x24xf32>
    %c0_22 = arith.constant 0 : index
    %c0_23 = arith.constant 0 : index
    %29 = vector.load %arg8[%c0_22, %c0_23] : memref<1x24xf32, #tpu.memory_space<vmem>>, vector<1x24xf32>
    %30 = vector.broadcast %29 : vector<1x24xf32> to vector<2x24xf32>
    %31 = arith.addf %28, %30 : vector<2x24xf32>
    %cst_24 = arith.constant 0.000000e+00 : f32
    %32 = vector.broadcast %cst_24 : f32 to vector<2x24xf32>
    %33 = arith.maximumf %31, %32 : vector<2x24xf32>
    %34 = arith.truncf %33 : vector<2x24xf32> to vector<2x24xbf16>
    %c0_25 = arith.constant 0 : index
    %c0_26 = arith.constant 0 : index
    %35 = vector.load %arg9[%c0_25, %c0_26] : memref<24x16xbf16, #tpu.memory_space<vmem>>, vector<24x16xbf16>
    %cst_27 = arith.constant dense<0.000000e+00> : vector<2x16xf32>
    %36 = tpu.matmul %34, %35, %cst_27 {dimension_numbers = #tpu.dot_dimension_numbers<[1], [0], [0], [1], [0, 0, 1, 1], [], []>} : vector<2x24xbf16>, vector<24x16xbf16>, vector<2x16xf32> -> vector<2x16xf32>
    %c0_28 = arith.constant 0 : index
    %c0_29 = arith.constant 0 : index
    %37 = vector.load %arg10[%c0_28, %c0_29] : memref<1x16xf32, #tpu.memory_space<vmem>>, vector<1x16xf32>
    %38 = vector.broadcast %37 : vector<1x16xf32> to vector<2x16xf32>
    %39 = arith.addf %36, %38 : vector<2x16xf32>
    %cst_30 = arith.constant 0.000000e+00 : f32
    %40 = vector.broadcast %cst_30 : f32 to vector<2x16xf32>
    %41 = arith.maximumf %39, %40 : vector<2x16xf32>
    %42 = arith.truncf %41 : vector<2x16xf32> to vector<2x16xbf16>
    %c0_31 = arith.constant 0 : index
    %c0_32 = arith.constant 0 : index
    %43 = vector.load %arg11[%c0_31, %c0_32] : memref<16x5xbf16, #tpu.memory_space<vmem>>, vector<16x5xbf16>
    %cst_33 = arith.constant dense<0.000000e+00> : vector<2x5xf32>
    %44 = tpu.matmul %42, %43, %cst_33 {dimension_numbers = #tpu.dot_dimension_numbers<[1], [0], [0], [1], [0, 0, 1, 1], [], []>} : vector<2x16xbf16>, vector<16x5xbf16>, vector<2x5xf32> -> vector<2x5xf32>
    %c0_34 = arith.constant 0 : index
    %c0_35 = arith.constant 0 : index
    %45 = vector.load %arg12[%c0_34, %c0_35] : memref<1x5xf32, #tpu.memory_space<vmem>>, vector<1x5xf32>
    %46 = vector.broadcast %45 : vector<1x5xf32> to vector<2x5xf32>
    %47 = arith.addf %44, %46 : vector<2x5xf32>
    %c0_36 = arith.constant 0 : index
    %c0_37 = arith.constant 0 : index
    %48 = vector.load %arg13[%c0_36, %c0_37] : memref<2x5xf32, #tpu.memory_space<vmem>>, vector<2x5xf32>
    tpu.vector_store %arg13[%c0_36, %c0_37], %47 {strides = array<i32>} : memref<2x5xf32, #tpu.memory_space<vmem>>, vector<2x5xf32>,
    return
  }
}

</mosaic_0001>

<llo_original>
// kernel: custom-call.16
$region0: #{custom-call.16}
  %s0 = inlined_call_operand.vmem [shape: f32[2,32], index: 0, kind: output, shape index: {}]

// kernel: custom-call.17
$region0: #{custom-call.17}
  %s0 = inlined_call_operand.vmem [shape: f32[2,16], index: 0, kind: output, shape index: {}]

// kernel: _lambda_.6
$region0: #{_lambda_.6}
  #allocation0 [shape = 'u32[]', space=smem, size = 0x4, offset = 0x4, fixed_abs, tag = 'smem constant byte address 0x4 - core index']
  #allocation1 [shape = 'u32[72,128]{1,0:T(1,128)}', space=vmem, size = 0x9000, scoped, tag = 'internal scratch']
  %s0 = inlined_call_operand.vmem [shape: f32[2,16,32], index: 0, kind: input, shape index: {}]
  %s1 = inlined_call_operand.vmem [shape: f32[2,40,32], index: 1, kind: input, shape index: {}]
  %s2 = inlined_call_operand.vmem [shape: bf16[16,40], index: 2, kind: input, shape index: {}]
  %s3 = inlined_call_operand.vmem [shape: f32[16,1], index: 3, kind: input, shape index: {}]
  %s4 = inlined_call_operand.vmem [shape: bf16[16,16], index: 4, kind: input, shape index: {}]
  %s5 = inlined_call_operand.vmem [shape: bf16[16,16], index: 5, kind: input, shape index: {}]
  %s6 = inlined_call_operand.vmem [shape: f32[16,1], index: 6, kind: input, shape index: {}]
  %s7 = inlined_call_operand.vmem [shape: f32[2,16,32], index: 7, kind: output, shape index: {}]
  %s8 = sld [smem:[#allocation0]]
  $region61: #{_lambda_.6} parent=0
    _
  %s10 = ssub.s32 1, %s8
  %s11 = scalar_select 0, %s10, %s8
  loop: start=0, step=1, limit=4
  $region2: #{_lambda_.6} parent=0 // loop_pre_header
    _
  $region3: #{_lambda_.6} parent=0 // loop_header
    %s13 = sphi 0, %s17
    %p14 = scmp.ge.s32.totalorder %s13, 4
    %s23 = sphi 0, %s25
    %s26 = sphi 0, %s23
    %s27 = sphi 0, %s26
    %s43 = sphi 0, %s27
    %s49 = sphi 0, %s51
    %s52 = sphi 0, %s49
    %s53 = sphi 0, %s52
    %s69 = sphi 0, %s53
    %s73 = sphi 0, %s73
    %s75 = sphi 0, %s73
    %s76 = sphi 0, %s75
    %s90 = sphi 0, %s76
    %s94 = sphi 0, %s94
    %s96 = sphi 0, %s94
    %s97 = sphi 0, %s96
    %s111 = sphi 0, %s97
    %s115 = sphi 0, %s115
    %s117 = sphi 0, %s115
    %s118 = sphi 0, %s117
    %s132 = sphi 0, %s118
    %s136 = sphi 0, %s136
    %s138 = sphi 0, %s136
    %s139 = sphi 0, %s138
    %s153 = sphi 0, %s139
    %s157 = sphi 0, %s157
    %s159 = sphi 0, %s157
    %s160 = sphi 0, %s159
    %s174 = sphi 0, %s160
    %s180 = sphi 0, %s182
    %s183 = sphi 0, %s180
    %s184 = sphi 0, %s183
    %s200 = sphi 0, %s184
  $region4: #{_lambda_.6} parent=0 // loop_header_branch
    %16 = sbr.rel (%p14) target = $region8
  $region5: #{_lambda_.6} parent=0 // loop_body
    %s18 = ssub.s32 %s13, 1
    %s19 = ssub.s32 %s13, 2
    %s20 = sadd.s32 %s13, 1
    %s21 = ssub.s32 %s13, %s20
    %p22 = scmp.eq.s32.totalorder %s21, 0
    %s24 = sadd.s32 %s23, 1
    %s25 = scalar_select %p22, %s23, %s24
    %p28 = pneg %p22
    %p29 = scmp.eq.s32.totalorder %s13, 1
    %p30 = por %p28, %p29
    %p31 = scmp.ne.s32.totalorder %s23, %s26
    %p32 = scmp.eq.s32.totalorder %s13, 0
    %p33 = por %p31, %p32
    %p34 = scmp.ne.s32.totalorder %s23, %s26
    %p35 = scmp.eq.s32.totalorder %s18, 1
    %p36 = por %p34, %p35
    %p37 = scmp.ne.s32.totalorder %s26, %s27
    %p38 = scmp.eq.s32.totalorder %s18, 0
    %p39 = por %p37, %p38
    %p40 = scmp.ne.s32.totalorder %s26, %s27
    %p41 = scmp.eq.s32.totalorder %s19, 1
    %p42 = por %p40, %p41
    %p44 = scmp.ne.s32.totalorder %s27, %s43
    %p45 = scmp.eq.s32.totalorder %s19, 0
    %p46 = por %p44, %p45
    %s47 = ssub.s32 %s13, %s20
    %p48 = scmp.eq.s32.totalorder %s47, 0
    %s50 = sadd.s32 %s49, 1
    %s51 = scalar_select %p48, %s49, %s50
    %p54 = pneg %p48
    %p55 = scmp.eq.s32.totalorder %s13, 1
    %p56 = por %p54, %p55
    %p57 = scmp.ne.s32.totalorder %s49, %s52
    %p58 = scmp.eq.s32.totalorder %s13, 0
    %p59 = por %p57, %p58
    %p60 = scmp.ne.s32.totalorder %s49, %s52
    %p61 = scmp.eq.s32.totalorder %s18, 1
    %p62 = por %p60, %p61
    %p63 = scmp.ne.s32.totalorder %s52, %s53
    %p64 = scmp.eq.s32.totalorder %s18, 0
    %p65 = por %p63, %p64
    %p66 = scmp.ne.s32.totalorder %s52, %s53
    %p67 = scmp.eq.s32.totalorder %s19, 1
    %p68 = por %p66, %p67
    %p70 = scmp.ne.s32.totalorder %s53, %s69
    %p71 = scmp.eq.s32.totalorder %s19, 0
    %p72 = por %p70, %p71
    %s74 = sadd.s32 %s73, 1
    %p77 = scmp.eq.s32.totalorder %s13, 1
    %p78 = scmp.ne.s32.totalorder %s73, %s75
    %p79 = scmp.eq.s32.totalorder %s13, 0
    %p80 = por %p78, %p79
    %p81 = scmp.ne.s32.totalorder %s73, %s75
    %p82 = scmp.eq.s32.totalorder %s18, 1
    %p83 = por %p81, %p82
    %p84 = scmp.ne.s32.totalorder %s75, %s76
    %p85 = scmp.eq.s32.totalorder %s18, 0
    %p86 = por %p84, %p85
    %p87 = scmp.ne.s32.totalorder %s75, %s76
    %p88 = scmp.eq.s32.totalorder %s19, 1
    %p89 = por %p87, %p88
    %p91 = scmp.ne.s32.totalorder %s76, %s90
    %p92 = scmp.eq.s32.totalorder %s19, 0
    %p93 = por %p91, %p92
    %s95 = sadd.s32 %s94, 1
    %p98 = scmp.eq.s32.totalorder %s13, 1
    %p99 = scmp.ne.s32.totalorder %s94, %s96
    %p100 = scmp.eq.s32.totalorder %s13, 0
    %p101 = por %p99, %p100
    %p102 = scmp.ne.s32.totalorder %s94, %s96
    %p103 = scmp.eq.s32.totalorder %s18, 1
    %p104 = por %p102, %p103
    %p105 = scmp.ne.s32.totalorder %s96, %s97
    %p106 = scmp.eq.s32.totalorder %s18, 0
    %p107 = por %p105, %p106
    %p108 = scmp.ne.s32.totalorder %s96, %s97
    %p109 = scmp.eq.s32.totalorder %s19, 1
    %p110 = por %p108, %p109
    %p112 = scmp.ne.s32.totalorder %s97, %s111
    %p113 = scmp.eq.s32.totalorder %s19, 0
    %p114 = por %p112, %p113
    %s116 = sadd.s32 %s115, 1
    %p119 = scmp.eq.s32.totalorder %s13, 1
    %p120 = scmp.ne.s32.totalorder %s115, %s117
    %p121 = scmp.eq.s32.totalorder %s13, 0
    %p122 = por %p120, %p121
    %p123 = scmp.ne.s32.totalorder %s115, %s117
    %p124 = scmp.eq.s32.totalorder %s18, 1
    %p125 = por %p123, %p124
    %p126 = scmp.ne.s32.totalorder %s117, %s118
    %p127 = scmp.eq.s32.totalorder %s18, 0
    %p128 = por %p126, %p127
    %p129 = scmp.ne.s32.totalorder %s117, %s118
    %p130 = scmp.eq.s32.totalorder %s19, 1
    %p131 = por %p129, %p130
    %p133 = scmp.ne.s32.totalorder %s118, %s132
    %p134 = scmp.eq.s32.totalorder %s19, 0
    %p135 = por %p133, %p134
    %s137 = sadd.s32 %s136, 1
    %p140 = scmp.eq.s32.totalorder %s13, 1
    %p141 = scmp.ne.s32.totalorder %s136, %s138
    %p142 = scmp.eq.s32.totalorder %s13, 0
    %p143 = por %p141, %p142
    %p144 = scmp.ne.s32.totalorder %s136, %s138
    %p145 = scmp.eq.s32.totalorder %s18, 1
    %p146 = por %p144, %p145
    %p147 = scmp.ne.s32.totalorder %s138, %s139
    %p148 = scmp.eq.s32.totalorder %s18, 0
    %p149 = por %p147, %p148
    %p150 = scmp.ne.s32.totalorder %s138, %s139
    %p151 = scmp.eq.s32.totalorder %s19, 1
    %p152 = por %p150, %p151
    %p154 = scmp.ne.s32.totalorder %s139, %s153
    %p155 = scmp.eq.s32.totalorder %s19, 0
    %p156 = por %p154, %p155
    %s158 = sadd.s32 %s157, 1
    %p161 = scmp.eq.s32.totalorder %s13, 1
    %p162 = scmp.ne.s32.totalorder %s157, %s159
    %p163 = scmp.eq.s32.totalorder %s13, 0
    %p164 = por %p162, %p163
    %p165 = scmp.ne.s32.totalorder %s157, %s159
    %p166 = scmp.eq.s32.totalorder %s18, 1
    %p167 = por %p165, %p166
    %p168 = scmp.ne.s32.totalorder %s159, %s160
    %p169 = scmp.eq.s32.totalorder %s18, 0
    %p170 = por %p168, %p169
    %p171 = scmp.ne.s32.totalorder %s159, %s160
    %p172 = scmp.eq.s32.totalorder %s19, 1
    %p173 = por %p171, %p172
    %p175 = scmp.ne.s32.totalorder %s160, %s174
    %p176 = scmp.eq.s32.totalorder %s19, 0
    %p177 = por %p175, %p176
    %s178 = ssub.s32 %s13, %s20
    %p179 = scmp.eq.s32.totalorder %s178, 0
    %s181 = sadd.s32 %s180, 1
    %s182 = scalar_select %p179, %s180, %s181
    %p185 = pneg %p179
    %p186 = scmp.eq.s32.totalorder %s13, 1
    %p187 = por %p185, %p186
    %p188 = scmp.ne.s32.totalorder %s180, %s183
    %p189 = scmp.eq.s32.totalorder %s13, 0
    %p190 = por %p188, %p189
    %p191 = scmp.ne.s32.totalorder %s180, %s183
    %p192 = scmp.eq.s32.totalorder %s18, 1
    %p193 = por %p191, %p192
    %p194 = scmp.ne.s32.totalorder %s183, %s184
    %p195 = scmp.eq.s32.totalorder %s18, 0
    %p196 = por %p194, %p195
    %p197 = scmp.ne.s32.totalorder %s183, %s184
    %p198 = scmp.eq.s32.totalorder %s19, 1
    %p199 = por %p197, %p198
    %p201 = scmp.ne.s32.totalorder %s184, %s200
    %p202 = scmp.eq.s32.totalorder %s19, 0
    %p203 = por %p201, %p202
    %p204 = scmp.le.s32.totalorder 1, %s13
    %p205 = scmp.lt.s32.totalorder %s13, 3
    %p206 = pnand %p204, %p205
    %p207 = pneg %p206
    // Predicated region
    $region9: #{_lambda_.6} parent=5 // pred_check
      _
    $region10: #{_lambda_.6} parent=5 // pred_check_branch
      %209 = sbr.rel (%p206) target = $region12
    $region11: #{_lambda_.6} parent=5 // pred_region
      %s210 = ssub.s32 %s13, 1
      // Predicated region
      $region13: #{_lambda_.6} parent=11 // pred_check
        %p211 = pneg %p86
      $region14: #{_lambda_.6} parent=11 // pred_check_branch
        %213 = sbr.rel (%p211) target = $region16
      $region15: #{_lambda_.6} parent=11 // pred_region
        _
      $region16: #{_lambda_.6} parent=11 // pred_fallthru
        _
      // Predicated region
      $region17: #{_lambda_.6} parent=11 // pred_check
        %p214 = pneg %p107
      $region18: #{_lambda_.6} parent=11 // pred_check_branch
        %216 = sbr.rel (%p214) target = $region20
      $region19: #{_lambda_.6} parent=11 // pred_region
        _
      $region20: #{_lambda_.6} parent=11 // pred_fallthru
        _
      // Predicated region
      $region21: #{_lambda_.6} parent=11 // pred_check
        %p217 = pneg %p128
      $region22: #{_lambda_.6} parent=11 // pred_check_branch
        %219 = sbr.rel (%p217) target = $region24
      $region23: #{_lambda_.6} parent=11 // pred_region
        _
      $region24: #{_lambda_.6} parent=11 // pred_fallthru
        _
      // Predicated region
      $region25: #{_lambda_.6} parent=11 // pred_check
        %p220 = pneg %p149
      $region26: #{_lambda_.6} parent=11 // pred_check_branch
        %222 = sbr.rel (%p220) target = $region28
      $region27: #{_lambda_.6} parent=11 // pred_region
        _
      $region28: #{_lambda_.6} parent=11 // pred_fallthru
        _
      // Predicated region
      $region29: #{_lambda_.6} parent=11 // pred_check
        %p223 = pneg %p170
      $region30: #{_lambda_.6} parent=11 // pred_check_branch
        %225 = sbr.rel (%p223) target = $region32
      $region31: #{_lambda_.6} parent=11 // pred_region
        _
      $region32: #{_lambda_.6} parent=11 // pred_fallthru
        _
    $region12: #{_lambda_.6} parent=5 // pred_fallthru
      _
    %p226 = scmp.lt.s32.totalorder %s13, 2
    // Predicated region
    $region33: #{_lambda_.6} parent=5 // pred_check
      %p227 = pneg %p226
    $region34: #{_lambda_.6} parent=5 // pred_check_branch
      %229 = sbr.rel (%p227) target = $region36
    $region35: #{_lambda_.6} parent=5 // pred_region
      // Predicated region
      $region37: #{_lambda_.6} parent=35 // pred_check
        %p230 = pneg %p33
      $region38: #{_lambda_.6} parent=35 // pred_check_branch
        %232 = sbr.rel (%p230) target = $region40
      $region39: #{_lambda_.6} parent=35 // pred_region
        %p233 = scmp.lt.s32.totalorder %s13, 1
        %s234 = scalar_select %p233, %s13, 1
        %s235 = smul.addr %s234, 2
        %s236 = smul.addr %s235, 8
        %s237 = scalar_lea.vmem %s0, %s236
      $region40: #{_lambda_.6} parent=35 // pred_fallthru
        _
      // Predicated region
      $region41: #{_lambda_.6} parent=35 // pred_check
        %p238 = pneg %p59
      $region42: #{_lambda_.6} parent=35 // pred_check_branch
        %240 = sbr.rel (%p238) target = $region44
      $region43: #{_lambda_.6} parent=35 // pred_region
        %p241 = scmp.lt.s32.totalorder %s13, 1
        %s242 = scalar_select %p241, %s13, 1
        %s243 = smul.addr %s242, 5
        %s244 = smul.addr %s243, 8
        %s245 = scalar_lea.vmem %s1, %s244
      $region44: #{_lambda_.6} parent=35 // pred_fallthru
        _
    $region36: #{_lambda_.6} parent=5 // pred_fallthru
      _
    %p246 = scmp.le.s32.totalorder 1, %s13
    %p247 = scmp.lt.s32.totalorder %s13, 3
    %p248 = pnand %p246, %p247
    %p249 = pneg %p248
    // Predicated region
    $region45: #{_lambda_.6} parent=5 // pred_check
      _
    $region46: #{_lambda_.6} parent=5 // pred_check_branch
      %251 = sbr.rel (%p248) target = $region48
    $region47: #{_lambda_.6} parent=5 // pred_region
      %s252 = ssub.s32 %s13, 1
      %p253 = scmp.lt.s32.totalorder %s18, 1
      %s254 = scalar_select %p253, %s18, 1
      %s255 = smul.addr %s254, 2
      %s256 = smul.addr %s255, 8
      %s257 = scalar_lea.vmem %s0, %s256
      %p258 = pneg %p39
      %p259 = pneg %p36
      %p260 = scmp.lt.s32.totalorder %s18, 1
      %s261 = scalar_select %p260, %s18, 1
      %s262 = smul.addr %s261, 5
      %s263 = smul.addr %s262, 8
      %s264 = scalar_lea.vmem %s1, %s263
      %p265 = pneg %p65
      %p266 = pneg %p62
      %p267 = pneg %p86
      %p268 = pneg %p83
      %p269 = pneg %p107
      %p270 = pneg %p104
      %p271 = pneg %p128
      %p272 = pneg %p125
      %p273 = pneg %p149
      %p274 = pneg %p146
      %p275 = pneg %p170
      %p276 = pneg %p167
      %p277 = pneg %p196
      %p278 = pneg %p193
      %p279 = scmp.lt.s32.totalorder %s18, 1
      %s280 = scalar_select %p279, %s18, 1
      %s281 = smul.addr %s280, 2
      %s282 = smul.addr %s281, 8
      %s283 = scalar_lea.vmem %s7, %s282
      %p284 = scmp.lt.s32.totalorder %s18, 1
      %s285 = scalar_select %p284, %s18, 1
      %s286 = smul.addr %s285, 2
      %s287 = smul.addr %s286, 8
      %s288 = scalar_lea.vmem %s0, %s287
      %p289 = scmp.lt.s32.totalorder %s18, 1
      %s290 = scalar_select %p289, %s18, 1
      %s291 = smul.addr %s290, 5
      %s292 = smul.addr %s291, 8
      %s293 = scalar_lea.vmem %s1, %s292
      %p294 = scmp.lt.s32.totalorder %s18, 1
      %s295 = scalar_select %p294, %s18, 1
      %s296 = smul.addr %s295, 2
      %s297 = smul.addr %s296, 8
      %s298 = scalar_lea.vmem %s7, %s297
      %v300 = vld [vmem:[%s288] sm:$0xff]
      %v301 = vld [vmem:[%s288 + $0x8] sm:$0xff]
      %v302 = vpack.c.bf16 %v301, %v300
      %v303 = vld [vmem:[%s293] sm:$0xff]
      %v304 = vld [vmem:[%s293 + $0x8] sm:$0xff]
      %v305 = vld [vmem:[%s293 + $0x10] sm:$0xff]
      %v306 = vld [vmem:[%s293 + $0x18] sm:$0xff]
      %v307 = vld [vmem:[%s293 + $0x20] sm:$0xff]
      %v308 = vpack.c.bf16 %v304, %v303
      %v309 = vpack.c.bf16 %v306, %v305
      %v310 = vpack.c.bf16 %v307, %v307
      %v311 = vld [vmem:[%s2] sm:$0xf]
      %v312 = vld [vmem:[%s2 + $0x4] sm:$0xf]
      %v313 = vld [vmem:[%s3] sm:$0xff]
      %v314 = vld [vmem:[%s3 + $0x8] sm:$0xff]
      %316 = vset.pattern.permute.xlu0 0
      %317 = vperm.xlu0 %316, %v313
      %v318 = vpop.permute.xlu0 %317
      %321 = vset.pattern.permute.xlu0 0
      %322 = vperm.xlu0 %321, %v314
      %v323 = vpop.permute.xlu0 %322
      %v327 = vunpack.c.l.b16 %v311
      %v328 = vunpack.c.l.b16 %v312
      %v329 = vpack.c.b16 %v328, %v327
      %vm330 = vcmask 326656
      %v332 = vsel %vm330, %v329, 0
      %vm334 = vcmask 1043456
      %v336 = vsel %vm334, %v310, 0
      %338 = vmatpush.bf16.msra.mxu0 0
      %339 = vmatpush.bf16.msra.mxu0 0
      %340 = vmatpush.bf16.msra.mxu0 0
      %341 = vmatpush.bf16.msra.mxu0 0
      %342 = vmatpush.bf16.msra.mxu0 0
      %343 = vmatpush.bf16.msra.mxu0 %v336
      %344 = vmatpush.bf16.msra.mxu0 %v309
      %345 = vmatpush.bf16.msra.mxu0 %v308
      %346 = vmatmul.bf16.gmra.mxu0 %v332
      %v347 = vpop.f32.mrf.mxu0
      %v348 = vadd.f32 %v318, %v347
      %v349 = vpop.f32.mrf.mxu0
      %v350 = vadd.f32 %v323, %v349
      %351 = vdwg.mxu0
      %v352 = vld [vmem:[%s4] sm:$0xf]
      %v353 = vld [vmem:[%s4 + $0x4] sm:$0xf]
      %v354 = vld [vmem:[%s5] sm:$0xf]
      %v355 = vld [vmem:[%s5 + $0x4] sm:$0xf]
      %v356 = vpack.c.bf16 %v350, %v348
      %v359 = vunpack.c.l.b16 %v354
      %v360 = vunpack.c.l.b16 %v355
      %v361 = vpack.c.b16 %v360, %v359
      %vm362 = vcmask 130048
      %v364 = vsel %vm362, %v361, 0
      %366 = vmatpush.bf16.msra.mxu0 0
      %367 = vmatpush.bf16.msra.mxu0 0
      %368 = vmatpush.bf16.msra.mxu0 0
      %369 = vmatpush.bf16.msra.mxu0 0
      %370 = vmatpush.bf16.msra.mxu0 0
      %371 = vmatpush.bf16.msra.mxu0 0
      %372 = vmatpush.bf16.msra.mxu0 0
      %373 = vmatpush.bf16.msra.mxu0 %v356
      %374 = vmatmul.bf16.gmra.mxu0 %v364
      %v375 = vpop.f32.mrf.mxu0
      %v376 = vadd.f32 0.0, %v375
      %v377 = vpop.f32.mrf.mxu0
      %v378 = vadd.f32 0.0, %v377
      %379 = vdwg.mxu0
      %v382 = vunpack.c.l.b16 %v352
      %v383 = vunpack.c.l.b16 %v353
      %v384 = vpack.c.b16 %v383, %v382
      %v386 = vsel %vm362, %v384, 0
      %388 = vmatpush.bf16.msra.mxu0 0
      %389 = vmatpush.bf16.msra.mxu0 0
      %390 = vmatpush.bf16.msra.mxu0 0
      %391 = vmatpush.bf16.msra.mxu0 0
      %392 = vmatpush.bf16.msra.mxu0 0
      %393 = vmatpush.bf16.msra.mxu0 0
      %394 = vmatpush.bf16.msra.mxu0 0
      %395 = vmatpush.bf16.msra.mxu0 %v302
      %396 = vmatmul.bf16.gmra.mxu0 %v386
      %v397 = vpop.f32.mrf.mxu0
      %v398 = vadd.f32 %v376, %v397
      %v399 = vpop.f32.mrf.mxu0
      %v400 = vadd.f32 %v378, %v399
      %401 = vdwg.mxu0
      %v402 = vld [vmem:[%s6] sm:$0xff]
      %v403 = vld [vmem:[%s6 + $0x8] sm:$0xff]
      %405 = vset.pattern.permute.xlu0 0
      %406 = vperm.xlu0 %405, %v402
      %v407 = vpop.permute.xlu0 %406
      %410 = vset.pattern.permute.xlu0 0
      %411 = vperm.xlu0 %410, %v403
      %v412 = vpop.permute.xlu0 %411
      %v414 = vadd.f32 %v398, %v407
      %v415 = vadd.f32 %v400, %v412
      %vm416 = vcmask 261120
      %417 = vst.msk [vmem:[%s298] sm:$0xff] %vm416, %v414
      %418 = vst.msk [vmem:[%s298 + $0x8] sm:$0xff] %vm416, %v415
      %p419 = scmp.lt.s32.totalorder %s18, 1
      %s420 = scalar_select %p419, %s18, 1
      %s421 = smul.addr %s420, 2
      %s422 = smul.addr %s421, 8
      %s423 = scalar_lea.vmem %s7, %s422
      // Predicated region
      $region49: #{_lambda_.6} parent=47 // pred_check
        %p424 = pneg %p193
      $region50: #{_lambda_.6} parent=47 // pred_check_branch
        %426 = sbr.rel (%p424) target = $region52
      $region51: #{_lambda_.6} parent=47 // pred_region
        _
      $region52: #{_lambda_.6} parent=47 // pred_fallthru
        _
    $region48: #{_lambda_.6} parent=5 // pred_fallthru
      _
    %p427 = scmp.le.s32.totalorder 2, %s13
    // Predicated region
    $region53: #{_lambda_.6} parent=5 // pred_check
      %p428 = pneg %p427
    $region54: #{_lambda_.6} parent=5 // pred_check_branch
      %430 = sbr.rel (%p428) target = $region56
    $region55: #{_lambda_.6} parent=5 // pred_region
      %s431 = ssub.s32 %s13, 2
      // Predicated region
      $region57: #{_lambda_.6} parent=55 // pred_check
        %p432 = pneg %p199
      $region58: #{_lambda_.6} parent=55 // pred_check_branch
        %434 = sbr.rel (%p432) target = $region60
      $region59: #{_lambda_.6} parent=55 // pred_region
        %p435 = scmp.lt.s32.totalorder %s19, 1
        %s436 = scalar_select %p435, %s19, 1
        %s437 = smul.addr %s436, 2
        %s438 = smul.addr %s437, 8
        %s439 = scalar_lea.vmem %s7, %s438
      $region60: #{_lambda_.6} parent=55 // pred_fallthru
        _
    $region56: #{_lambda_.6} parent=5 // pred_fallthru
      _
  $region6: #{_lambda_.6} parent=0 // loop_footer
    %s17 = sadd.s32 1, %s13
  $region7: #{_lambda_.6} parent=0 // loop_footer_branch
    %12 = sbr.rel target = $region3
  $region8: #{_lambda_.6} parent=0 // loop_exit
    _

// kernel: _lambda_.5
$region0: #{_lambda_.5}
  #allocation0 [shape = 'u32[]', space=smem, size = 0x4, offset = 0x4, fixed_abs, tag = 'smem constant byte address 0x4 - core index']
  #allocation1 [shape = 'u32[72,128]{1,0:T(1,128)}', space=vmem, size = 0x9000, scoped, tag = 'internal scratch']
  %s0 = inlined_call_operand.vmem [shape: bf16[256,35], index: 0, kind: input, shape index: {}]
  %s1 = inlined_call_operand.vmem [shape: bf16[35,32], index: 1, kind: input, shape index: {}]
  %s2 = inlined_call_operand.vmem [shape: f32[1,32], index: 2, kind: input, shape index: {}]
  %s3 = inlined_call_operand.vmem [shape: bf16[32,64], index: 3, kind: input, shape index: {}]
  %s4 = inlined_call_operand.vmem [shape: f32[1,64], index: 4, kind: input, shape index: {}]
  %s5 = inlined_call_operand.vmem [shape: bf16[64,32], index: 5, kind: input, shape index: {}]
  %s6 = inlined_call_operand.vmem [shape: f32[1,32], index: 6, kind: input, shape index: {}]
  %s7 = inlined_call_operand.vmem [shape: f32[32,32], index: 7, kind: output, shape index: {}]
  %s8 = sld [smem:[#allocation0]]
  $region38: #{_lambda_.5} parent=0
    _
  %s10 = ssub.s32 1, %s8
  %s11 = scalar_select 0, %s10, %s8
  // Predicated region
  $region2: #{_lambda_.5} parent=0 // pred_check
    _
  $region3: #{_lambda_.5} parent=0 // pred_check_branch
    %13 = sbr.rel (0) target = $region5
  $region4: #{_lambda_.5} parent=0 // pred_region
    _
  $region5: #{_lambda_.5} parent=0 // pred_fallthru
    _
  // Predicated region
  $region6: #{_lambda_.5} parent=0 // pred_check
    _
  $region7: #{_lambda_.5} parent=0 // pred_check_branch
    %15 = sbr.rel (0) target = $region9
  $region8: #{_lambda_.5} parent=0 // pred_region
    _
  $region9: #{_lambda_.5} parent=0 // pred_fallthru
    _
  // Predicated region
  $region10: #{_lambda_.5} parent=0 // pred_check
    _
  $region11: #{_lambda_.5} parent=0 // pred_check_branch
    %17 = sbr.rel (0) target = $region13
  $region12: #{_lambda_.5} parent=0 // pred_region
    _
  $region13: #{_lambda_.5} parent=0 // pred_fallthru
    _
  // Predicated region
  $region14: #{_lambda_.5} parent=0 // pred_check
    _
  $region15: #{_lambda_.5} parent=0 // pred_check_branch
    %19 = sbr.rel (0) target = $region17
  $region16: #{_lambda_.5} parent=0 // pred_region
    _
  $region17: #{_lambda_.5} parent=0 // pred_fallthru
    _
  // Predicated region
  $region18: #{_lambda_.5} parent=0 // pred_check
    _
  $region19: #{_lambda_.5} parent=0 // pred_check_branch
    %21 = sbr.rel (0) target = $region21
  $region20: #{_lambda_.5} parent=0 // pred_region
    _
  $region21: #{_lambda_.5} parent=0 // pred_fallthru
    _
  // Predicated region
  $region22: #{_lambda_.5} parent=0 // pred_check
    _
  $region23: #{_lambda_.5} parent=0 // pred_check_branch
    %23 = sbr.rel (0) target = $region25
  $region24: #{_lambda_.5} parent=0 // pred_region
    _
  $region25: #{_lambda_.5} parent=0 // pred_fallthru
    _
  // Predicated region
  $region26: #{_lambda_.5} parent=0 // pred_check
    _
  $region27: #{_lambda_.5} parent=0 // pred_check_branch
    %25 = sbr.rel (0) target = $region29
  $region28: #{_lambda_.5} parent=0 // pred_region
    _
  $region29: #{_lambda_.5} parent=0 // pred_fallthru
    _
  %v27 = vld [vmem:[%s0] sm:$0xf]
  %v28 = vld [vmem:[%s0 + $0x4] sm:$0xf]
  %v29 = vld [vmem:[%s0 + $0x8] sm:$0xf]
  %v30 = vld [vmem:[%s0 + $0xc] sm:$0xf]
  %v31 = vld [vmem:[%s0 + $0x10] sm:$0xf]
  %v32 = vld [vmem:[%s0 + $0x14] sm:$0xf]
  %v33 = vld [vmem:[%s0 + $0x18] sm:$0xf]
  %v34 = vld [vmem:[%s0 + $0x1c] sm:$0xf]
  %v35 = vld [vmem:[%s0 + $0x20] sm:$0xf]
  %v36 = vld [vmem:[%s0 + $0x24] sm:$0xf]
  %v37 = vld [vmem:[%s0 + $0x28] sm:$0xf]
  %v38 = vld [vmem:[%s0 + $0x2c] sm:$0xf]
  %v39 = vld [vmem:[%s0 + $0x30] sm:$0xf]
  %v40 = vld [vmem:[%s0 + $0x34] sm:$0xf]
  %v41 = vld [vmem:[%s0 + $0x38] sm:$0xf]
  %v42 = vld [vmem:[%s0 + $0x3c] sm:$0xf]
  %v43 = vld [vmem:[%s0 + $0x40] sm:$0xf]
  %v44 = vld [vmem:[%s0 + $0x44] sm:$0xf]
  %v45 = vld [vmem:[%s0 + $0x48] sm:$0xf]
  %v46 = vld [vmem:[%s0 + $0x4c] sm:$0xf]
  %v47 = vld [vmem:[%s0 + $0x50] sm:$0xf]
  %v48 = vld [vmem:[%s0 + $0x54] sm:$0xf]
  %v49 = vld [vmem:[%s0 + $0x58] sm:$0xf]
  %v50 = vld [vmem:[%s0 + $0x5c] sm:$0xf]
  %v51 = vld [vmem:[%s0 + $0x60] sm:$0xf]
  %v52 = vld [vmem:[%s0 + $0x64] sm:$0xf]
  %v53 = vld [vmem:[%s0 + $0x68] sm:$0xf]
  %v54 = vld [vmem:[%s0 + $0x6c] sm:$0xf]
  %v55 = vld [vmem:[%s0 + $0x70] sm:$0xf]
  %v56 = vld [vmem:[%s0 + $0x74] sm:$0xf]
  %v57 = vld [vmem:[%s0 + $0x78] sm:$0xf]
  %v58 = vld [vmem:[%s0 + $0x7c] sm:$0xf]
  %v59 = vld [vmem:[%s1] sm:$0xf]
  %v60 = vld [vmem:[%s1 + $0x4] sm:$0xf]
  %v61 = vld [vmem:[%s1 + $0x8] sm:$0xf]
  %v62 = vld [vmem:[%s1 + $0xc] sm:$0xf]
  %v63 = vld [vmem:[%s1 + $0x10] sm:$0x3]
  %v64 = vld [vmem:[%s2] sm:$0x1]
  %v66 = vperm.slane %v64, 0
  %v100 = vunpack.c.l.b16 %v27
  %v101 = vunpack.c.l.b16 %v28
  %v102 = vunpack.c.l.b16 %v29
  %v103 = vunpack.c.l.b16 %v30
  %v104 = vunpack.c.l.b16 %v31
  %v105 = vunpack.c.l.b16 %v32
  %v106 = vunpack.c.l.b16 %v33
  %v107 = vunpack.c.l.b16 %v34
  %v108 = vunpack.c.l.b16 %v35
  %v109 = vunpack.c.l.b16 %v36
  %v110 = vunpack.c.l.b16 %v37
  %v111 = vunpack.c.l.b16 %v38
  %v112 = vunpack.c.l.b16 %v39
  %v113 = vunpack.c.l.b16 %v40
  %v114 = vunpack.c.l.b16 %v41
  %v115 = vunpack.c.l.b16 %v42
  %v116 = vunpack.c.l.b16 %v43
  %v117 = vunpack.c.l.b16 %v44
  %v118 = vunpack.c.l.b16 %v45
  %v119 = vunpack.c.l.b16 %v46
  %v120 = vunpack.c.l.b16 %v47
  %v121 = vunpack.c.l.b16 %v48
  %v122 = vunpack.c.l.b16 %v49
  %v123 = vunpack.c.l.b16 %v50
  %v124 = vunpack.c.l.b16 %v51
  %v125 = vunpack.c.l.b16 %v52
  %v126 = vunpack.c.l.b16 %v53
  %v127 = vunpack.c.l.b16 %v54
  %v128 = vunpack.c.l.b16 %v55
  %v129 = vunpack.c.l.b16 %v56
  %v130 = vunpack.c.l.b16 %v57
  %v131 = vunpack.c.l.b16 %v58
  %v132 = vpack.c.b16 %v101, %v100
  %v133 = vpack.c.b16 %v103, %v102
  %v134 = vpack.c.b16 %v105, %v104
  %v135 = vpack.c.b16 %v107, %v106
  %v136 = vpack.c.b16 %v109, %v108
  %v137 = vpack.c.b16 %v111, %v110
  %v138 = vpack.c.b16 %v113, %v112
  %v139 = vpack.c.b16 %v115, %v114
  %v140 = vpack.c.b16 %v117, %v116
  %v141 = vpack.c.b16 %v119, %v118
  %v142 = vpack.c.b16 %v121, %v120
  %v143 = vpack.c.b16 %v123, %v122
  %v144 = vpack.c.b16 %v125, %v124
  %v145 = vpack.c.b16 %v127, %v126
  %v146 = vpack.c.b16 %v129, %v128
  %v147 = vpack.c.b16 %v131, %v130
  %v153 = vunpack.c.l.b16 %v59
  %v154 = vunpack.c.l.b16 %v60
  %v155 = vunpack.c.l.b16 %v61
  %v156 = vunpack.c.l.b16 %v62
  %v157 = vunpack.c.l.b16 %v63
  %v158 = vpack.c.b16 %v154, %v153
  %v159 = vpack.c.b16 %v156, %v155
  %v160 = vpack.c.b16 %v157, %v157
  %vm163 = vcmask 285696
  %v165 = vsel %vm163, %v132, 0
  %v168 = vsel %vm163, %v133, 0
  %v171 = vsel %vm163, %v134, 0
  %v174 = vsel %vm163, %v135, 0
  %v177 = vsel %vm163, %v136, 0
  %v180 = vsel %vm163, %v137, 0
  %v183 = vsel %vm163, %v138, 0
  %v186 = vsel %vm163, %v139, 0
  %v189 = vsel %vm163, %v140, 0
  %v192 = vsel %vm163, %v141, 0
  %v195 = vsel %vm163, %v142, 0
  %v198 = vsel %vm163, %v143, 0
  %v201 = vsel %vm163, %v144, 0
  %v204 = vsel %vm163, %v145, 0
  %v207 = vsel %vm163, %v146, 0
  %v210 = vsel %vm163, %v147, 0
  %vm212 = vcmask 1040384
  %vm213 = vcmask 1041408
  %v214 = vsel %vm212, 4294967295, 65535
  %v215 = vsel %vm213, %v214, 0
  %v217 = vand.u32 %v160, %v215
  %219 = vmatpush.bf16.msra.mxu0 0
  %220 = vmatpush.bf16.msra.mxu0 0
  %221 = vmatpush.bf16.msra.mxu0 0
  %222 = vmatpush.bf16.msra.mxu0 0
  %223 = vmatpush.bf16.msra.mxu0 0
  %224 = vmatpush.bf16.msra.mxu0 %v217
  %225 = vmatpush.bf16.msra.mxu0 %v159
  %226 = vmatpush.bf16.msra.mxu0 %v158
  %227 = vmatmul.bf16.gmra.mxu0 %v165
  %v228 = vpop.f32.mrf.mxu0
  %v229 = vadd.f32 %v66, %v228
  %v230 = vpop.f32.mrf.mxu0
  %v231 = vadd.f32 %v66, %v230
  %232 = vmatmul.bf16.gmra.mxu0 %v168
  %v233 = vpop.f32.mrf.mxu0
  %v234 = vadd.f32 %v66, %v233
  %v235 = vpop.f32.mrf.mxu0
  %v236 = vadd.f32 %v66, %v235
  %237 = vmatmul.bf16.gmra.mxu0 %v171
  %v238 = vpop.f32.mrf.mxu0
  %v239 = vadd.f32 %v66, %v238
  %v240 = vpop.f32.mrf.mxu0
  %v241 = vadd.f32 %v66, %v240
  %242 = vmatmul.bf16.gmra.mxu0 %v174
  %v243 = vpop.f32.mrf.mxu0
  %v244 = vadd.f32 %v66, %v243
  %v245 = vpop.f32.mrf.mxu0
  %v246 = vadd.f32 %v66, %v245
  %247 = vmatmul.bf16.gmra.mxu0 %v177
  %v248 = vpop.f32.mrf.mxu0
  %v249 = vadd.f32 %v66, %v248
  %v250 = vpop.f32.mrf.mxu0
  %v251 = vadd.f32 %v66, %v250
  %252 = vmatmul.bf16.gmra.mxu0 %v180
  %v253 = vpop.f32.mrf.mxu0
  %v254 = vadd.f32 %v66, %v253
  %v255 = vpop.f32.mrf.mxu0
  %v256 = vadd.f32 %v66, %v255
  %257 = vmatmul.bf16.gmra.mxu0 %v183
  %v258 = vpop.f32.mrf.mxu0
  %v259 = vadd.f32 %v66, %v258
  %v260 = vpop.f32.mrf.mxu0
  %v261 = vadd.f32 %v66, %v260
  %262 = vmatmul.bf16.gmra.mxu0 %v186
  %v263 = vpop.f32.mrf.mxu0
  %v264 = vadd.f32 %v66, %v263
  %v265 = vpop.f32.mrf.mxu0
  %v266 = vadd.f32 %v66, %v265
  %267 = vmatmul.bf16.gmra.mxu0 %v189
  %v268 = vpop.f32.mrf.mxu0
  %v269 = vadd.f32 %v66, %v268
  %v270 = vpop.f32.mrf.mxu0
  %v271 = vadd.f32 %v66, %v270
  %272 = vmatmul.bf16.gmra.mxu0 %v192
  %v273 = vpop.f32.mrf.mxu0
  %v274 = vadd.f32 %v66, %v273
  %v275 = vpop.f32.mrf.mxu0
  %v276 = vadd.f32 %v66, %v275
  %277 = vmatmul.bf16.gmra.mxu0 %v195
  %v278 = vpop.f32.mrf.mxu0
  %v279 = vadd.f32 %v66, %v278
  %v280 = vpop.f32.mrf.mxu0
  %v281 = vadd.f32 %v66, %v280
  %282 = vmatmul.bf16.gmra.mxu0 %v198
  %v283 = vpop.f32.mrf.mxu0
  %v284 = vadd.f32 %v66, %v283
  %v285 = vpop.f32.mrf.mxu0
  %v286 = vadd.f32 %v66, %v285
  %287 = vmatmul.bf16.gmra.mxu0 %v201
  %v288 = vpop.f32.mrf.mxu0
  %v289 = vadd.f32 %v66, %v288
  %v290 = vpop.f32.mrf.mxu0
  %v291 = vadd.f32 %v66, %v290
  %292 = vmatmul.bf16.gmra.mxu0 %v204
  %v293 = vpop.f32.mrf.mxu0
  %v294 = vadd.f32 %v66, %v293
  %v295 = vpop.f32.mrf.mxu0
  %v296 = vadd.f32 %v66, %v295
  %297 = vmatmul.bf16.gmra.mxu0 %v207
  %v298 = vpop.f32.mrf.mxu0
  %v299 = vadd.f32 %v66, %v298
  %v300 = vpop.f32.mrf.mxu0
  %v301 = vadd.f32 %v66, %v300
  %302 = vmatmul.bf16.gmra.mxu0 %v210
  %v303 = vpop.f32.mrf.mxu0
  %v304 = vadd.f32 %v66, %v303
  %v305 = vpop.f32.mrf.mxu0
  %v306 = vadd.f32 %v66, %v305
  %307 = vdwg.mxu0
  %v308 = vmax.f32 %v229, 0.0
  %v309 = vmax.f32 %v231, 0.0
  %v310 = vmax.f32 %v234, 0.0
  %v311 = vmax.f32 %v236, 0.0
  %v312 = vmax.f32 %v239, 0.0
  %v313 = vmax.f32 %v241, 0.0
  %v314 = vmax.f32 %v244, 0.0
  %v315 = vmax.f32 %v246, 0.0
  %v316 = vmax.f32 %v249, 0.0
  %v317 = vmax.f32 %v251, 0.0
  %v318 = vmax.f32 %v254, 0.0
  %v319 = vmax.f32 %v256, 0.0
  %v320 = vmax.f32 %v259, 0.0
  %v321 = vmax.f32 %v261, 0.0
  %v322 = vmax.f32 %v264, 0.0
  %v323 = vmax.f32 %v266, 0.0
  %v324 = vmax.f32 %v269, 0.0
  %v325 = vmax.f32 %v271, 0.0
  %v326 = vmax.f32 %v274, 0.0
  %v327 = vmax.f32 %v276, 0.0
  %v328 = vmax.f32 %v279, 0.0
  %v329 = vmax.f32 %v281, 0.0
  %v330 = vmax.f32 %v284, 0.0
  %v331 = vmax.f32 %v286, 0.0
  %v332 = vmax.f32 %v289, 0.0
  %v333 = vmax.f32 %v291, 0.0
  %v334 = vmax.f32 %v294, 0.0
  %v335 = vmax.f32 %v296, 0.0
  %v336 = vmax.f32 %v299, 0.0
  %v337 = vmax.f32 %v301, 0.0
  %v338 = vmax.f32 %v304, 0.0
  %v339 = vmax.f32 %v306, 0.0
  %v340 = vpack.c.bf16 %v309, %v308
  %v341 = vpack.c.bf16 %v311, %v310
  %v342 = vpack.c.bf16 %v313, %v312
  %v343 = vpack.c.bf16 %v315, %v314
  %v344 = vpack.c.bf16 %v317, %v316
  %v345 = vpack.c.bf16 %v319, %v318
  %v346 = vpack.c.bf16 %v321, %v320
  %v347 = vpack.c.bf16 %v323, %v322
  %v348 = vpack.c.bf16 %v325, %v324
  %v349 = vpack.c.bf16 %v327, %v326
  %v350 = vpack.c.bf16 %v329, %v328
  %v351 = vpack.c.bf16 %v331, %v330
  %v352 = vpack.c.bf16 %v333, %v332
  %v353 = vpack.c.bf16 %v335, %v334
  %v354 = vpack.c.bf16 %v337, %v336
  %v355 = vpack.c.bf16 %v339, %v338
  %v356 = vld [vmem:[%s3] sm:$0xf]
  %v357 = vld [vmem:[%s3 + $0x4] sm:$0xf]
  %v358 = vld [vmem:[%s3 + $0x8] sm:$0xf]
  %v359 = vld [vmem:[%s3 + $0xc] sm:$0xf]
  %v360 = vld [vmem:[%s4] sm:$0x1]
  %v362 = vperm.slane %v360, 0
  %v368 = vunpack.c.l.b16 %v356
  %v369 = vunpack.c.l.b16 %v357
  %v370 = vunpack.c.l.b16 %v358
  %v371 = vunpack.c.l.b16 %v359
  %v372 = vpack.c.b16 %v369, %v368
  %v373 = vpack.c.b16 %v371, %v370
  %vm376 = vcmask 261120
  %v378 = vsel %vm376, %v340, 0
  %v381 = vsel %vm376, %v341, 0
  %v384 = vsel %vm376, %v342, 0
  %v387 = vsel %vm376, %v343, 0
  %v390 = vsel %vm376, %v344, 0
  %v393 = vsel %vm376, %v345, 0
  %v396 = vsel %vm376, %v346, 0
  %v399 = vsel %vm376, %v347, 0
  %v402 = vsel %vm376, %v348, 0
  %v405 = vsel %vm376, %v349, 0
  %v408 = vsel %vm376, %v350, 0
  %v411 = vsel %vm376, %v351, 0
  %v414 = vsel %vm376, %v352, 0
  %v417 = vsel %vm376, %v353, 0
  %v420 = vsel %vm376, %v354, 0
  %v423 = vsel %vm376, %v355, 0
  %425 = vmatpush.bf16.msra.mxu0 0
  %426 = vmatpush.bf16.msra.mxu0 0
  %427 = vmatpush.bf16.msra.mxu0 0
  %428 = vmatpush.bf16.msra.mxu0 0
  %429 = vmatpush.bf16.msra.mxu0 0
  %430 = vmatpush.bf16.msra.mxu0 0
  %431 = vmatpush.bf16.msra.mxu0 %v373
  %432 = vmatpush.bf16.msra.mxu0 %v372
  %433 = vmatmul.bf16.gmra.mxu0 %v378
  %v434 = vpop.f32.mrf.mxu0
  %v435 = vadd.f32 %v362, %v434
  %v436 = vpop.f32.mrf.mxu0
  %v437 = vadd.f32 %v362, %v436
  %438 = vmatmul.bf16.gmra.mxu0 %v381
  %v439 = vpop.f32.mrf.mxu0
  %v440 = vadd.f32 %v362, %v439
  %v441 = vpop.f32.mrf.mxu0
  %v442 = vadd.f32 %v362, %v441
  %443 = vmatmul.bf16.gmra.mxu0 %v384
  %v444 = vpop.f32.mrf.mxu0
  %v445 = vadd.f32 %v362, %v444
  %v446 = vpop.f32.mrf.mxu0
  %v447 = vadd.f32 %v362, %v446
  %448 = vmatmul.bf16.gmra.mxu0 %v387
  %v449 = vpop.f32.mrf.mxu0
  %v450 = vadd.f32 %v362, %v449
  %v451 = vpop.f32.mrf.mxu0
  %v452 = vadd.f32 %v362, %v451
  %453 = vmatmul.bf16.gmra.mxu0 %v390
  %v454 = vpop.f32.mrf.mxu0
  %v455 = vadd.f32 %v362, %v454
  %v456 = vpop.f32.mrf.mxu0
  %v457 = vadd.f32 %v362, %v456
  %458 = vmatmul.bf16.gmra.mxu0 %v393
  %v459 = vpop.f32.mrf.mxu0
  %v460 = vadd.f32 %v362, %v459
  %v461 = vpop.f32.mrf.mxu0
  %v462 = vadd.f32 %v362, %v461
  %463 = vmatmul.bf16.gmra.mxu0 %v396
  %v464 = vpop.f32.mrf.mxu0
  %v465 = vadd.f32 %v362, %v464
  %v466 = vpop.f32.mrf.mxu0
  %v467 = vadd.f32 %v362, %v466
  %468 = vmatmul.bf16.gmra.mxu0 %v399
  %v469 = vpop.f32.mrf.mxu0
  %v470 = vadd.f32 %v362, %v469
  %v471 = vpop.f32.mrf.mxu0
  %v472 = vadd.f32 %v362, %v471
  %473 = vmatmul.bf16.gmra.mxu0 %v402
  %v474 = vpop.f32.mrf.mxu0
  %v475 = vadd.f32 %v362, %v474
  %v476 = vpop.f32.mrf.mxu0
  %v477 = vadd.f32 %v362, %v476
  %478 = vmatmul.bf16.gmra.mxu0 %v405
  %v479 = vpop.f32.mrf.mxu0
  %v480 = vadd.f32 %v362, %v479
  %v481 = vpop.f32.mrf.mxu0
  %v482 = vadd.f32 %v362, %v481
  %483 = vmatmul.bf16.gmra.mxu0 %v408
  %v484 = vpop.f32.mrf.mxu0
  %v485 = vadd.f32 %v362, %v484
  %v486 = vpop.f32.mrf.mxu0
  %v487 = vadd.f32 %v362, %v486
  %488 = vmatmul.bf16.gmra.mxu0 %v411
  %v489 = vpop.f32.mrf.mxu0
  %v490 = vadd.f32 %v362, %v489
  %v491 = vpop.f32.mrf.mxu0
  %v492 = vadd.f32 %v362, %v491
  %493 = vmatmul.bf16.gmra.mxu0 %v414
  %v494 = vpop.f32.mrf.mxu0
  %v495 = vadd.f32 %v362, %v494
  %v496 = vpop.f32.mrf.mxu0
  %v497 = vadd.f32 %v362, %v496
  %498 = vmatmul.bf16.gmra.mxu0 %v417
  %v499 = vpop.f32.mrf.mxu0
  %v500 = vadd.f32 %v362, %v499
  %v501 = vpop.f32.mrf.mxu0
  %v502 = vadd.f32 %v362, %v501
  %503 = vmatmul.bf16.gmra.mxu0 %v420
  %v504 = vpop.f32.mrf.mxu0
  %v505 = vadd.f32 %v362, %v504
  %v506 = vpop.f32.mrf.mxu0
  %v507 = vadd.f32 %v362, %v506
  %508 = vmatmul.bf16.gmra.mxu0 %v423
  %v509 = vpop.f32.mrf.mxu0
  %v510 = vadd.f32 %v362, %v509
  %v511 = vpop.f32.mrf.mxu0
  %v512 = vadd.f32 %v362, %v511
  %513 = vdwg.mxu0
  %v514 = vmax.f32 %v435, 0.0
  %v515 = vmax.f32 %v437, 0.0
  %v516 = vmax.f32 %v440, 0.0
  %v517 = vmax.f32 %v442, 0.0
  %v518 = vmax.f32 %v445, 0.0
  %v519 = vmax.f32 %v447, 0.0
  %v520 = vmax.f32 %v450, 0.0
  %v521 = vmax.f32 %v452, 0.0
  %v522 = vmax.f32 %v455, 0.0
  %v523 = vmax.f32 %v457, 0.0
  %v524 = vmax.f32 %v460, 0.0
  %v525 = vmax.f32 %v462, 0.0
  %v526 = vmax.f32 %v465, 0.0
  %v527 = vmax.f32 %v467, 0.0
  %v528 = vmax.f32 %v470, 0.0
  %v529 = vmax.f32 %v472, 0.0
  %v530 = vmax.f32 %v475, 0.0
  %v531 = vmax.f32 %v477, 0.0
  %v532 = vmax.f32 %v480, 0.0
  %v533 = vmax.f32 %v482, 0.0
  %v534 = vmax.f32 %v485, 0.0
  %v535 = vmax.f32 %v487, 0.0
  %v536 = vmax.f32 %v490, 0.0
  %v537 = vmax.f32 %v492, 0.0
  %v538 = vmax.f32 %v495, 0.0
  %v539 = vmax.f32 %v497, 0.0
  %v540 = vmax.f32 %v500, 0.0
  %v541 = vmax.f32 %v502, 0.0
  %v542 = vmax.f32 %v505, 0.0
  %v543 = vmax.f32 %v507, 0.0
  %v544 = vmax.f32 %v510, 0.0
  %v545 = vmax.f32 %v512, 0.0
  %v546 = vpack.c.bf16 %v515, %v514
  %v547 = vpack.c.bf16 %v517, %v516
  %v548 = vpack.c.bf16 %v519, %v518
  %v549 = vpack.c.bf16 %v521, %v520
  %v550 = vpack.c.bf16 %v523, %v522
  %v551 = vpack.c.bf16 %v525, %v524
  %v552 = vpack.c.bf16 %v527, %v526
  %v553 = vpack.c.bf16 %v529, %v528
  %v554 = vpack.c.bf16 %v531, %v530
  %v555 = vpack.c.bf16 %v533, %v532
  %v556 = vpack.c.bf16 %v535, %v534
  %v557 = vpack.c.bf16 %v537, %v536
  %v558 = vpack.c.bf16 %v539, %v538
  %v559 = vpack.c.bf16 %v541, %v540
  %v560 = vpack.c.bf16 %v543, %v542
  %v561 = vpack.c.bf16 %v545, %v544
  %v562 = vld [vmem:[%s5] sm:$0xf]
  %v563 = vld [vmem:[%s5 + $0x4] sm:$0xf]
  %v564 = vld [vmem:[%s5 + $0x8] sm:$0xf]
  %v565 = vld [vmem:[%s5 + $0xc] sm:$0xf]
  %v566 = vld [vmem:[%s5 + $0x10] sm:$0xf]
  %v567 = vld [vmem:[%s5 + $0x14] sm:$0xf]
  %v568 = vld [vmem:[%s5 + $0x18] sm:$0xf]
  %v569 = vld [vmem:[%s5 + $0x1c] sm:$0xf]
  %v570 = vld [vmem:[%s6] sm:$0x1]
  %v572 = vperm.slane %v570, 0
  %v582 = vunpack.c.l.b16 %v562
  %v583 = vunpack.c.l.b16 %v563
  %v584 = vunpack.c.l.b16 %v564
  %v585 = vunpack.c.l.b16 %v565
  %v586 = vunpack.c.l.b16 %v566
  %v587 = vunpack.c.l.b16 %v567
  %v588 = vunpack.c.l.b16 %v568
  %v589 = vunpack.c.l.b16 %v569
  %v590 = vpack.c.b16 %v583, %v582
  %v591 = vpack.c.b16 %v585, %v584
  %v592 = vpack.c.b16 %v587, %v586
  %v593 = vpack.c.b16 %v589, %v588
  %vm598 = vcmask 523264
  %v600 = vsel %vm598, %v546, 0
  %v603 = vsel %vm598, %v547, 0
  %v606 = vsel %vm598, %v548, 0
  %v609 = vsel %vm598, %v549, 0
  %v612 = vsel %vm598, %v550, 0
  %v615 = vsel %vm598, %v551, 0
  %v618 = vsel %vm598, %v552, 0
  %v621 = vsel %vm598, %v553, 0
  %v624 = vsel %vm598, %v554, 0
  %v627 = vsel %vm598, %v555, 0
  %v630 = vsel %vm598, %v556, 0
  %v633 = vsel %vm598, %v557, 0
  %v636 = vsel %vm598, %v558, 0
  %v639 = vsel %vm598, %v559, 0
  %v642 = vsel %vm598, %v560, 0
  %v645 = vsel %vm598, %v561, 0
  %647 = vmatpush.bf16.msra.mxu0 0
  %648 = vmatpush.bf16.msra.mxu0 0
  %649 = vmatpush.bf16.msra.mxu0 0
  %650 = vmatpush.bf16.msra.mxu0 0
  %651 = vmatpush.bf16.msra.mxu0 %v593
  %652 = vmatpush.bf16.msra.mxu0 %v592
  %653 = vmatpush.bf16.msra.mxu0 %v591
  %654 = vmatpush.bf16.msra.mxu0 %v590
  %655 = vmatmul.bf16.gmra.mxu0 %v600
  %v656 = vpop.f32.mrf.mxu0
  %v657 = vadd.f32 %v572, %v656
  %v658 = vpop.f32.mrf.mxu0
  %v659 = vadd.f32 %v572, %v658
  %660 = vmatmul.bf16.gmra.mxu0 %v603
  %v661 = vpop.f32.mrf.mxu0
  %v662 = vadd.f32 %v572, %v661
  %v663 = vpop.f32.mrf.mxu0
  %v664 = vadd.f32 %v572, %v663
  %665 = vmatmul.bf16.gmra.mxu0 %v606
  %v666 = vpop.f32.mrf.mxu0
  %v667 = vadd.f32 %v572, %v666
  %v668 = vpop.f32.mrf.mxu0
  %v669 = vadd.f32 %v572, %v668
  %670 = vmatmul.bf16.gmra.mxu0 %v609
  %v671 = vpop.f32.mrf.mxu0
  %v672 = vadd.f32 %v572, %v671
  %v673 = vpop.f32.mrf.mxu0
  %v674 = vadd.f32 %v572, %v673
  %675 = vmatmul.bf16.gmra.mxu0 %v612
  %v676 = vpop.f32.mrf.mxu0
  %v677 = vadd.f32 %v572, %v676
  %v678 = vpop.f32.mrf.mxu0
  %v679 = vadd.f32 %v572, %v678
  %680 = vmatmul.bf16.gmra.mxu0 %v615
  %v681 = vpop.f32.mrf.mxu0
  %v682 = vadd.f32 %v572, %v681
  %v683 = vpop.f32.mrf.mxu0
  %v684 = vadd.f32 %v572, %v683
  %685 = vmatmul.bf16.gmra.mxu0 %v618
  %v686 = vpop.f32.mrf.mxu0
  %v687 = vadd.f32 %v572, %v686
  %v688 = vpop.f32.mrf.mxu0
  %v689 = vadd.f32 %v572, %v688
  %690 = vmatmul.bf16.gmra.mxu0 %v621
  %v691 = vpop.f32.mrf.mxu0
  %v692 = vadd.f32 %v572, %v691
  %v693 = vpop.f32.mrf.mxu0
  %v694 = vadd.f32 %v572, %v693
  %695 = vmatmul.bf16.gmra.mxu0 %v624
  %v696 = vpop.f32.mrf.mxu0
  %v697 = vadd.f32 %v572, %v696
  %v698 = vpop.f32.mrf.mxu0
  %v699 = vadd.f32 %v572, %v698
  %700 = vmatmul.bf16.gmra.mxu0 %v627
  %v701 = vpop.f32.mrf.mxu0
  %v702 = vadd.f32 %v572, %v701
  %v703 = vpop.f32.mrf.mxu0
  %v704 = vadd.f32 %v572, %v703
  %705 = vmatmul.bf16.gmra.mxu0 %v630
  %v706 = vpop.f32.mrf.mxu0
  %v707 = vadd.f32 %v572, %v706
  %v708 = vpop.f32.mrf.mxu0
  %v709 = vadd.f32 %v572, %v708
  %710 = vmatmul.bf16.gmra.mxu0 %v633
  %v711 = vpop.f32.mrf.mxu0
  %v712 = vadd.f32 %v572, %v711
  %v713 = vpop.f32.mrf.mxu0
  %v714 = vadd.f32 %v572, %v713
  %715 = vmatmul.bf16.gmra.mxu0 %v636
  %v716 = vpop.f32.mrf.mxu0
  %v717 = vadd.f32 %v572, %v716
  %v718 = vpop.f32.mrf.mxu0
  %v719 = vadd.f32 %v572, %v718
  %720 = vmatmul.bf16.gmra.mxu0 %v639
  %v721 = vpop.f32.mrf.mxu0
  %v722 = vadd.f32 %v572, %v721
  %v723 = vpop.f32.mrf.mxu0
  %v724 = vadd.f32 %v572, %v723
  %725 = vmatmul.bf16.gmra.mxu0 %v642
  %v726 = vpop.f32.mrf.mxu0
  %v727 = vadd.f32 %v572, %v726
  %v728 = vpop.f32.mrf.mxu0
  %v729 = vadd.f32 %v572, %v728
  %730 = vmatmul.bf16.gmra.mxu0 %v645
  %v731 = vpop.f32.mrf.mxu0
  %v732 = vadd.f32 %v572, %v731
  %v733 = vpop.f32.mrf.mxu0
  %v734 = vadd.f32 %v572, %v733
  %735 = vdwg.mxu0
  %v736 = vmax.f32 %v657, 0.0
  %v737 = vmax.f32 %v659, 0.0
  %v738 = vmax.f32 %v662, 0.0
  %v739 = vmax.f32 %v664, 0.0
  %v740 = vmax.f32 %v667, 0.0
  %v741 = vmax.f32 %v669, 0.0
  %v742 = vmax.f32 %v672, 0.0
  %v743 = vmax.f32 %v674, 0.0
  %v744 = vmax.f32 %v677, 0.0
  %v745 = vmax.f32 %v679, 0.0
  %v746 = vmax.f32 %v682, 0.0
  %v747 = vmax.f32 %v684, 0.0
  %v748 = vmax.f32 %v687, 0.0
  %v749 = vmax.f32 %v689, 0.0
  %v750 = vmax.f32 %v692, 0.0
  %v751 = vmax.f32 %v694, 0.0
  %v752 = vmax.f32 %v697, 0.0
  %v753 = vmax.f32 %v699, 0.0
  %v754 = vmax.f32 %v702, 0.0
  %v755 = vmax.f32 %v704, 0.0
  %v756 = vmax.f32 %v707, 0.0
  %v757 = vmax.f32 %v709, 0.0
  %v758 = vmax.f32 %v712, 0.0
  %v759 = vmax.f32 %v714, 0.0
  %v760 = vmax.f32 %v717, 0.0
  %v761 = vmax.f32 %v719, 0.0
  %v762 = vmax.f32 %v722, 0.0
  %v763 = vmax.f32 %v724, 0.0
  %v764 = vmax.f32 %v727, 0.0
  %v765 = vmax.f32 %v729, 0.0
  %v766 = vmax.f32 %v732, 0.0
  %v767 = vmax.f32 %v734, 0.0
  %v768 = vsel %vm376, %v736, -inf
  %v769 = vrot.slane %v768, 4
  %v770 = vmax.f32 %v768, %v769
  %v771 = vrot.slane %v770, 2
  %v772 = vmax.f32 %v770, %v771
  %v773 = vrot.slane %v772, 1
  %v774 = vmax.f32 %v772, %v773
  %v775 = vsel %vm376, %v737, -inf
  %v776 = vrot.slane %v775, 4
  %v777 = vmax.f32 %v775, %v776
  %v778 = vrot.slane %v777, 2
  %v779 = vmax.f32 %v777, %v778
  %v780 = vrot.slane %v779, 1
  %v781 = vmax.f32 %v779, %v780
  %v782 = vsel %vm376, %v738, -inf
  %v783 = vrot.slane %v782, 4
  %v784 = vmax.f32 %v782, %v783
  %v785 = vrot.slane %v784, 2
  %v786 = vmax.f32 %v784, %v785
  %v787 = vrot.slane %v786, 1
  %v788 = vmax.f32 %v786, %v787
  %v789 = vsel %vm376, %v739, -inf
  %v790 = vrot.slane %v789, 4
  %v791 = vmax.f32 %v789, %v790
  %v792 = vrot.slane %v791, 2
  %v793 = vmax.f32 %v791, %v792
  %v794 = vrot.slane %v793, 1
  %v795 = vmax.f32 %v793, %v794
  %v796 = vsel %vm376, %v740, -inf
  %v797 = vrot.slane %v796, 4
  %v798 = vmax.f32 %v796, %v797
  %v799 = vrot.slane %v798, 2
  %v800 = vmax.f32 %v798, %v799
  %v801 = vrot.slane %v800, 1
  %v802 = vmax.f32 %v800, %v801
  %v803 = vsel %vm376, %v741, -inf
  %v804 = vrot.slane %v803, 4
  %v805 = vmax.f32 %v803, %v804
  %v806 = vrot.slane %v805, 2
  %v807 = vmax.f32 %v805, %v806
  %v808 = vrot.slane %v807, 1
  %v809 = vmax.f32 %v807, %v808
  %v810 = vsel %vm376, %v742, -inf
  %v811 = vrot.slane %v810, 4
  %v812 = vmax.f32 %v810, %v811
  %v813 = vrot.slane %v812, 2
  %v814 = vmax.f32 %v812, %v813
  %v815 = vrot.slane %v814, 1
  %v816 = vmax.f32 %v814, %v815
  %v817 = vsel %vm376, %v743, -inf
  %v818 = vrot.slane %v817, 4
  %v819 = vmax.f32 %v817, %v818
  %v820 = vrot.slane %v819, 2
  %v821 = vmax.f32 %v819, %v820
  %v822 = vrot.slane %v821, 1
  %v823 = vmax.f32 %v821, %v822
  %v824 = vsel %vm376, %v744, -inf
  %v825 = vrot.slane %v824, 4
  %v826 = vmax.f32 %v824, %v825
  %v827 = vrot.slane %v826, 2
  %v828 = vmax.f32 %v826, %v827
  %v829 = vrot.slane %v828, 1
  %v830 = vmax.f32 %v828, %v829
  %v831 = vsel %vm376, %v745, -inf
  %v832 = vrot.slane %v831, 4
  %v833 = vmax.f32 %v831, %v832
  %v834 = vrot.slane %v833, 2
  %v835 = vmax.f32 %v833, %v834
  %v836 = vrot.slane %v835, 1
  %v837 = vmax.f32 %v835, %v836
  %v838 = vsel %vm376, %v746, -inf
  %v839 = vrot.slane %v838, 4
  %v840 = vmax.f32 %v838, %v839
  %v841 = vrot.slane %v840, 2
  %v842 = vmax.f32 %v840, %v841
  %v843 = vrot.slane %v842, 1
  %v844 = vmax.f32 %v842, %v843
  %v845 = vsel %vm376, %v747, -inf
  %v846 = vrot.slane %v845, 4
  %v847 = vmax.f32 %v845, %v846
  %v848 = vrot.slane %v847, 2
  %v849 = vmax.f32 %v847, %v848
  %v850 = vrot.slane %v849, 1
  %v851 = vmax.f32 %v849, %v850
  %v852 = vsel %vm376, %v748, -inf
  %v853 = vrot.slane %v852, 4
  %v854 = vmax.f32 %v852, %v853
  %v855 = vrot.slane %v854, 2
  %v856 = vmax.f32 %v854, %v855
  %v857 = vrot.slane %v856, 1
  %v858 = vmax.f32 %v856, %v857
  %v859 = vsel %vm376, %v749, -inf
  %v860 = vrot.slane %v859, 4
  %v861 = vmax.f32 %v859, %v860
  %v862 = vrot.slane %v861, 2
  %v863 = vmax.f32 %v861, %v862
  %v864 = vrot.slane %v863, 1
  %v865 = vmax.f32 %v863, %v864
  %v866 = vsel %vm376, %v750, -inf
  %v867 = vrot.slane %v866, 4
  %v868 = vmax.f32 %v866, %v867
  %v869 = vrot.slane %v868, 2
  %v870 = vmax.f32 %v868, %v869
  %v871 = vrot.slane %v870, 1
  %v872 = vmax.f32 %v870, %v871
  %v873 = vsel %vm376, %v751, -inf
  %v874 = vrot.slane %v873, 4
  %v875 = vmax.f32 %v873, %v874
  %v876 = vrot.slane %v875, 2
  %v877 = vmax.f32 %v875, %v876
  %v878 = vrot.slane %v877, 1
  %v879 = vmax.f32 %v877, %v878
  %v880 = vsel %vm376, %v752, -inf
  %v881 = vrot.slane %v880, 4
  %v882 = vmax.f32 %v880, %v881
  %v883 = vrot.slane %v882, 2
  %v884 = vmax.f32 %v882, %v883
  %v885 = vrot.slane %v884, 1
  %v886 = vmax.f32 %v884, %v885
  %v887 = vsel %vm376, %v753, -inf
  %v888 = vrot.slane %v887, 4
  %v889 = vmax.f32 %v887, %v888
  %v890 = vrot.slane %v889, 2
  %v891 = vmax.f32 %v889, %v890
  %v892 = vrot.slane %v891, 1
  %v893 = vmax.f32 %v891, %v892
  %v894 = vsel %vm376, %v754, -inf
  %v895 = vrot.slane %v894, 4
  %v896 = vmax.f32 %v894, %v895
  %v897 = vrot.slane %v896, 2
  %v898 = vmax.f32 %v896, %v897
  %v899 = vrot.slane %v898, 1
  %v900 = vmax.f32 %v898, %v899
  %v901 = vsel %vm376, %v755, -inf
  %v902 = vrot.slane %v901, 4
  %v903 = vmax.f32 %v901, %v902
  %v904 = vrot.slane %v903, 2
  %v905 = vmax.f32 %v903, %v904
  %v906 = vrot.slane %v905, 1
  %v907 = vmax.f32 %v905, %v906
  %v908 = vsel %vm376, %v756, -inf
  %v909 = vrot.slane %v908, 4
  %v910 = vmax.f32 %v908, %v909
  %v911 = vrot.slane %v910, 2
  %v912 = vmax.f32 %v910, %v911
  %v913 = vrot.slane %v912, 1
  %v914 = vmax.f32 %v912, %v913
  %v915 = vsel %vm376, %v757, -inf
  %v916 = vrot.slane %v915, 4
  %v917 = vmax.f32 %v915, %v916
  %v918 = vrot.slane %v917, 2
  %v919 = vmax.f32 %v917, %v918
  %v920 = vrot.slane %v919, 1
  %v921 = vmax.f32 %v919, %v920
  %v922 = vsel %vm376, %v758, -inf
  %v923 = vrot.slane %v922, 4
  %v924 = vmax.f32 %v922, %v923
  %v925 = vrot.slane %v924, 2
  %v926 = vmax.f32 %v924, %v925
  %v927 = vrot.slane %v926, 1
  %v928 = vmax.f32 %v926, %v927
  %v929 = vsel %vm376, %v759, -inf
  %v930 = vrot.slane %v929, 4
  %v931 = vmax.f32 %v929, %v930
  %v932 = vrot.slane %v931, 2
  %v933 = vmax.f32 %v931, %v932
  %v934 = vrot.slane %v933, 1
  %v935 = vmax.f32 %v933, %v934
  %v936 = vsel %vm376, %v760, -inf
  %v937 = vrot.slane %v936, 4
  %v938 = vmax.f32 %v936, %v937
  %v939 = vrot.slane %v938, 2
  %v940 = vmax.f32 %v938, %v939
  %v941 = vrot.slane %v940, 1
  %v942 = vmax.f32 %v940, %v941
  %v943 = vsel %vm376, %v761, -inf
  %v944 = vrot.slane %v943, 4
  %v945 = vmax.f32 %v943, %v944
  %v946 = vrot.slane %v945, 2
  %v947 = vmax.f32 %v945, %v946
  %v948 = vrot.slane %v947, 1
  %v949 = vmax.f32 %v947, %v948
  %v950 = vsel %vm376, %v762, -inf
  %v951 = vrot.slane %v950, 4
  %v952 = vmax.f32 %v950, %v951
  %v953 = vrot.slane %v952, 2
  %v954 = vmax.f32 %v952, %v953
  %v955 = vrot.slane %v954, 1
  %v956 = vmax.f32 %v954, %v955
  %v957 = vsel %vm376, %v763, -inf
  %v958 = vrot.slane %v957, 4
  %v959 = vmax.f32 %v957, %v958
  %v960 = vrot.slane %v959, 2
  %v961 = vmax.f32 %v959, %v960
  %v962 = vrot.slane %v961, 1
  %v963 = vmax.f32 %v961, %v962
  %v964 = vsel %vm376, %v764, -inf
  %v965 = vrot.slane %v964, 4
  %v966 = vmax.f32 %v964, %v965
  %v967 = vrot.slane %v966, 2
  %v968 = vmax.f32 %v966, %v967
  %v969 = vrot.slane %v968, 1
  %v970 = vmax.f32 %v968, %v969
  %v971 = vsel %vm376, %v765, -inf
  %v972 = vrot.slane %v971, 4
  %v973 = vmax.f32 %v971, %v972
  %v974 = vrot.slane %v973, 2
  %v975 = vmax.f32 %v973, %v974
  %v976 = vrot.slane %v975, 1
  %v977 = vmax.f32 %v975, %v976
  %v978 = vsel %vm376, %v766, -inf
  %v979 = vrot.slane %v978, 4
  %v980 = vmax.f32 %v978, %v979
  %v981 = vrot.slane %v980, 2
  %v982 = vmax.f32 %v980, %v981
  %v983 = vrot.slane %v982, 1
  %v984 = vmax.f32 %v982, %v983
  %v985 = vsel %vm376, %v767, -inf
  %v986 = vrot.slane %v985, 4
  %v987 = vmax.f32 %v985, %v986
  %v988 = vrot.slane %v987, 2
  %v989 = vmax.f32 %v987, %v988
  %v990 = vrot.slane %v989, 1
  %v991 = vmax.f32 %v989, %v990
  %vm1024 = vcmask 1041409
  %v1025 = vsel %vm1024, %v781, %v774
  %vm1026 = vcmask 1042434
  %v1027 = vsel %vm1026, %v788, %v1025
  %vm1028 = vcmask 1043459
  %v1029 = vsel %vm1028, %v795, %v1027
  %vm1030 = vcmask 1044484
  %v1031 = vsel %vm1030, %v802, %v1029
  %vm1032 = vcmask 1045509
  %v1033 = vsel %vm1032, %v809, %v1031
  %vm1034 = vcmask 1046534
  %v1035 = vsel %vm1034, %v816, %v1033
  %vm1036 = vcmask 1047559
  %v1037 = vsel %vm1036, %v823, %v1035
  %v1038 = vsel %vm1024, %v837, %v830
  %v1039 = vsel %vm1026, %v844, %v1038
  %v1040 = vsel %vm1028, %v851, %v1039
  %v1041 = vsel %vm1030, %v858, %v1040
  %v1042 = vsel %vm1032, %v865, %v1041
  %v1043 = vsel %vm1034, %v872, %v1042
  %v1044 = vsel %vm1036, %v879, %v1043
  %v1045 = vsel %vm1024, %v893, %v886
  %v1046 = vsel %vm1026, %v900, %v1045
  %v1047 = vsel %vm1028, %v907, %v1046
  %v1048 = vsel %vm1030, %v914, %v1047
  %v1049 = vsel %vm1032, %v921, %v1048
  %v1050 = vsel %vm1034, %v928, %v1049
  %v1051 = vsel %vm1036, %v935, %v1050
  %v1052 = vsel %vm1024, %v949, %v942
  %v1053 = vsel %vm1026, %v956, %v1052
  %v1054 = vsel %vm1028, %v963, %v1053
  %v1055 = vsel %vm1030, %v970, %v1054
  %v1056 = vsel %vm1032, %v977, %v1055
  %v1057 = vsel %vm1034, %v984, %v1056
  %v1058 = vsel %vm1036, %v991, %v1057
  %1063 = vst.msk [vmem:[%s7] sm:$0xff] %vm376, %v1037
  %1064 = vst.msk [vmem:[%s7 + $0x8] sm:$0xff] %vm376, %v1044
  %1065 = vst.msk [vmem:[%s7 + $0x10] sm:$0xff] %vm376, %v1051
  %1066 = vst.msk [vmem:[%s7 + $0x18] sm:$0xff] %vm376, %v1058
  // Predicated region
  $region30: #{_lambda_.5} parent=0 // pred_check
    _
  $region31: #{_lambda_.5} parent=0 // pred_check_branch
    %1068 = sbr.rel (0) target = $region33
  $region32: #{_lambda_.5} parent=0 // pred_region
    _
  $region33: #{_lambda_.5} parent=0 // pred_fallthru
    _
  // Predicated region
  $region34: #{_lambda_.5} parent=0 // pred_check
    _
  $region35: #{_lambda_.5} parent=0 // pred_check_branch
    %1070 = sbr.rel (0) target = $region37
  $region36: #{_lambda_.5} parent=0 // pred_region
    _
  $region37: #{_lambda_.5} parent=0 // pred_fallthru
    _

// kernel: _lambda_.7
$region0: #{_lambda_.7}
  #allocation0 [shape = 'u32[]', space=smem, size = 0x4, offset = 0x4, fixed_abs, tag = 'smem constant byte address 0x4 - core index']
  #allocation1 [shape = 'u32[72,128]{1,0:T(1,128)}', space=vmem, size = 0x9000, scoped, tag = 'internal scratch']
  %s0 = inlined_call_operand.vmem [shape: bf16[128,35], index: 0, kind: input, shape index: {}]
  %s1 = inlined_call_operand.vmem [shape: bf16[35,32], index: 1, kind: input, shape index: {}]
  %s2 = inlined_call_operand.vmem [shape: f32[1,32], index: 2, kind: input, shape index: {}]
  %s3 = inlined_call_operand.vmem [shape: bf16[32,64], index: 3, kind: input, shape index: {}]
  %s4 = inlined_call_operand.vmem [shape: f32[1,64], index: 4, kind: input, shape index: {}]
  %s5 = inlined_call_operand.vmem [shape: bf16[64,32], index: 5, kind: input, shape index: {}]
  %s6 = inlined_call_operand.vmem [shape: f32[1,32], index: 6, kind: input, shape index: {}]
  %s7 = inlined_call_operand.vmem [shape: f32[16,32], index: 7, kind: output, shape index: {}]
  %s8 = sld [smem:[#allocation0]]
  $region38: #{_lambda_.7} parent=0
    _
  %s10 = ssub.s32 1, %s8
  %s11 = scalar_select 0, %s10, %s8
  // Predicated region
  $region2: #{_lambda_.7} parent=0 // pred_check
    _
  $region3: #{_lambda_.7} parent=0 // pred_check_branch
    %13 = sbr.rel (0) target = $region5
  $region4: #{_lambda_.7} parent=0 // pred_region
    _
  $region5: #{_lambda_.7} parent=0 // pred_fallthru
    _
  // Predicated region
  $region6: #{_lambda_.7} parent=0 // pred_check
    _
  $region7: #{_lambda_.7} parent=0 // pred_check_branch
    %15 = sbr.rel (0) target = $region9
  $region8: #{_lambda_.7} parent=0 // pred_region
    _
  $region9: #{_lambda_.7} parent=0 // pred_fallthru
    _
  // Predicated region
  $region10: #{_lambda_.7} parent=0 // pred_check
    _
  $region11: #{_lambda_.7} parent=0 // pred_check_branch
    %17 = sbr.rel (0) target = $region13
  $region12: #{_lambda_.7} parent=0 // pred_region
    _
  $region13: #{_lambda_.7} parent=0 // pred_fallthru
    _
  // Predicated region
  $region14: #{_lambda_.7} parent=0 // pred_check
    _
  $region15: #{_lambda_.7} parent=0 // pred_check_branch
    %19 = sbr.rel (0) target = $region17
  $region16: #{_lambda_.7} parent=0 // pred_region
    _
  $region17: #{_lambda_.7} parent=0 // pred_fallthru
    _
  // Predicated region
  $region18: #{_lambda_.7} parent=0 // pred_check
    _
  $region19: #{_lambda_.7} parent=0 // pred_check_branch
    %21 = sbr.rel (0) target = $region21
  $region20: #{_lambda_.7} parent=0 // pred_region
    _
  $region21: #{_lambda_.7} parent=0 // pred_fallthru
    _
  // Predicated region
  $region22: #{_lambda_.7} parent=0 // pred_check
    _
  $region23: #{_lambda_.7} parent=0 // pred_check_branch
    %23 = sbr.rel (0) target = $region25
  $region24: #{_lambda_.7} parent=0 // pred_region
    _
  $region25: #{_lambda_.7} parent=0 // pred_fallthru
    _
  // Predicated region
  $region26: #{_lambda_.7} parent=0 // pred_check
    _
  $region27: #{_lambda_.7} parent=0 // pred_check_branch
    %25 = sbr.rel (0) target = $region29
  $region28: #{_lambda_.7} parent=0 // pred_region
    _
  $region29: #{_lambda_.7} parent=0 // pred_fallthru
    _
  %v27 = vld [vmem:[%s0] sm:$0xf]
  %v28 = vld [vmem:[%s0 + $0x4] sm:$0xf]
  %v29 = vld [vmem:[%s0 + $0x8] sm:$0xf]
  %v30 = vld [vmem:[%s0 + $0xc] sm:$0xf]
  %v31 = vld [vmem:[%s0 + $0x10] sm:$0xf]
  %v32 = vld [vmem:[%s0 + $0x14] sm:$0xf]
  %v33 = vld [vmem:[%s0 + $0x18] sm:$0xf]
  %v34 = vld [vmem:[%s0 + $0x1c] sm:$0xf]
  %v35 = vld [vmem:[%s0 + $0x20] sm:$0xf]
  %v36 = vld [vmem:[%s0 + $0x24] sm:$0xf]
  %v37 = vld [vmem:[%s0 + $0x28] sm:$0xf]
  %v38 = vld [vmem:[%s0 + $0x2c] sm:$0xf]
  %v39 = vld [vmem:[%s0 + $0x30] sm:$0xf]
  %v40 = vld [vmem:[%s0 + $0x34] sm:$0xf]
  %v41 = vld [vmem:[%s0 + $0x38] sm:$0xf]
  %v42 = vld [vmem:[%s0 + $0x3c] sm:$0xf]
  %v43 = vld [vmem:[%s1] sm:$0xf]
  %v44 = vld [vmem:[%s1 + $0x4] sm:$0xf]
  %v45 = vld [vmem:[%s1 + $0x8] sm:$0xf]
  %v46 = vld [vmem:[%s1 + $0xc] sm:$0xf]
  %v47 = vld [vmem:[%s1 + $0x10] sm:$0x3]
  %v48 = vld [vmem:[%s2] sm:$0x1]
  %v50 = vperm.slane %v48, 0
  %v68 = vunpack.c.l.b16 %v27
  %v69 = vunpack.c.l.b16 %v28
  %v70 = vunpack.c.l.b16 %v29
  %v71 = vunpack.c.l.b16 %v30
  %v72 = vunpack.c.l.b16 %v31
  %v73 = vunpack.c.l.b16 %v32
  %v74 = vunpack.c.l.b16 %v33
  %v75 = vunpack.c.l.b16 %v34
  %v76 = vunpack.c.l.b16 %v35
  %v77 = vunpack.c.l.b16 %v36
  %v78 = vunpack.c.l.b16 %v37
  %v79 = vunpack.c.l.b16 %v38
  %v80 = vunpack.c.l.b16 %v39
  %v81 = vunpack.c.l.b16 %v40
  %v82 = vunpack.c.l.b16 %v41
  %v83 = vunpack.c.l.b16 %v42
  %v84 = vpack.c.b16 %v69, %v68
  %v85 = vpack.c.b16 %v71, %v70
  %v86 = vpack.c.b16 %v73, %v72
  %v87 = vpack.c.b16 %v75, %v74
  %v88 = vpack.c.b16 %v77, %v76
  %v89 = vpack.c.b16 %v79, %v78
  %v90 = vpack.c.b16 %v81, %v80
  %v91 = vpack.c.b16 %v83, %v82
  %v97 = vunpack.c.l.b16 %v43
  %v98 = vunpack.c.l.b16 %v44
  %v99 = vunpack.c.l.b16 %v45
  %v100 = vunpack.c.l.b16 %v46
  %v101 = vunpack.c.l.b16 %v47
  %v102 = vpack.c.b16 %v98, %v97
  %v103 = vpack.c.b16 %v100, %v99
  %v104 = vpack.c.b16 %v101, %v101
  %vm107 = vcmask 285696
  %v109 = vsel %vm107, %v84, 0
  %v112 = vsel %vm107, %v85, 0
  %v115 = vsel %vm107, %v86, 0
  %v118 = vsel %vm107, %v87, 0
  %v121 = vsel %vm107, %v88, 0
  %v124 = vsel %vm107, %v89, 0
  %v127 = vsel %vm107, %v90, 0
  %v130 = vsel %vm107, %v91, 0
  %vm132 = vcmask 1040384
  %vm133 = vcmask 1041408
  %v134 = vsel %vm132, 4294967295, 65535
  %v135 = vsel %vm133, %v134, 0
  %v137 = vand.u32 %v104, %v135
  %139 = vmatpush.bf16.msra.mxu0 0
  %140 = vmatpush.bf16.msra.mxu0 0
  %141 = vmatpush.bf16.msra.mxu0 0
  %142 = vmatpush.bf16.msra.mxu0 0
  %143 = vmatpush.bf16.msra.mxu0 0
  %144 = vmatpush.bf16.msra.mxu0 %v137
  %145 = vmatpush.bf16.msra.mxu0 %v103
  %146 = vmatpush.bf16.msra.mxu0 %v102
  %147 = vmatmul.bf16.gmra.mxu0 %v109
  %v148 = vpop.f32.mrf.mxu0
  %v149 = vadd.f32 %v50, %v148
  %v150 = vpop.f32.mrf.mxu0
  %v151 = vadd.f32 %v50, %v150
  %152 = vmatmul.bf16.gmra.mxu0 %v112
  %v153 = vpop.f32.mrf.mxu0
  %v154 = vadd.f32 %v50, %v153
  %v155 = vpop.f32.mrf.mxu0
  %v156 = vadd.f32 %v50, %v155
  %157 = vmatmul.bf16.gmra.mxu0 %v115
  %v158 = vpop.f32.mrf.mxu0
  %v159 = vadd.f32 %v50, %v158
  %v160 = vpop.f32.mrf.mxu0
  %v161 = vadd.f32 %v50, %v160
  %162 = vmatmul.bf16.gmra.mxu0 %v118
  %v163 = vpop.f32.mrf.mxu0
  %v164 = vadd.f32 %v50, %v163
  %v165 = vpop.f32.mrf.mxu0
  %v166 = vadd.f32 %v50, %v165
  %167 = vmatmul.bf16.gmra.mxu0 %v121
  %v168 = vpop.f32.mrf.mxu0
  %v169 = vadd.f32 %v50, %v168
  %v170 = vpop.f32.mrf.mxu0
  %v171 = vadd.f32 %v50, %v170
  %172 = vmatmul.bf16.gmra.mxu0 %v124
  %v173 = vpop.f32.mrf.mxu0
  %v174 = vadd.f32 %v50, %v173
  %v175 = vpop.f32.mrf.mxu0
  %v176 = vadd.f32 %v50, %v175
  %177 = vmatmul.bf16.gmra.mxu0 %v127
  %v178 = vpop.f32.mrf.mxu0
  %v179 = vadd.f32 %v50, %v178
  %v180 = vpop.f32.mrf.mxu0
  %v181 = vadd.f32 %v50, %v180
  %182 = vmatmul.bf16.gmra.mxu0 %v130
  %v183 = vpop.f32.mrf.mxu0
  %v184 = vadd.f32 %v50, %v183
  %v185 = vpop.f32.mrf.mxu0
  %v186 = vadd.f32 %v50, %v185
  %187 = vdwg.mxu0
  %v188 = vmax.f32 %v149, 0.0
  %v189 = vmax.f32 %v151, 0.0
  %v190 = vmax.f32 %v154, 0.0
  %v191 = vmax.f32 %v156, 0.0
  %v192 = vmax.f32 %v159, 0.0
  %v193 = vmax.f32 %v161, 0.0
  %v194 = vmax.f32 %v164, 0.0
  %v195 = vmax.f32 %v166, 0.0
  %v196 = vmax.f32 %v169, 0.0
  %v197 = vmax.f32 %v171, 0.0
  %v198 = vmax.f32 %v174, 0.0
  %v199 = vmax.f32 %v176, 0.0
  %v200 = vmax.f32 %v179, 0.0
  %v201 = vmax.f32 %v181, 0.0
  %v202 = vmax.f32 %v184, 0.0
  %v203 = vmax.f32 %v186, 0.0
  %v204 = vpack.c.bf16 %v189, %v188
  %v205 = vpack.c.bf16 %v191, %v190
  %v206 = vpack.c.bf16 %v193, %v192
  %v207 = vpack.c.bf16 %v195, %v194
  %v208 = vpack.c.bf16 %v197, %v196
  %v209 = vpack.c.bf16 %v199, %v198
  %v210 = vpack.c.bf16 %v201, %v200
  %v211 = vpack.c.bf16 %v203, %v202
  %v212 = vld [vmem:[%s3] sm:$0xf]
  %v213 = vld [vmem:[%s3 + $0x4] sm:$0xf]
  %v214 = vld [vmem:[%s3 + $0x8] sm:$0xf]
  %v215 = vld [vmem:[%s3 + $0xc] sm:$0xf]
  %v216 = vld [vmem:[%s4] sm:$0x1]
  %v218 = vperm.slane %v216, 0
  %v224 = vunpack.c.l.b16 %v212
  %v225 = vunpack.c.l.b16 %v213
  %v226 = vunpack.c.l.b16 %v214
  %v227 = vunpack.c.l.b16 %v215
  %v228 = vpack.c.b16 %v225, %v224
  %v229 = vpack.c.b16 %v227, %v226
  %vm232 = vcmask 261120
  %v234 = vsel %vm232, %v204, 0
  %v237 = vsel %vm232, %v205, 0
  %v240 = vsel %vm232, %v206, 0
  %v243 = vsel %vm232, %v207, 0
  %v246 = vsel %vm232, %v208, 0
  %v249 = vsel %vm232, %v209, 0
  %v252 = vsel %vm232, %v210, 0
  %v255 = vsel %vm232, %v211, 0
  %257 = vmatpush.bf16.msra.mxu0 0
  %258 = vmatpush.bf16.msra.mxu0 0
  %259 = vmatpush.bf16.msra.mxu0 0
  %260 = vmatpush.bf16.msra.mxu0 0
  %261 = vmatpush.bf16.msra.mxu0 0
  %262 = vmatpush.bf16.msra.mxu0 0
  %263 = vmatpush.bf16.msra.mxu0 %v229
  %264 = vmatpush.bf16.msra.mxu0 %v228
  %265 = vmatmul.bf16.gmra.mxu0 %v234
  %v266 = vpop.f32.mrf.mxu0
  %v267 = vadd.f32 %v218, %v266
  %v268 = vpop.f32.mrf.mxu0
  %v269 = vadd.f32 %v218, %v268
  %270 = vmatmul.bf16.gmra.mxu0 %v237
  %v271 = vpop.f32.mrf.mxu0
  %v272 = vadd.f32 %v218, %v271
  %v273 = vpop.f32.mrf.mxu0
  %v274 = vadd.f32 %v218, %v273
  %275 = vmatmul.bf16.gmra.mxu0 %v240
  %v276 = vpop.f32.mrf.mxu0
  %v277 = vadd.f32 %v218, %v276
  %v278 = vpop.f32.mrf.mxu0
  %v279 = vadd.f32 %v218, %v278
  %280 = vmatmul.bf16.gmra.mxu0 %v243
  %v281 = vpop.f32.mrf.mxu0
  %v282 = vadd.f32 %v218, %v281
  %v283 = vpop.f32.mrf.mxu0
  %v284 = vadd.f32 %v218, %v283
  %285 = vmatmul.bf16.gmra.mxu0 %v246
  %v286 = vpop.f32.mrf.mxu0
  %v287 = vadd.f32 %v218, %v286
  %v288 = vpop.f32.mrf.mxu0
  %v289 = vadd.f32 %v218, %v288
  %290 = vmatmul.bf16.gmra.mxu0 %v249
  %v291 = vpop.f32.mrf.mxu0
  %v292 = vadd.f32 %v218, %v291
  %v293 = vpop.f32.mrf.mxu0
  %v294 = vadd.f32 %v218, %v293
  %295 = vmatmul.bf16.gmra.mxu0 %v252
  %v296 = vpop.f32.mrf.mxu0
  %v297 = vadd.f32 %v218, %v296
  %v298 = vpop.f32.mrf.mxu0
  %v299 = vadd.f32 %v218, %v298
  %300 = vmatmul.bf16.gmra.mxu0 %v255
  %v301 = vpop.f32.mrf.mxu0
  %v302 = vadd.f32 %v218, %v301
  %v303 = vpop.f32.mrf.mxu0
  %v304 = vadd.f32 %v218, %v303
  %305 = vdwg.mxu0
  %v306 = vmax.f32 %v267, 0.0
  %v307 = vmax.f32 %v269, 0.0
  %v308 = vmax.f32 %v272, 0.0
  %v309 = vmax.f32 %v274, 0.0
  %v310 = vmax.f32 %v277, 0.0
  %v311 = vmax.f32 %v279, 0.0
  %v312 = vmax.f32 %v282, 0.0
  %v313 = vmax.f32 %v284, 0.0
  %v314 = vmax.f32 %v287, 0.0
  %v315 = vmax.f32 %v289, 0.0
  %v316 = vmax.f32 %v292, 0.0
  %v317 = vmax.f32 %v294, 0.0
  %v318 = vmax.f32 %v297, 0.0
  %v319 = vmax.f32 %v299, 0.0
  %v320 = vmax.f32 %v302, 0.0
  %v321 = vmax.f32 %v304, 0.0
  %v322 = vpack.c.bf16 %v307, %v306
  %v323 = vpack.c.bf16 %v309, %v308
  %v324 = vpack.c.bf16 %v311, %v310
  %v325 = vpack.c.bf16 %v313, %v312
  %v326 = vpack.c.bf16 %v315, %v314
  %v327 = vpack.c.bf16 %v317, %v316
  %v328 = vpack.c.bf16 %v319, %v318
  %v329 = vpack.c.bf16 %v321, %v320
  %v330 = vld [vmem:[%s5] sm:$0xf]
  %v331 = vld [vmem:[%s5 + $0x4] sm:$0xf]
  %v332 = vld [vmem:[%s5 + $0x8] sm:$0xf]
  %v333 = vld [vmem:[%s5 + $0xc] sm:$0xf]
  %v334 = vld [vmem:[%s5 + $0x10] sm:$0xf]
  %v335 = vld [vmem:[%s5 + $0x14] sm:$0xf]
  %v336 = vld [vmem:[%s5 + $0x18] sm:$0xf]
  %v337 = vld [vmem:[%s5 + $0x1c] sm:$0xf]
  %v338 = vld [vmem:[%s6] sm:$0x1]
  %v340 = vperm.slane %v338, 0
  %v350 = vunpack.c.l.b16 %v330
  %v351 = vunpack.c.l.b16 %v331
  %v352 = vunpack.c.l.b16 %v332
  %v353 = vunpack.c.l.b16 %v333
  %v354 = vunpack.c.l.b16 %v334
  %v355 = vunpack.c.l.b16 %v335
  %v356 = vunpack.c.l.b16 %v336
  %v357 = vunpack.c.l.b16 %v337
  %v358 = vpack.c.b16 %v351, %v350
  %v359 = vpack.c.b16 %v353, %v352
  %v360 = vpack.c.b16 %v355, %v354
  %v361 = vpack.c.b16 %v357, %v356
  %vm366 = vcmask 523264
  %v368 = vsel %vm366, %v322, 0
  %v371 = vsel %vm366, %v323, 0
  %v374 = vsel %vm366, %v324, 0
  %v377 = vsel %vm366, %v325, 0
  %v380 = vsel %vm366, %v326, 0
  %v383 = vsel %vm366, %v327, 0
  %v386 = vsel %vm366, %v328, 0
  %v389 = vsel %vm366, %v329, 0
  %391 = vmatpush.bf16.msra.mxu0 0
  %392 = vmatpush.bf16.msra.mxu0 0
  %393 = vmatpush.bf16.msra.mxu0 0
  %394 = vmatpush.bf16.msra.mxu0 0
  %395 = vmatpush.bf16.msra.mxu0 %v361
  %396 = vmatpush.bf16.msra.mxu0 %v360
  %397 = vmatpush.bf16.msra.mxu0 %v359
  %398 = vmatpush.bf16.msra.mxu0 %v358
  %399 = vmatmul.bf16.gmra.mxu0 %v368
  %v400 = vpop.f32.mrf.mxu0
  %v401 = vadd.f32 %v340, %v400
  %v402 = vpop.f32.mrf.mxu0
  %v403 = vadd.f32 %v340, %v402
  %404 = vmatmul.bf16.gmra.mxu0 %v371
  %v405 = vpop.f32.mrf.mxu0
  %v406 = vadd.f32 %v340, %v405
  %v407 = vpop.f32.mrf.mxu0
  %v408 = vadd.f32 %v340, %v407
  %409 = vmatmul.bf16.gmra.mxu0 %v374
  %v410 = vpop.f32.mrf.mxu0
  %v411 = vadd.f32 %v340, %v410
  %v412 = vpop.f32.mrf.mxu0
  %v413 = vadd.f32 %v340, %v412
  %414 = vmatmul.bf16.gmra.mxu0 %v377
  %v415 = vpop.f32.mrf.mxu0
  %v416 = vadd.f32 %v340, %v415
  %v417 = vpop.f32.mrf.mxu0
  %v418 = vadd.f32 %v340, %v417
  %419 = vmatmul.bf16.gmra.mxu0 %v380
  %v420 = vpop.f32.mrf.mxu0
  %v421 = vadd.f32 %v340, %v420
  %v422 = vpop.f32.mrf.mxu0
  %v423 = vadd.f32 %v340, %v422
  %424 = vmatmul.bf16.gmra.mxu0 %v383
  %v425 = vpop.f32.mrf.mxu0
  %v426 = vadd.f32 %v340, %v425
  %v427 = vpop.f32.mrf.mxu0
  %v428 = vadd.f32 %v340, %v427
  %429 = vmatmul.bf16.gmra.mxu0 %v386
  %v430 = vpop.f32.mrf.mxu0
  %v431 = vadd.f32 %v340, %v430
  %v432 = vpop.f32.mrf.mxu0
  %v433 = vadd.f32 %v340, %v432
  %434 = vmatmul.bf16.gmra.mxu0 %v389
  %v435 = vpop.f32.mrf.mxu0
  %v436 = vadd.f32 %v340, %v435
  %v437 = vpop.f32.mrf.mxu0
  %v438 = vadd.f32 %v340, %v437
  %439 = vdwg.mxu0
  %v440 = vmax.f32 %v401, 0.0
  %v441 = vmax.f32 %v403, 0.0
  %v442 = vmax.f32 %v406, 0.0
  %v443 = vmax.f32 %v408, 0.0
  %v444 = vmax.f32 %v411, 0.0
  %v445 = vmax.f32 %v413, 0.0
  %v446 = vmax.f32 %v416, 0.0
  %v447 = vmax.f32 %v418, 0.0
  %v448 = vmax.f32 %v421, 0.0
  %v449 = vmax.f32 %v423, 0.0
  %v450 = vmax.f32 %v426, 0.0
  %v451 = vmax.f32 %v428, 0.0
  %v452 = vmax.f32 %v431, 0.0
  %v453 = vmax.f32 %v433, 0.0
  %v454 = vmax.f32 %v436, 0.0
  %v455 = vmax.f32 %v438, 0.0
  %v456 = vsel %vm232, %v440, -inf
  %v457 = vrot.slane %v456, 4
  %v458 = vmax.f32 %v456, %v457
  %v459 = vrot.slane %v458, 2
  %v460 = vmax.f32 %v458, %v459
  %v461 = vrot.slane %v460, 1
  %v462 = vmax.f32 %v460, %v461
  %v463 = vsel %vm232, %v441, -inf
  %v464 = vrot.slane %v463, 4
  %v465 = vmax.f32 %v463, %v464
  %v466 = vrot.slane %v465, 2
  %v467 = vmax.f32 %v465, %v466
  %v468 = vrot.slane %v467, 1
  %v469 = vmax.f32 %v467, %v468
  %v470 = vsel %vm232, %v442, -inf
  %v471 = vrot.slane %v470, 4
  %v472 = vmax.f32 %v470, %v471
  %v473 = vrot.slane %v472, 2
  %v474 = vmax.f32 %v472, %v473
  %v475 = vrot.slane %v474, 1
  %v476 = vmax.f32 %v474, %v475
  %v477 = vsel %vm232, %v443, -inf
  %v478 = vrot.slane %v477, 4
  %v479 = vmax.f32 %v477, %v478
  %v480 = vrot.slane %v479, 2
  %v481 = vmax.f32 %v479, %v480
  %v482 = vrot.slane %v481, 1
  %v483 = vmax.f32 %v481, %v482
  %v484 = vsel %vm232, %v444, -inf
  %v485 = vrot.slane %v484, 4
  %v486 = vmax.f32 %v484, %v485
  %v487 = vrot.slane %v486, 2
  %v488 = vmax.f32 %v486, %v487
  %v489 = vrot.slane %v488, 1
  %v490 = vmax.f32 %v488, %v489
  %v491 = vsel %vm232, %v445, -inf
  %v492 = vrot.slane %v491, 4
  %v493 = vmax.f32 %v491, %v492
  %v494 = vrot.slane %v493, 2
  %v495 = vmax.f32 %v493, %v494
  %v496 = vrot.slane %v495, 1
  %v497 = vmax.f32 %v495, %v496
  %v498 = vsel %vm232, %v446, -inf
  %v499 = vrot.slane %v498, 4
  %v500 = vmax.f32 %v498, %v499
  %v501 = vrot.slane %v500, 2
  %v502 = vmax.f32 %v500, %v501
  %v503 = vrot.slane %v502, 1
  %v504 = vmax.f32 %v502, %v503
  %v505 = vsel %vm232, %v447, -inf
  %v506 = vrot.slane %v505, 4
  %v507 = vmax.f32 %v505, %v506
  %v508 = vrot.slane %v507, 2
  %v509 = vmax.f32 %v507, %v508
  %v510 = vrot.slane %v509, 1
  %v511 = vmax.f32 %v509, %v510
  %v512 = vsel %vm232, %v448, -inf
  %v513 = vrot.slane %v512, 4
  %v514 = vmax.f32 %v512, %v513
  %v515 = vrot.slane %v514, 2
  %v516 = vmax.f32 %v514, %v515
  %v517 = vrot.slane %v516, 1
  %v518 = vmax.f32 %v516, %v517
  %v519 = vsel %vm232, %v449, -inf
  %v520 = vrot.slane %v519, 4
  %v521 = vmax.f32 %v519, %v520
  %v522 = vrot.slane %v521, 2
  %v523 = vmax.f32 %v521, %v522
  %v524 = vrot.slane %v523, 1
  %v525 = vmax.f32 %v523, %v524
  %v526 = vsel %vm232, %v450, -inf
  %v527 = vrot.slane %v526, 4
  %v528 = vmax.f32 %v526, %v527
  %v529 = vrot.slane %v528, 2
  %v530 = vmax.f32 %v528, %v529
  %v531 = vrot.slane %v530, 1
  %v532 = vmax.f32 %v530, %v531
  %v533 = vsel %vm232, %v451, -inf
  %v534 = vrot.slane %v533, 4
  %v535 = vmax.f32 %v533, %v534
  %v536 = vrot.slane %v535, 2
  %v537 = vmax.f32 %v535, %v536
  %v538 = vrot.slane %v537, 1
  %v539 = vmax.f32 %v537, %v538
  %v540 = vsel %vm232, %v452, -inf
  %v541 = vrot.slane %v540, 4
  %v542 = vmax.f32 %v540, %v541
  %v543 = vrot.slane %v542, 2
  %v544 = vmax.f32 %v542, %v543
  %v545 = vrot.slane %v544, 1
  %v546 = vmax.f32 %v544, %v545
  %v547 = vsel %vm232, %v453, -inf
  %v548 = vrot.slane %v547, 4
  %v549 = vmax.f32 %v547, %v548
  %v550 = vrot.slane %v549, 2
  %v551 = vmax.f32 %v549, %v550
  %v552 = vrot.slane %v551, 1
  %v553 = vmax.f32 %v551, %v552
  %v554 = vsel %vm232, %v454, -inf
  %v555 = vrot.slane %v554, 4
  %v556 = vmax.f32 %v554, %v555
  %v557 = vrot.slane %v556, 2
  %v558 = vmax.f32 %v556, %v557
  %v559 = vrot.slane %v558, 1
  %v560 = vmax.f32 %v558, %v559
  %v561 = vsel %vm232, %v455, -inf
  %v562 = vrot.slane %v561, 4
  %v563 = vmax.f32 %v561, %v562
  %v564 = vrot.slane %v563, 2
  %v565 = vmax.f32 %v563, %v564
  %v566 = vrot.slane %v565, 1
  %v567 = vmax.f32 %v565, %v566
  %vm584 = vcmask 1041409
  %v585 = vsel %vm584, %v469, %v462
  %vm586 = vcmask 1042434
  %v587 = vsel %vm586, %v476, %v585
  %vm588 = vcmask 1043459
  %v589 = vsel %vm588, %v483, %v587
  %vm590 = vcmask 1044484
  %v591 = vsel %vm590, %v490, %v589
  %vm592 = vcmask 1045509
  %v593 = vsel %vm592, %v497, %v591
  %vm594 = vcmask 1046534
  %v595 = vsel %vm594, %v504, %v593
  %vm596 = vcmask 1047559
  %v597 = vsel %vm596, %v511, %v595
  %v598 = vsel %vm584, %v525, %v518
  %v599 = vsel %vm586, %v532, %v598
  %v600 = vsel %vm588, %v539, %v599
  %v601 = vsel %vm590, %v546, %v600
  %v602 = vsel %vm592, %v553, %v601
  %v603 = vsel %vm594, %v560, %v602
  %v604 = vsel %vm596, %v567, %v603
  %607 = vst.msk [vmem:[%s7] sm:$0xff] %vm232, %v597
  %608 = vst.msk [vmem:[%s7 + $0x8] sm:$0xff] %vm232, %v604
  // Predicated region
  $region30: #{_lambda_.7} parent=0 // pred_check
    _
  $region31: #{_lambda_.7} parent=0 // pred_check_branch
    %610 = sbr.rel (0) target = $region33
  $region32: #{_lambda_.7} parent=0 // pred_region
    _
  $region33: #{_lambda_.7} parent=0 // pred_fallthru
    _
  // Predicated region
  $region34: #{_lambda_.7} parent=0 // pred_check
    _
  $region35: #{_lambda_.7} parent=0 // pred_check_branch
    %612 = sbr.rel (0) target = $region37
  $region36: #{_lambda_.7} parent=0 // pred_region
    _
  $region37: #{_lambda_.7} parent=0 // pred_fallthru
    _

// kernel: _lambda_.8
$region0: #{_lambda_.8}
  #allocation0 [shape = 'u32[]', space=smem, size = 0x4, offset = 0x4, fixed_abs, tag = 'smem constant byte address 0x4 - core index']
  #allocation1 [shape = 'u32[72,128]{1,0:T(1,128)}', space=vmem, size = 0x9000, scoped, tag = 'internal scratch']
  %s0 = inlined_call_operand.vmem [shape: f32[2,8,32], index: 0, kind: input, shape index: {}]
  %s1 = inlined_call_operand.vmem [shape: f32[2,40,32], index: 1, kind: input, shape index: {}]
  %s2 = inlined_call_operand.vmem [shape: bf16[8,40], index: 2, kind: input, shape index: {}]
  %s3 = inlined_call_operand.vmem [shape: f32[8,1], index: 3, kind: input, shape index: {}]
  %s4 = inlined_call_operand.vmem [shape: bf16[8,8], index: 4, kind: input, shape index: {}]
  %s5 = inlined_call_operand.vmem [shape: bf16[8,8], index: 5, kind: input, shape index: {}]
  %s6 = inlined_call_operand.vmem [shape: f32[8,1], index: 6, kind: input, shape index: {}]
  %s7 = inlined_call_operand.vmem [shape: f32[2,8,32], index: 7, kind: output, shape index: {}]
  %s8 = sld [smem:[#allocation0]]
  $region61: #{_lambda_.8} parent=0
    _
  %s10 = ssub.s32 1, %s8
  %s11 = scalar_select 0, %s10, %s8
  loop: start=0, step=1, limit=4
  $region2: #{_lambda_.8} parent=0 // loop_pre_header
    _
  $region3: #{_lambda_.8} parent=0 // loop_header
    %s13 = sphi 0, %s17
    %p14 = scmp.ge.s32.totalorder %s13, 4
    %s23 = sphi 0, %s25
    %s26 = sphi 0, %s23
    %s27 = sphi 0, %s26
    %s43 = sphi 0, %s27
    %s49 = sphi 0, %s51
    %s52 = sphi 0, %s49
    %s53 = sphi 0, %s52
    %s69 = sphi 0, %s53
    %s73 = sphi 0, %s73
    %s75 = sphi 0, %s73
    %s76 = sphi 0, %s75
    %s90 = sphi 0, %s76
    %s94 = sphi 0, %s94
    %s96 = sphi 0, %s94
    %s97 = sphi 0, %s96
    %s111 = sphi 0, %s97
    %s115 = sphi 0, %s115
    %s117 = sphi 0, %s115
    %s118 = sphi 0, %s117
    %s132 = sphi 0, %s118
    %s136 = sphi 0, %s136
    %s138 = sphi 0, %s136
    %s139 = sphi 0, %s138
    %s153 = sphi 0, %s139
    %s157 = sphi 0, %s157
    %s159 = sphi 0, %s157
    %s160 = sphi 0, %s159
    %s174 = sphi 0, %s160
    %s180 = sphi 0, %s182
    %s183 = sphi 0, %s180
    %s184 = sphi 0, %s183
    %s200 = sphi 0, %s184
  $region4: #{_lambda_.8} parent=0 // loop_header_branch
    %16 = sbr.rel (%p14) target = $region8
  $region5: #{_lambda_.8} parent=0 // loop_body
    %s18 = ssub.s32 %s13, 1
    %s19 = ssub.s32 %s13, 2
    %s20 = sadd.s32 %s13, 1
    %s21 = ssub.s32 %s13, %s20
    %p22 = scmp.eq.s32.totalorder %s21, 0
    %s24 = sadd.s32 %s23, 1
    %s25 = scalar_select %p22, %s23, %s24
    %p28 = pneg %p22
    %p29 = scmp.eq.s32.totalorder %s13, 1
    %p30 = por %p28, %p29
    %p31 = scmp.ne.s32.totalorder %s23, %s26
    %p32 = scmp.eq.s32.totalorder %s13, 0
    %p33 = por %p31, %p32
    %p34 = scmp.ne.s32.totalorder %s23, %s26
    %p35 = scmp.eq.s32.totalorder %s18, 1
    %p36 = por %p34, %p35
    %p37 = scmp.ne.s32.totalorder %s26, %s27
    %p38 = scmp.eq.s32.totalorder %s18, 0
    %p39 = por %p37, %p38
    %p40 = scmp.ne.s32.totalorder %s26, %s27
    %p41 = scmp.eq.s32.totalorder %s19, 1
    %p42 = por %p40, %p41
    %p44 = scmp.ne.s32.totalorder %s27, %s43
    %p45 = scmp.eq.s32.totalorder %s19, 0
    %p46 = por %p44, %p45
    %s47 = ssub.s32 %s13, %s20
    %p48 = scmp.eq.s32.totalorder %s47, 0
    %s50 = sadd.s32 %s49, 1
    %s51 = scalar_select %p48, %s49, %s50
    %p54 = pneg %p48
    %p55 = scmp.eq.s32.totalorder %s13, 1
    %p56 = por %p54, %p55
    %p57 = scmp.ne.s32.totalorder %s49, %s52
    %p58 = scmp.eq.s32.totalorder %s13, 0
    %p59 = por %p57, %p58
    %p60 = scmp.ne.s32.totalorder %s49, %s52
    %p61 = scmp.eq.s32.totalorder %s18, 1
    %p62 = por %p60, %p61
    %p63 = scmp.ne.s32.totalorder %s52, %s53
    %p64 = scmp.eq.s32.totalorder %s18, 0
    %p65 = por %p63, %p64
    %p66 = scmp.ne.s32.totalorder %s52, %s53
    %p67 = scmp.eq.s32.totalorder %s19, 1
    %p68 = por %p66, %p67
    %p70 = scmp.ne.s32.totalorder %s53, %s69
    %p71 = scmp.eq.s32.totalorder %s19, 0
    %p72 = por %p70, %p71
    %s74 = sadd.s32 %s73, 1
    %p77 = scmp.eq.s32.totalorder %s13, 1
    %p78 = scmp.ne.s32.totalorder %s73, %s75
    %p79 = scmp.eq.s32.totalorder %s13, 0
    %p80 = por %p78, %p79
    %p81 = scmp.ne.s32.totalorder %s73, %s75
    %p82 = scmp.eq.s32.totalorder %s18, 1
    %p83 = por %p81, %p82
    %p84 = scmp.ne.s32.totalorder %s75, %s76
    %p85 = scmp.eq.s32.totalorder %s18, 0
    %p86 = por %p84, %p85
    %p87 = scmp.ne.s32.totalorder %s75, %s76
    %p88 = scmp.eq.s32.totalorder %s19, 1
    %p89 = por %p87, %p88
    %p91 = scmp.ne.s32.totalorder %s76, %s90
    %p92 = scmp.eq.s32.totalorder %s19, 0
    %p93 = por %p91, %p92
    %s95 = sadd.s32 %s94, 1
    %p98 = scmp.eq.s32.totalorder %s13, 1
    %p99 = scmp.ne.s32.totalorder %s94, %s96
    %p100 = scmp.eq.s32.totalorder %s13, 0
    %p101 = por %p99, %p100
    %p102 = scmp.ne.s32.totalorder %s94, %s96
    %p103 = scmp.eq.s32.totalorder %s18, 1
    %p104 = por %p102, %p103
    %p105 = scmp.ne.s32.totalorder %s96, %s97
    %p106 = scmp.eq.s32.totalorder %s18, 0
    %p107 = por %p105, %p106
    %p108 = scmp.ne.s32.totalorder %s96, %s97
    %p109 = scmp.eq.s32.totalorder %s19, 1
    %p110 = por %p108, %p109
    %p112 = scmp.ne.s32.totalorder %s97, %s111
    %p113 = scmp.eq.s32.totalorder %s19, 0
    %p114 = por %p112, %p113
    %s116 = sadd.s32 %s115, 1
    %p119 = scmp.eq.s32.totalorder %s13, 1
    %p120 = scmp.ne.s32.totalorder %s115, %s117
    %p121 = scmp.eq.s32.totalorder %s13, 0
    %p122 = por %p120, %p121
    %p123 = scmp.ne.s32.totalorder %s115, %s117
    %p124 = scmp.eq.s32.totalorder %s18, 1
    %p125 = por %p123, %p124
    %p126 = scmp.ne.s32.totalorder %s117, %s118
    %p127 = scmp.eq.s32.totalorder %s18, 0
    %p128 = por %p126, %p127
    %p129 = scmp.ne.s32.totalorder %s117, %s118
    %p130 = scmp.eq.s32.totalorder %s19, 1
    %p131 = por %p129, %p130
    %p133 = scmp.ne.s32.totalorder %s118, %s132
    %p134 = scmp.eq.s32.totalorder %s19, 0
    %p135 = por %p133, %p134
    %s137 = sadd.s32 %s136, 1
    %p140 = scmp.eq.s32.totalorder %s13, 1
    %p141 = scmp.ne.s32.totalorder %s136, %s138
    %p142 = scmp.eq.s32.totalorder %s13, 0
    %p143 = por %p141, %p142
    %p144 = scmp.ne.s32.totalorder %s136, %s138
    %p145 = scmp.eq.s32.totalorder %s18, 1
    %p146 = por %p144, %p145
    %p147 = scmp.ne.s32.totalorder %s138, %s139
    %p148 = scmp.eq.s32.totalorder %s18, 0
    %p149 = por %p147, %p148
    %p150 = scmp.ne.s32.totalorder %s138, %s139
    %p151 = scmp.eq.s32.totalorder %s19, 1
    %p152 = por %p150, %p151
    %p154 = scmp.ne.s32.totalorder %s139, %s153
    %p155 = scmp.eq.s32.totalorder %s19, 0
    %p156 = por %p154, %p155
    %s158 = sadd.s32 %s157, 1
    %p161 = scmp.eq.s32.totalorder %s13, 1
    %p162 = scmp.ne.s32.totalorder %s157, %s159
    %p163 = scmp.eq.s32.totalorder %s13, 0
    %p164 = por %p162, %p163
    %p165 = scmp.ne.s32.totalorder %s157, %s159
    %p166 = scmp.eq.s32.totalorder %s18, 1
    %p167 = por %p165, %p166
    %p168 = scmp.ne.s32.totalorder %s159, %s160
    %p169 = scmp.eq.s32.totalorder %s18, 0
    %p170 = por %p168, %p169
    %p171 = scmp.ne.s32.totalorder %s159, %s160
    %p172 = scmp.eq.s32.totalorder %s19, 1
    %p173 = por %p171, %p172
    %p175 = scmp.ne.s32.totalorder %s160, %s174
    %p176 = scmp.eq.s32.totalorder %s19, 0
    %p177 = por %p175, %p176
    %s178 = ssub.s32 %s13, %s20
    %p179 = scmp.eq.s32.totalorder %s178, 0
    %s181 = sadd.s32 %s180, 1
    %s182 = scalar_select %p179, %s180, %s181
    %p185 = pneg %p179
    %p186 = scmp.eq.s32.totalorder %s13, 1
    %p187 = por %p185, %p186
    %p188 = scmp.ne.s32.totalorder %s180, %s183
    %p189 = scmp.eq.s32.totalorder %s13, 0
    %p190 = por %p188, %p189
    %p191 = scmp.ne.s32.totalorder %s180, %s183
    %p192 = scmp.eq.s32.totalorder %s18, 1
    %p193 = por %p191, %p192
    %p194 = scmp.ne.s32.totalorder %s183, %s184
    %p195 = scmp.eq.s32.totalorder %s18, 0
    %p196 = por %p194, %p195
    %p197 = scmp.ne.s32.totalorder %s183, %s184
    %p198 = scmp.eq.s32.totalorder %s19, 1
    %p199 = por %p197, %p198
    %p201 = scmp.ne.s32.totalorder %s184, %s200
    %p202 = scmp.eq.s32.totalorder %s19, 0
    %p203 = por %p201, %p202
    %p204 = scmp.le.s32.totalorder 1, %s13
    %p205 = scmp.lt.s32.totalorder %s13, 3
    %p206 = pnand %p204, %p205
    %p207 = pneg %p206
    // Predicated region
    $region9: #{_lambda_.8} parent=5 // pred_check
      _
    $region10: #{_lambda_.8} parent=5 // pred_check_branch
      %209 = sbr.rel (%p206) target = $region12
    $region11: #{_lambda_.8} parent=5 // pred_region
      %s210 = ssub.s32 %s13, 1
      // Predicated region
      $region13: #{_lambda_.8} parent=11 // pred_check
        %p211 = pneg %p86
      $region14: #{_lambda_.8} parent=11 // pred_check_branch
        %213 = sbr.rel (%p211) target = $region16
      $region15: #{_lambda_.8} parent=11 // pred_region
        _
      $region16: #{_lambda_.8} parent=11 // pred_fallthru
        _
      // Predicated region
      $region17: #{_lambda_.8} parent=11 // pred_check
        %p214 = pneg %p107
      $region18: #{_lambda_.8} parent=11 // pred_check_branch
        %216 = sbr.rel (%p214) target = $region20
      $region19: #{_lambda_.8} parent=11 // pred_region
        _
      $region20: #{_lambda_.8} parent=11 // pred_fallthru
        _
      // Predicated region
      $region21: #{_lambda_.8} parent=11 // pred_check
        %p217 = pneg %p128
      $region22: #{_lambda_.8} parent=11 // pred_check_branch
        %219 = sbr.rel (%p217) target = $region24
      $region23: #{_lambda_.8} parent=11 // pred_region
        _
      $region24: #{_lambda_.8} parent=11 // pred_fallthru
        _
      // Predicated region
      $region25: #{_lambda_.8} parent=11 // pred_check
        %p220 = pneg %p149
      $region26: #{_lambda_.8} parent=11 // pred_check_branch
        %222 = sbr.rel (%p220) target = $region28
      $region27: #{_lambda_.8} parent=11 // pred_region
        _
      $region28: #{_lambda_.8} parent=11 // pred_fallthru
        _
      // Predicated region
      $region29: #{_lambda_.8} parent=11 // pred_check
        %p223 = pneg %p170
      $region30: #{_lambda_.8} parent=11 // pred_check_branch
        %225 = sbr.rel (%p223) target = $region32
      $region31: #{_lambda_.8} parent=11 // pred_region
        _
      $region32: #{_lambda_.8} parent=11 // pred_fallthru
        _
    $region12: #{_lambda_.8} parent=5 // pred_fallthru
      _
    %p226 = scmp.lt.s32.totalorder %s13, 2
    // Predicated region
    $region33: #{_lambda_.8} parent=5 // pred_check
      %p227 = pneg %p226
    $region34: #{_lambda_.8} parent=5 // pred_check_branch
      %229 = sbr.rel (%p227) target = $region36
    $region35: #{_lambda_.8} parent=5 // pred_region
      // Predicated region
      $region37: #{_lambda_.8} parent=35 // pred_check
        %p230 = pneg %p33
      $region38: #{_lambda_.8} parent=35 // pred_check_branch
        %232 = sbr.rel (%p230) target = $region40
      $region39: #{_lambda_.8} parent=35 // pred_region
        %p233 = scmp.lt.s32.totalorder %s13, 1
        %s234 = scalar_select %p233, %s13, 1
        %s235 = smul.addr %s234, 8
        %s236 = scalar_lea.vmem %s0, %s235
      $region40: #{_lambda_.8} parent=35 // pred_fallthru
        _
      // Predicated region
      $region41: #{_lambda_.8} parent=35 // pred_check
        %p237 = pneg %p59
      $region42: #{_lambda_.8} parent=35 // pred_check_branch
        %239 = sbr.rel (%p237) target = $region44
      $region43: #{_lambda_.8} parent=35 // pred_region
        %p240 = scmp.lt.s32.totalorder %s13, 1
        %s241 = scalar_select %p240, %s13, 1
        %s242 = smul.addr %s241, 5
        %s243 = smul.addr %s242, 8
        %s244 = scalar_lea.vmem %s1, %s243
      $region44: #{_lambda_.8} parent=35 // pred_fallthru
        _
    $region36: #{_lambda_.8} parent=5 // pred_fallthru
      _
    %p245 = scmp.le.s32.totalorder 1, %s13
    %p246 = scmp.lt.s32.totalorder %s13, 3
    %p247 = pnand %p245, %p246
    %p248 = pneg %p247
    // Predicated region
    $region45: #{_lambda_.8} parent=5 // pred_check
      _
    $region46: #{_lambda_.8} parent=5 // pred_check_branch
      %250 = sbr.rel (%p247) target = $region48
    $region47: #{_lambda_.8} parent=5 // pred_region
      %s251 = ssub.s32 %s13, 1
      %p252 = scmp.lt.s32.totalorder %s18, 1
      %s253 = scalar_select %p252, %s18, 1
      %s254 = smul.addr %s253, 8
      %s255 = scalar_lea.vmem %s0, %s254
      %p256 = pneg %p39
      %p257 = pneg %p36
      %p258 = scmp.lt.s32.totalorder %s18, 1
      %s259 = scalar_select %p258, %s18, 1
      %s260 = smul.addr %s259, 5
      %s261 = smul.addr %s260, 8
      %s262 = scalar_lea.vmem %s1, %s261
      %p263 = pneg %p65
      %p264 = pneg %p62
      %p265 = pneg %p86
      %p266 = pneg %p83
      %p267 = pneg %p107
      %p268 = pneg %p104
      %p269 = pneg %p128
      %p270 = pneg %p125
      %p271 = pneg %p149
      %p272 = pneg %p146
      %p273 = pneg %p170
      %p274 = pneg %p167
      %p275 = pneg %p196
      %p276 = pneg %p193
      %p277 = scmp.lt.s32.totalorder %s18, 1
      %s278 = scalar_select %p277, %s18, 1
      %s279 = smul.addr %s278, 8
      %s280 = scalar_lea.vmem %s7, %s279
      %p281 = scmp.lt.s32.totalorder %s18, 1
      %s282 = scalar_select %p281, %s18, 1
      %s283 = smul.addr %s282, 8
      %s284 = scalar_lea.vmem %s0, %s283
      %p285 = scmp.lt.s32.totalorder %s18, 1
      %s286 = scalar_select %p285, %s18, 1
      %s287 = smul.addr %s286, 5
      %s288 = smul.addr %s287, 8
      %s289 = scalar_lea.vmem %s1, %s288
      %p290 = scmp.lt.s32.totalorder %s18, 1
      %s291 = scalar_select %p290, %s18, 1
      %s292 = smul.addr %s291, 8
      %s293 = scalar_lea.vmem %s7, %s292
      %v295 = vld [vmem:[%s284] sm:$0xff]
      %v296 = vpack.c.bf16 %v295, %v295
      %v297 = vld [vmem:[%s289] sm:$0xff]
      %v298 = vld [vmem:[%s289 + $0x8] sm:$0xff]
      %v299 = vld [vmem:[%s289 + $0x10] sm:$0xff]
      %v300 = vld [vmem:[%s289 + $0x18] sm:$0xff]
      %v301 = vld [vmem:[%s289 + $0x20] sm:$0xff]
      %v302 = vpack.c.bf16 %v298, %v297
      %v303 = vpack.c.bf16 %v300, %v299
      %v304 = vpack.c.bf16 %v301, %v301
      %v305 = vld [vmem:[%s2] sm:$0xf]
      %v306 = vld [vmem:[%s3] sm:$0xff]
      %308 = vset.pattern.permute.xlu0 0
      %309 = vperm.xlu0 %308, %v306
      %v310 = vpop.permute.xlu0 %309
      %vm312 = vcmask 326656
      %v314 = vsel %vm312, %v305, 0
      %vm316 = vcmask 1043456
      %v318 = vsel %vm316, %v304, 0
      %320 = vmatpush.bf16.msra.mxu0 0
      %321 = vmatpush.bf16.msra.mxu0 0
      %322 = vmatpush.bf16.msra.mxu0 0
      %323 = vmatpush.bf16.msra.mxu0 0
      %324 = vmatpush.bf16.msra.mxu0 0
      %325 = vmatpush.bf16.msra.mxu0 %v318
      %326 = vmatpush.bf16.msra.mxu0 %v303
      %327 = vmatpush.bf16.msra.mxu0 %v302
      %328 = vmatmul.bf16.gmra.mxu0 %v314
      %v329 = vpop.f32.mrf.mxu0
      %v330 = vadd.f32 %v310, %v329
      %v331 = vpop.f32.mrf.mxu0
      %332 = vdwg.mxu0
      %v333 = vld [vmem:[%s4] sm:$0xf]
      %v334 = vld [vmem:[%s5] sm:$0xf]
      %v335 = vpack.c.bf16 %v330, %v330
      %vm336 = vcmask 64512
      %v338 = vsel %vm336, %v334, 0
      %v341 = vsel %vm316, %v335, 0
      %343 = vmatpush.bf16.msra.mxu0 0
      %344 = vmatpush.bf16.msra.mxu0 0
      %345 = vmatpush.bf16.msra.mxu0 0
      %346 = vmatpush.bf16.msra.mxu0 0
      %347 = vmatpush.bf16.msra.mxu0 0
      %348 = vmatpush.bf16.msra.mxu0 0
      %349 = vmatpush.bf16.msra.mxu0 0
      %350 = vmatpush.bf16.msra.mxu0 %v341
      %351 = vmatmul.bf16.gmra.mxu0 %v338
      %v352 = vpop.f32.mrf.mxu0
      %v353 = vadd.f32 0.0, %v352
      %v354 = vpop.f32.mrf.mxu0
      %355 = vdwg.mxu0
      %v357 = vsel %vm336, %v333, 0
      %v360 = vsel %vm316, %v296, 0
      %362 = vmatpush.bf16.msra.mxu0 0
      %363 = vmatpush.bf16.msra.mxu0 0
      %364 = vmatpush.bf16.msra.mxu0 0
      %365 = vmatpush.bf16.msra.mxu0 0
      %366 = vmatpush.bf16.msra.mxu0 0
      %367 = vmatpush.bf16.msra.mxu0 0
      %368 = vmatpush.bf16.msra.mxu0 0
      %369 = vmatpush.bf16.msra.mxu0 %v360
      %370 = vmatmul.bf16.gmra.mxu0 %v357
      %v371 = vpop.f32.mrf.mxu0
      %v372 = vadd.f32 %v353, %v371
      %v373 = vpop.f32.mrf.mxu0
      %374 = vdwg.mxu0
      %v375 = vld [vmem:[%s6] sm:$0xff]
      %377 = vset.pattern.permute.xlu0 0
      %378 = vperm.xlu0 %377, %v375
      %v379 = vpop.permute.xlu0 %378
      %v381 = vadd.f32 %v372, %v379
      %vm382 = vcmask 261120
      %383 = vst.msk [vmem:[%s293] sm:$0xff] %vm382, %v381
      %p384 = scmp.lt.s32.totalorder %s18, 1
      %s385 = scalar_select %p384, %s18, 1
      %s386 = smul.addr %s385, 8
      %s387 = scalar_lea.vmem %s7, %s386
      // Predicated region
      $region49: #{_lambda_.8} parent=47 // pred_check
        %p388 = pneg %p193
      $region50: #{_lambda_.8} parent=47 // pred_check_branch
        %390 = sbr.rel (%p388) target = $region52
      $region51: #{_lambda_.8} parent=47 // pred_region
        _
      $region52: #{_lambda_.8} parent=47 // pred_fallthru
        _
    $region48: #{_lambda_.8} parent=5 // pred_fallthru
      _
    %p391 = scmp.le.s32.totalorder 2, %s13
    // Predicated region
    $region53: #{_lambda_.8} parent=5 // pred_check
      %p392 = pneg %p391
    $region54: #{_lambda_.8} parent=5 // pred_check_branch
      %394 = sbr.rel (%p392) target = $region56
    $region55: #{_lambda_.8} parent=5 // pred_region
      %s395 = ssub.s32 %s13, 2
      // Predicated region
      $region57: #{_lambda_.8} parent=55 // pred_check
        %p396 = pneg %p199
      $region58: #{_lambda_.8} parent=55 // pred_check_branch
        %398 = sbr.rel (%p396) target = $region60
      $region59: #{_lambda_.8} parent=55 // pred_region
        %p399 = scmp.lt.s32.totalorder %s19, 1
        %s400 = scalar_select %p399, %s19, 1
        %s401 = smul.addr %s400, 8
        %s402 = scalar_lea.vmem %s7, %s401
      $region60: #{_lambda_.8} parent=55 // pred_fallthru
        _
    $region56: #{_lambda_.8} parent=5 // pred_fallthru
      _
  $region6: #{_lambda_.8} parent=0 // loop_footer
    %s17 = sadd.s32 1, %s13
  $region7: #{_lambda_.8} parent=0 // loop_footer_branch
    %12 = sbr.rel target = $region3
  $region8: #{_lambda_.8} parent=0 // loop_exit
    _

// kernel: _lambda_.9
$region0: #{_lambda_.9}
  #allocation0 [shape = 'u32[]', space=smem, size = 0x4, offset = 0x4, fixed_abs, tag = 'smem constant byte address 0x4 - core index']
  #allocation1 [shape = 'u32[72,128]{1,0:T(1,128)}', space=vmem, size = 0x9000, scoped, tag = 'internal scratch']
  %s0 = inlined_call_operand.vmem [shape: bf16[16,35], index: 0, kind: input, shape index: {}]
  %s1 = inlined_call_operand.vmem [shape: bf16[35,32], index: 1, kind: input, shape index: {}]
  %s2 = inlined_call_operand.vmem [shape: f32[1,32], index: 2, kind: input, shape index: {}]
  %s3 = inlined_call_operand.vmem [shape: bf16[32,64], index: 3, kind: input, shape index: {}]
  %s4 = inlined_call_operand.vmem [shape: f32[1,64], index: 4, kind: input, shape index: {}]
  %s5 = inlined_call_operand.vmem [shape: bf16[64,32], index: 5, kind: input, shape index: {}]
  %s6 = inlined_call_operand.vmem [shape: f32[1,32], index: 6, kind: input, shape index: {}]
  %s7 = inlined_call_operand.vmem [shape: bf16[32,24], index: 7, kind: input, shape index: {}]
  %s8 = inlined_call_operand.vmem [shape: f32[1,24], index: 8, kind: input, shape index: {}]
  %s9 = inlined_call_operand.vmem [shape: bf16[24,16], index: 9, kind: input, shape index: {}]
  %s10 = inlined_call_operand.vmem [shape: f32[1,16], index: 10, kind: input, shape index: {}]
  %s11 = inlined_call_operand.vmem [shape: bf16[16,5], index: 11, kind: input, shape index: {}]
  %s12 = inlined_call_operand.vmem [shape: f32[1,5], index: 12, kind: input, shape index: {}]
  %s13 = inlined_call_operand.hbm [shape: f32[2,5], index: 13, kind: output, shape index: {}]
  %s14 = sld [smem:[#allocation0]]
  $region62: #{_lambda_.9} parent=0
    _
  %s16 = ssub.s32 1, %s14
  %s17 = scalar_select 0, %s16, %s14
  $region1: #{_lambda_.9} parent=0
    #allocation2 [shape = 'u8[1024]{0}', space=vmem, size = 0x400, scoped, tag = 'output window, operand 0, single buffered']
    #allocation3 [shape = 's32[1]{0}', space=sflag, size = 0x4, scoped, tag = 'scoped memory for _lambda_.9']
    %18 = vsyncpa [#allocation3], 0
    // Predicated region
    $region2: #{_lambda_.9} parent=1 // pred_check
      _
    $region3: #{_lambda_.9} parent=1 // pred_check_branch
      %20 = sbr.rel (0) target = $region5
    $region4: #{_lambda_.9} parent=1 // pred_region
      _
    $region5: #{_lambda_.9} parent=1 // pred_fallthru
      _
    // Predicated region
    $region6: #{_lambda_.9} parent=1 // pred_check
      _
    $region7: #{_lambda_.9} parent=1 // pred_check_branch
      %22 = sbr.rel (0) target = $region9
    $region8: #{_lambda_.9} parent=1 // pred_region
      _
    $region9: #{_lambda_.9} parent=1 // pred_fallthru
      _
    // Predicated region
    $region10: #{_lambda_.9} parent=1 // pred_check
      _
    $region11: #{_lambda_.9} parent=1 // pred_check_branch
      %24 = sbr.rel (0) target = $region13
    $region12: #{_lambda_.9} parent=1 // pred_region
      _
    $region13: #{_lambda_.9} parent=1 // pred_fallthru
      _
    // Predicated region
    $region14: #{_lambda_.9} parent=1 // pred_check
      _
    $region15: #{_lambda_.9} parent=1 // pred_check_branch
      %26 = sbr.rel (0) target = $region17
    $region16: #{_lambda_.9} parent=1 // pred_region
      _
    $region17: #{_lambda_.9} parent=1 // pred_fallthru
      _
    // Predicated region
    $region18: #{_lambda_.9} parent=1 // pred_check
      _
    $region19: #{_lambda_.9} parent=1 // pred_check_branch
      %28 = sbr.rel (0) target = $region21
    $region20: #{_lambda_.9} parent=1 // pred_region
      _
    $region21: #{_lambda_.9} parent=1 // pred_fallthru
      _
    // Predicated region
    $region22: #{_lambda_.9} parent=1 // pred_check
      _
    $region23: #{_lambda_.9} parent=1 // pred_check_branch
      %30 = sbr.rel (0) target = $region25
    $region24: #{_lambda_.9} parent=1 // pred_region
      _
    $region25: #{_lambda_.9} parent=1 // pred_fallthru
      _
    // Predicated region
    $region26: #{_lambda_.9} parent=1 // pred_check
      _
    $region27: #{_lambda_.9} parent=1 // pred_check_branch
      %32 = sbr.rel (0) target = $region29
    $region28: #{_lambda_.9} parent=1 // pred_region
      _
    $region29: #{_lambda_.9} parent=1 // pred_fallthru
      _
    // Predicated region
    $region30: #{_lambda_.9} parent=1 // pred_check
      _
    $region31: #{_lambda_.9} parent=1 // pred_check_branch
      %34 = sbr.rel (0) target = $region33
    $region32: #{_lambda_.9} parent=1 // pred_region
      _
    $region33: #{_lambda_.9} parent=1 // pred_fallthru
      _
    // Predicated region
    $region34: #{_lambda_.9} parent=1 // pred_check
      _
    $region35: #{_lambda_.9} parent=1 // pred_check_branch
      %36 = sbr.rel (0) target = $region37
    $region36: #{_lambda_.9} parent=1 // pred_region
      _
    $region37: #{_lambda_.9} parent=1 // pred_fallthru
      _
    // Predicated region
    $region38: #{_lambda_.9} parent=1 // pred_check
      _
    $region39: #{_lambda_.9} parent=1 // pred_check_branch
      %38 = sbr.rel (0) target = $region41
    $region40: #{_lambda_.9} parent=1 // pred_region
      _
    $region41: #{_lambda_.9} parent=1 // pred_fallthru
      _
    // Predicated region
    $region42: #{_lambda_.9} parent=1 // pred_check
      _
    $region43: #{_lambda_.9} parent=1 // pred_check_branch
      %40 = sbr.rel (0) target = $region45
    $region44: #{_lambda_.9} parent=1 // pred_region
      _
    $region45: #{_lambda_.9} parent=1 // pred_fallthru
      _
    // Predicated region
    $region46: #{_lambda_.9} parent=1 // pred_check
      _
    $region47: #{_lambda_.9} parent=1 // pred_check_branch
      %42 = sbr.rel (0) target = $region49
    $region48: #{_lambda_.9} parent=1 // pred_region
      _
    $region49: #{_lambda_.9} parent=1 // pred_fallthru
      _
    // Predicated region
    $region50: #{_lambda_.9} parent=1 // pred_check
      _
    $region51: #{_lambda_.9} parent=1 // pred_check_branch
      %44 = sbr.rel (0) target = $region53
    $region52: #{_lambda_.9} parent=1 // pred_region
      _
    $region53: #{_lambda_.9} parent=1 // pred_fallthru
      _
    %v46 = vld [vmem:[%s0] sm:$0xf]
    %v47 = vld [vmem:[%s0 + $0x4] sm:$0xf]
    %v48 = vld [vmem:[%s1] sm:$0xf]
    %v49 = vld [vmem:[%s1 + $0x4] sm:$0xf]
    %v50 = vld [vmem:[%s1 + $0x8] sm:$0xf]
    %v51 = vld [vmem:[%s1 + $0xc] sm:$0xf]
    %v52 = vld [vmem:[%s1 + $0x10] sm:$0x3]
    %v53 = vld [vmem:[%s2] sm:$0x1]
    %v55 = vperm.slane %v53, 0
    %v59 = vunpack.c.l.b16 %v46
    %v60 = vunpack.c.l.b16 %v47
    %v61 = vpack.c.b16 %v60, %v59
    %v67 = vunpack.c.l.b16 %v48
    %v68 = vunpack.c.l.b16 %v49
    %v69 = vunpack.c.l.b16 %v50
    %v70 = vunpack.c.l.b16 %v51
    %v71 = vunpack.c.l.b16 %v52
    %v72 = vpack.c.b16 %v68, %v67
    %v73 = vpack.c.b16 %v70, %v69
    %v74 = vpack.c.b16 %v71, %v71
    %vm77 = vcmask 285696
    %v79 = vsel %vm77, %v61, 0
    %vm81 = vcmask 1040384
    %vm82 = vcmask 1041408
    %v83 = vsel %vm81, 4294967295, 65535
    %v84 = vsel %vm82, %v83, 0
    %v86 = vand.u32 %v74, %v84
    %88 = vmatpush.bf16.msra.mxu0 0
    %89 = vmatpush.bf16.msra.mxu0 0
    %90 = vmatpush.bf16.msra.mxu0 0
    %91 = vmatpush.bf16.msra.mxu0 0
    %92 = vmatpush.bf16.msra.mxu0 0
    %93 = vmatpush.bf16.msra.mxu0 %v86
    %94 = vmatpush.bf16.msra.mxu0 %v73
    %95 = vmatpush.bf16.msra.mxu0 %v72
    %96 = vmatmul.bf16.gmra.mxu0 %v79
    %v97 = vpop.f32.mrf.mxu0
    %v98 = vadd.f32 %v55, %v97
    %v99 = vpop.f32.mrf.mxu0
    %v100 = vadd.f32 %v55, %v99
    %101 = vdwg.mxu0
    %v102 = vmax.f32 %v98, 0.0
    %v103 = vmax.f32 %v100, 0.0
    %v104 = vpack.c.bf16 %v103, %v102
    %v105 = vld [vmem:[%s3] sm:$0xf]
    %v106 = vld [vmem:[%s3 + $0x4] sm:$0xf]
    %v107 = vld [vmem:[%s3 + $0x8] sm:$0xf]
    %v108 = vld [vmem:[%s3 + $0xc] sm:$0xf]
    %v109 = vld [vmem:[%s4] sm:$0x1]
    %v111 = vperm.slane %v109, 0
    %v117 = vunpack.c.l.b16 %v105
    %v118 = vunpack.c.l.b16 %v106
    %v119 = vunpack.c.l.b16 %v107
    %v120 = vunpack.c.l.b16 %v108
    %v121 = vpack.c.b16 %v118, %v117
    %v122 = vpack.c.b16 %v120, %v119
    %vm125 = vcmask 261120
    %v127 = vsel %vm125, %v104, 0
    %129 = vmatpush.bf16.msra.mxu0 0
    %130 = vmatpush.bf16.msra.mxu0 0
    %131 = vmatpush.bf16.msra.mxu0 0
    %132 = vmatpush.bf16.msra.mxu0 0
    %133 = vmatpush.bf16.msra.mxu0 0
    %134 = vmatpush.bf16.msra.mxu0 0
    %135 = vmatpush.bf16.msra.mxu0 %v122
    %136 = vmatpush.bf16.msra.mxu0 %v121
    %137 = vmatmul.bf16.gmra.mxu0 %v127
    %v138 = vpop.f32.mrf.mxu0
    %v139 = vadd.f32 %v111, %v138
    %v140 = vpop.f32.mrf.mxu0
    %v141 = vadd.f32 %v111, %v140
    %142 = vdwg.mxu0
    %v143 = vmax.f32 %v139, 0.0
    %v144 = vmax.f32 %v141, 0.0
    %v145 = vpack.c.bf16 %v144, %v143
    %v146 = vld [vmem:[%s5] sm:$0xf]
    %v147 = vld [vmem:[%s5 + $0x4] sm:$0xf]
    %v148 = vld [vmem:[%s5 + $0x8] sm:$0xf]
    %v149 = vld [vmem:[%s5 + $0xc] sm:$0xf]
    %v150 = vld [vmem:[%s5 + $0x10] sm:$0xf]
    %v151 = vld [vmem:[%s5 + $0x14] sm:$0xf]
    %v152 = vld [vmem:[%s5 + $0x18] sm:$0xf]
    %v153 = vld [vmem:[%s5 + $0x1c] sm:$0xf]
    %v154 = vld [vmem:[%s6] sm:$0x1]
    %v156 = vperm.slane %v154, 0
    %v166 = vunpack.c.l.b16 %v146
    %v167 = vunpack.c.l.b16 %v147
    %v168 = vunpack.c.l.b16 %v148
    %v169 = vunpack.c.l.b16 %v149
    %v170 = vunpack.c.l.b16 %v150
    %v171 = vunpack.c.l.b16 %v151
    %v172 = vunpack.c.l.b16 %v152
    %v173 = vunpack.c.l.b16 %v153
    %v174 = vpack.c.b16 %v167, %v166
    %v175 = vpack.c.b16 %v169, %v168
    %v176 = vpack.c.b16 %v171, %v170
    %v177 = vpack.c.b16 %v173, %v172
    %vm182 = vcmask 523264
    %v184 = vsel %vm182, %v145, 0
    %186 = vmatpush.bf16.msra.mxu0 0
    %187 = vmatpush.bf16.msra.mxu0 0
    %188 = vmatpush.bf16.msra.mxu0 0
    %189 = vmatpush.bf16.msra.mxu0 0
    %190 = vmatpush.bf16.msra.mxu0 %v177
    %191 = vmatpush.bf16.msra.mxu0 %v176
    %192 = vmatpush.bf16.msra.mxu0 %v175
    %193 = vmatpush.bf16.msra.mxu0 %v174
    %194 = vmatmul.bf16.gmra.mxu0 %v184
    %v195 = vpop.f32.mrf.mxu0
    %v196 = vadd.f32 %v156, %v195
    %v197 = vpop.f32.mrf.mxu0
    %v198 = vadd.f32 %v156, %v197
    %199 = vdwg.mxu0
    %v200 = vmax.f32 %v196, 0.0
    %v201 = vmax.f32 %v198, 0.0
    %v202 = vsel %vm125, %v200, -inf
    %v203 = vrot.slane %v202, 4
    %v204 = vmax.f32 %v202, %v203
    %v205 = vrot.slane %v204, 2
    %v206 = vmax.f32 %v204, %v205
    %v207 = vrot.slane %v206, 1
    %v208 = vmax.f32 %v206, %v207
    %v209 = vsel %vm125, %v201, -inf
    %v210 = vrot.slane %v209, 4
    %v211 = vmax.f32 %v209, %v210
    %v212 = vrot.slane %v211, 2
    %v213 = vmax.f32 %v211, %v212
    %v214 = vrot.slane %v213, 1
    %v215 = vmax.f32 %v213, %v214
    %v216 = vpack.c.bf16 %v208, %v208
    %v217 = vpack.c.bf16 %v215, %v215
    %v218 = vld [vmem:[%s7] sm:$0xf]
    %v219 = vld [vmem:[%s7 + $0x4] sm:$0xf]
    %v220 = vld [vmem:[%s7 + $0x8] sm:$0xf]
    %v221 = vld [vmem:[%s7 + $0xc] sm:$0xf]
    %v222 = vld [vmem:[%s8] sm:$0x1]
    %v224 = vperm.slane %v222, 0
    %v228 = vunpack.c.l.b16 %v216
    %v229 = vunpack.c.l.b16 %v217
    %vm230 = vcmask 1041409
    %v231 = vsel %vm230, %v229, %v228
    %v232 = vpack.c.b16 %v231, %v231
    %v237 = vunpack.c.l.b16 %v218
    %v238 = vunpack.c.l.b16 %v219
    %v239 = vunpack.c.l.b16 %v220
    %v240 = vunpack.c.l.b16 %v221
    %v241 = vpack.c.b16 %v238, %v237
    %v242 = vpack.c.b16 %v240, %v239
    %v246 = vsel %vm125, %v232, 0
    %248 = vmatpush.bf16.msra.mxu0 0
    %249 = vmatpush.bf16.msra.mxu0 0
    %250 = vmatpush.bf16.msra.mxu0 0
    %251 = vmatpush.bf16.msra.mxu0 0
    %252 = vmatpush.bf16.msra.mxu0 0
    %253 = vmatpush.bf16.msra.mxu0 0
    %254 = vmatpush.bf16.msra.mxu0 %v242
    %255 = vmatpush.bf16.msra.mxu0 %v241
    %256 = vmatmul.bf16.gmra.mxu0 %v246
    %v257 = vpop.f32.mrf.mxu0
    %v258 = vadd.f32 %v224, %v257
    %v259 = vpop.f32.mrf.mxu0
    %260 = vdwg.mxu0
    %v261 = vmax.f32 %v258, 0.0
    %v262 = vpack.c.bf16 %v261, %v261
    %v263 = vld [vmem:[%s9] sm:$0xf]
    %v264 = vld [vmem:[%s9 + $0x4] sm:$0xf]
    %v265 = vld [vmem:[%s9 + $0x8] sm:$0xf]
    %v266 = vld [vmem:[%s10] sm:$0x1]
    %v268 = vperm.slane %v266, 0
    %v273 = vunpack.c.l.b16 %v263
    %v274 = vunpack.c.l.b16 %v264
    %v275 = vunpack.c.l.b16 %v265
    %v276 = vpack.c.b16 %v274, %v273
    %v277 = vpack.c.b16 %v275, %v275
    %vm279 = vcmask 195584
    %v281 = vsel %vm279, %v262, 0
    %vm283 = vcmask 1043456
    %v285 = vsel %vm283, %v277, 0
    %287 = vmatpush.bf16.msra.mxu0 0
    %288 = vmatpush.bf16.msra.mxu0 0
    %289 = vmatpush.bf16.msra.mxu0 0
    %290 = vmatpush.bf16.msra.mxu0 0
    %291 = vmatpush.bf16.msra.mxu0 0
    %292 = vmatpush.bf16.msra.mxu0 0
    %293 = vmatpush.bf16.msra.mxu0 %v285
    %294 = vmatpush.bf16.msra.mxu0 %v276
    %295 = vmatmul.bf16.gmra.mxu0 %v281
    %v296 = vpop.f32.mrf.mxu0
    %v297 = vadd.f32 %v268, %v296
    %v298 = vpop.f32.mrf.mxu0
    %299 = vdwg.mxu0
    %v300 = vmax.f32 %v297, 0.0
    %v301 = vpack.c.bf16 %v300, %v300
    %v302 = vld [vmem:[%s11] sm:$0xf]
    %v303 = vld [vmem:[%s11 + $0x4] sm:$0xf]
    %v304 = vld [vmem:[%s12] sm:$0x1]
    %v306 = vperm.slane %v304, 0
    %v310 = vunpack.c.l.b16 %v302
    %v311 = vunpack.c.l.b16 %v303
    %v312 = vpack.c.b16 %v311, %v310
    %vm314 = vcmask 130048
    %v316 = vsel %vm314, %v301, 0
    %318 = vmatpush.bf16.msra.mxu0 0
    %319 = vmatpush.bf16.msra.mxu0 0
    %320 = vmatpush.bf16.msra.mxu0 0
    %321 = vmatpush.bf16.msra.mxu0 0
    %322 = vmatpush.bf16.msra.mxu0 0
    %323 = vmatpush.bf16.msra.mxu0 0
    %324 = vmatpush.bf16.msra.mxu0 0
    %325 = vmatpush.bf16.msra.mxu0 %v312
    %326 = vmatmul.bf16.gmra.mxu0 %v316
    %v327 = vpop.f32.mrf.mxu0
    %v328 = vadd.f32 %v306, %v327
    %v329 = vpop.f32.mrf.mxu0
    %330 = vdwg.mxu0
    %vm331 = vcmask 33792
    %332 = vst.msk [vmem:[#allocation2] sm:$0x3] %vm331, %v328
    // Predicated region
    $region54: #{_lambda_.9} parent=1 // pred_check
      _
    $region55: #{_lambda_.9} parent=1 // pred_check_branch
      %334 = sbr.rel (0) target = $region57
    $region56: #{_lambda_.9} parent=1 // pred_region
      %336 = vsyncadd [#allocation3], 0
      %s338 = sshll.u32 [#allocation2], 4
      %s339 = int_to_ptr.vmem [resolvable:$true] %s338
      %s340 = sshll.u32 %s13, 4
      %s341 = int_to_ptr.hbm [resolvable:$true] %s340
      %343 = dma.vmem_to_hbm [thread:$0]  %s339, 32, %s341, [#allocation3]
    $region57: #{_lambda_.9} parent=1 // pred_fallthru
      _
    // Predicated region
    $region58: #{_lambda_.9} parent=1 // pred_check
      _
    $region59: #{_lambda_.9} parent=1 // pred_check_branch
      %345 = sbr.rel (0) target = $region61
    $region60: #{_lambda_.9} parent=1 // pred_region
      %347 = dma.done [#allocation3], 32
    $region61: #{_lambda_.9} parent=1 // pred_fallthru
      _
    %348 = vsyncpa [#allocation3], 1

</llo_original>
